<compile_context>
chip_gen: v6e
topology: v6e:2x2x1
jax: 0.10.0
libtpu: 0.0.40
codegen_flags: <defaults>
</compile_context>

<pallas_src>
import jax
import jax.numpy as jnp
from jax.experimental import pallas as pl
from jax.experimental.pallas import tpu as pltpu

LANE = 128


def down_fused_kernel(x_ref, w1_ref, s1_ref, b1_ref, w2_ref, s2_ref, b2_ref,
                      o_ref, pad1_ref, pad2_ref):
    """One grid step = one batch element (fully fused Down block).

    x_ref:    (1, H, Wp, 2*Cin)  input, W-pooling pair folded onto the lane axis
    w1_ref:   (3, 3, Cin, Cp)    conv1 weights (out channels zero-padded to Cp)
    s1_ref:   (1, Cp)            folded BN1 scale
    b1_ref:   (1, Cp)            folded BN1 bias (includes conv1 bias)
    w2_ref:   (3, 3, Cp, Cp)     conv2 weights (in/out channels zero-padded)
    s2_ref:   (1, Cp)            folded BN2 scale
    b2_ref:   (1, Cp)            folded BN2 bias
    o_ref:    (1, Hp, Wp, Cp)    lane-dense output (sliced back to Cout outside)
    pad1_ref: (Hp+2, Wp+2, Cin)  VMEM scratch: zero-padded pooled input
    pad2_ref: (Hp+2, Wp+2, Cp)   VMEM scratch: zero-padded hidden activation
    """
    Hp = o_ref.shape[1]
    Wp = o_ref.shape[2]
    Cp = o_ref.shape[3]
    Cin = pad1_ref.shape[2]

    # ---- MaxPool2d(2): W-pair sits on the lane axis, H-pair on the leading axis
    xb = x_ref[0]                                             # (2*Hp, Wp, 2*Cin)
    wmax = jnp.maximum(xb[:, :, :Cin], xb[:, :, Cin:])        # (2*Hp, Wp, Cin)
    wmax = wmax.reshape(Hp, 2, Wp, Cin)                       # leading-dim split
    pooled = jnp.maximum(wmax[:, 0, :, :], wmax[:, 1, :, :])  # (Hp, Wp, Cin)

    # ---- in-kernel SAME padding: zero the scratch, write the interior
    pad1_ref[...] = jnp.zeros(pad1_ref.shape, pad1_ref.dtype)
    pad1_ref[pl.ds(1, Hp), pl.ds(1, Wp), :] = pooled

    # ---- conv1 (3x3) as 9 shifted matmuls on the MXU, f32 accumulation
    acc = jnp.zeros((Hp * Wp, Cp), jnp.float32)
    for kh in range(3):
        for kw in range(3):
            patch = pad1_ref[pl.ds(kh, Hp), pl.ds(kw, Wp), :].reshape(Hp * Wp, Cin)
            acc = acc + jnp.dot(patch, w1_ref[kh, kw],
                                preferred_element_type=jnp.float32)
    y1 = jnp.maximum(acc * s1_ref[...] + b1_ref[...], 0.0)    # BN affine + ReLU

    # ---- intermediate stays in VMEM (no HBM round trip between the two convs)
    pad2_ref[...] = jnp.zeros(pad2_ref.shape, pad2_ref.dtype)
    pad2_ref[pl.ds(1, Hp), pl.ds(1, Wp), :] = y1.reshape(Hp, Wp, Cp)

    # ---- conv2 (3x3) + BN + ReLU
    acc2 = jnp.zeros((Hp * Wp, Cp), jnp.float32)
    for kh in range(3):
        for kw in range(3):
            patch = pad2_ref[pl.ds(kh, Hp), pl.ds(kw, Wp), :].reshape(Hp * Wp, Cp)
            acc2 = acc2 + jnp.dot(patch, w2_ref[kh, kw],
                                  preferred_element_type=jnp.float32)
    y2 = jnp.maximum(acc2 * s2_ref[...] + b2_ref[...], 0.0)

    o_ref[0] = y2.reshape(Hp, Wp, Cp).astype(o_ref.dtype)     # lane-dense store


def fold_bn(conv_bias, gamma, beta, running_mean, running_var, eps=1e-5):
    """Fold conv bias + eval-mode BN into a per-channel (scale, bias)."""
    inv_std = 1.0 / jnp.sqrt(running_var + eps)
    scale = gamma * inv_std
    bias = beta + (conv_bias - running_mean) * scale
    return scale, bias


def down_forward(x_nchw, p):
    """Down forward. x_nchw: (N, Cin, H, W) -> (N, Cout, H//2, W//2)."""
    N, Cin, H, W = x_nchw.shape
    assert H % 2 == 0 and W % 2 == 0, "MaxPool2d(2) path assumes even H, W"
    Hp, Wp = H // 2, W // 2
    Cout = p["w1"].shape[0]
    Cp = ((Cout + LANE - 1) // LANE) * LANE      # lane-dense mid/out channels

    # NCHW -> NHWC, then fold the W-pooling pair onto the lane axis (free reshape)
    x = jnp.transpose(x_nchw, (0, 2, 3, 1)).reshape(N, H, Wp, 2 * Cin)

    # conv weights OIHW -> HWIO; zero-pad the channel axes that map to lanes
    w1 = jnp.transpose(p["w1"], (2, 3, 1, 0))                 # (3,3,Cin,Cout)
    w2 = jnp.transpose(p["w2"], (2, 3, 1, 0))                 # (3,3,Cout,Cout)
    w1 = jnp.pad(w1, ((0, 0), (0, 0), (0, 0), (0, Cp - Cout)))
    w2 = jnp.pad(w2, ((0, 0), (0, 0), (0, Cp - Cout), (0, Cp - Cout)))

    s1, b1 = fold_bn(p["b1"], p["g1"], p["be1"], p["m1"], p["v1"])
    s2, b2 = fold_bn(p["b2"], p["g2"], p["be2"], p["m2"], p["v2"])
    s1 = jnp.pad(s1, (0, Cp - Cout)).reshape(1, Cp)
    b1 = jnp.pad(b1, (0, Cp - Cout)).reshape(1, Cp)
    s2 = jnp.pad(s2, (0, Cp - Cout)).reshape(1, Cp)
    b2 = jnp.pad(b2, (0, Cp - Cout)).reshape(1, Cp)

    out_padded = pl.pallas_call(
        down_fused_kernel,
        out_shape=jax.ShapeDtypeStruct((N, Hp, Wp, Cp), x_nchw.dtype),
        grid_spec=pltpu.PrefetchScalarGridSpec(
            num_scalar_prefetch=0,
            grid=(N,),
            in_specs=[
                pl.BlockSpec((1, H, Wp, 2 * Cin), lambda n: (n, 0, 0, 0)),
                pl.BlockSpec((3, 3, Cin, Cp), lambda n: (0, 0, 0, 0)),
                pl.BlockSpec((1, Cp), lambda n: (0, 0)),
                pl.BlockSpec((1, Cp), lambda n: (0, 0)),
                pl.BlockSpec((3, 3, Cp, Cp), lambda n: (0, 0, 0, 0)),
                pl.BlockSpec((1, Cp), lambda n: (0, 0)),
                pl.BlockSpec((1, Cp), lambda n: (0, 0)),
            ],
            out_specs=pl.BlockSpec((1, Hp, Wp, Cp), lambda n: (n, 0, 0, 0)),
            scratch_shapes=[
                pltpu.VMEM((Hp + 2, Wp + 2, Cin), jnp.float32),
                pltpu.VMEM((Hp + 2, Wp + 2, Cp), jnp.float32),
            ],
        ),
        compiler_params=pltpu.CompilerParams(
            dimension_semantics=("parallel",),
            vmem_limit_bytes=32 * 1024 * 1024,
        ),
    )(x, w1, s1, b1, w2, s2, b2)

    y = out_padded[:, :, :, :Cout]                 # drop lane padding
    return jnp.transpose(y, (0, 3, 1, 2))          # NHWC -> NCHW


def make_params(key, in_channels, out_channels):
    """Deterministic synthetic parameters (shapes match the PyTorch module)."""
    ks = jax.random.split(key, 10)
    p = {}
    # conv1: weight (Cout, Cin, 3, 3), bias (Cout,)
    p["w1"] = 0.1 * jax.random.normal(ks[0], (out_channels, in_channels, 3, 3), jnp.float32)
    p["b1"] = 0.1 * jax.random.normal(ks[1], (out_channels,), jnp.float32)
    # bn1
    p["g1"] = 1.0 + 0.1 * jax.random.normal(ks[2], (out_channels,), jnp.float32)
    p["be1"] = 0.1 * jax.random.normal(ks[3], (out_channels,), jnp.float32)
    p["m1"] = 0.05 * jax.random.normal(ks[4], (out_channels,), jnp.float32)
    p["v1"] = 1.0 + 0.05 * jax.random.uniform(ks[5], (out_channels,), jnp.float32)
    # conv2: weight (Cout, Cout, 3, 3), bias (Cout,)
    p["w2"] = 0.1 * jax.random.normal(ks[6], (out_channels, out_channels, 3, 3), jnp.float32)
    p["b2"] = 0.1 * jax.random.normal(ks[7], (out_channels,), jnp.float32)
    # bn2
    p["g2"] = 1.0 + 0.1 * jax.random.normal(ks[8], (out_channels,), jnp.float32)
    p["be2"] = 0.1 * jax.random.normal(ks[9], (out_channels,), jnp.float32)
    p["m2"] = jnp.zeros((out_channels,), jnp.float32)
    p["v2"] = jnp.ones((out_channels,), jnp.float32)
    return p


def down_reference(x_nchw, p):
    """Pure-JAX reference (reduce_window + lax.conv) for correctness checking."""
    x = jnp.transpose(x_nchw, (0, 2, 3, 1))
    x = jax.lax.reduce_window(x, -jnp.inf, jax.lax.max,
                              window_dimensions=(1, 2, 2, 1),
                              window_strides=(1, 2, 2, 1),
                              padding="VALID")
    w1 = jnp.transpose(p["w1"], (2, 3, 1, 0))
    w2 = jnp.transpose(p["w2"], (2, 3, 1, 0))
    s1, b1 = fold_bn(p["b1"], p["g1"], p["be1"], p["m1"], p["v1"])
    s2, b2 = fold_bn(p["b2"], p["g2"], p["be2"], p["m2"], p["v2"])

    def step(xi, w, s, b):
        y = jax.lax.conv_general_dilated(
            xi, w, window_strides=(1, 1), padding="SAME",
            dimension_numbers=("NHWC", "HWIO", "NHWC"))
        return jnp.maximum(y * s + b, 0.0)

    y = step(x, w1, s1, b1)
    y = step(y, w2, s2, b2)
    return jnp.transpose(y, (0, 3, 1, 2))


if __name__ == "__main__":
    key = jax.random.PRNGKey(0)
    k_x, k_p = jax.random.split(key)

    N, Cin, Cout, H, W = 2, 4, 8, 16, 16
    x = jax.random.normal(k_x, (N, Cin, H, W), jnp.float32)
    params = make_params(k_p, Cin, Cout)

    out = down_forward(x, params)
    out = jax.block_until_ready(out)

    ref = down_reference(x, params)
    assert out.shape == (N, Cout, H // 2, W // 2)
    assert jnp.allclose(out, ref, rtol=1e-4, atol=1e-4), "mismatch vs reference"

    print("KERNEL_OK")
</pallas_src>

<mosaic_0001>
module attributes {stable_mosaic.version = 11 : i64} {
  func.func @down_fused_kernel(%arg0: i32, %arg1: memref<1x16x8x8xf32, #tpu.memory_space<vmem>>, %arg2: memref<3x3x4x128xf32, #tpu.memory_space<vmem>>, %arg3: memref<1x128xf32, #tpu.memory_space<vmem>>, %arg4: memref<1x128xf32, #tpu.memory_space<vmem>>, %arg5: memref<3x3x128x128xf32, #tpu.memory_space<vmem>>, %arg6: memref<1x128xf32, #tpu.memory_space<vmem>>, %arg7: memref<1x128xf32, #tpu.memory_space<vmem>>, %arg8: memref<1x8x8x128xf32, #tpu.memory_space<vmem>>, %arg9: memref<10x10x4xf32, #tpu.memory_space<vmem>>, %arg10: memref<10x10x128xf32, #tpu.memory_space<vmem>>) attributes {dimension_semantics = [#tpu.dimension_semantics<parallel>], iteration_bounds = array<i64: 2>, scalar_prefetch = 0 : i64, scratch_operands = 2 : i64, tpu.core_type = #tpu.core_type<tc>, window_params = [{transform_indices = @transform_0, window_bounds = array<i64: 1, 16, 8, 8>}, {pipeline_mode = #tpu.pipeline_mode<synchronous>, transform_indices = @transform_1, window_bounds = array<i64: 3, 3, 4, 128>}, {pipeline_mode = #tpu.pipeline_mode<synchronous>, transform_indices = @transform_2, window_bounds = array<i64: 1, 128>}, {pipeline_mode = #tpu.pipeline_mode<synchronous>, transform_indices = @transform_3, window_bounds = array<i64: 1, 128>}, {pipeline_mode = #tpu.pipeline_mode<synchronous>, transform_indices = @transform_4, window_bounds = array<i64: 3, 3, 128, 128>}, {pipeline_mode = #tpu.pipeline_mode<synchronous>, transform_indices = @transform_5, window_bounds = array<i64: 1, 128>}, {pipeline_mode = #tpu.pipeline_mode<synchronous>, transform_indices = @transform_6, window_bounds = array<i64: 1, 128>}, {transform_indices = @transform_7, window_bounds = array<i64: 1, 8, 8, 128>}]} {
    %c0 = arith.constant 0 : index
    %c0_0 = arith.constant 0 : index
    %c0_1 = arith.constant 0 : index
    %c0_2 = arith.constant 0 : index
    %0 = vector.load %arg1[%c0, %c0_0, %c0_1, %c0_2] : memref<1x16x8x8xf32, #tpu.memory_space<vmem>>, vector<1x16x8x8xf32>
    %1 = vector.shape_cast %0 : vector<1x16x8x8xf32> to vector<16x8x8xf32>
    %2 = vector.extract_strided_slice %1 {offsets = [0, 0, 0], sizes = [16, 8, 4], strides = [1, 1, 1]} : vector<16x8x8xf32> to vector<16x8x4xf32>
    %3 = vector.extract_strided_slice %1 {offsets = [0, 0, 4], sizes = [16, 8, 4], strides = [1, 1, 1]} : vector<16x8x8xf32> to vector<16x8x4xf32>
    %4 = arith.maximumf %2, %3 : vector<16x8x4xf32>
    %5 = vector.shape_cast %4 : vector<16x8x4xf32> to vector<8x2x8x4xf32>
    %6 = vector.extract_strided_slice %5 {offsets = [0, 0, 0, 0], sizes = [8, 1, 8, 4], strides = [1, 1, 1, 1]} : vector<8x2x8x4xf32> to vector<8x1x8x4xf32>
    %7 = vector.shape_cast %6 : vector<8x1x8x4xf32> to vector<8x8x4xf32>
    %8 = vector.extract_strided_slice %5 {offsets = [0, 1, 0, 0], sizes = [8, 1, 8, 4], strides = [1, 1, 1, 1]} : vector<8x2x8x4xf32> to vector<8x1x8x4xf32>
    %9 = vector.shape_cast %8 : vector<8x1x8x4xf32> to vector<8x8x4xf32>
    %10 = arith.maximumf %7, %9 : vector<8x8x4xf32>
    %cst = arith.constant 0.000000e+00 : f32
    %11 = vector.broadcast %cst : f32 to vector<10x10x4xf32>
    %c0_3 = arith.constant 0 : index
    %c0_4 = arith.constant 0 : index
    %c0_5 = arith.constant 0 : index
    %12 = vector.load %arg9[%c0_3, %c0_4, %c0_5] : memref<10x10x4xf32, #tpu.memory_space<vmem>>, vector<10x10x4xf32>
    tpu.vector_store %arg9[%c0_3, %c0_4, %c0_5], %11 {strides = array<i32>} : memref<10x10x4xf32, #tpu.memory_space<vmem>>, vector<10x10x4xf32>,
    %c1 = arith.constant 1 : index
    %c1_6 = arith.constant 1 : index
    %c0_7 = arith.constant 0 : index
    %13 = vector.load %arg9[%c1, %c1_6, %c0_7] : memref<10x10x4xf32, #tpu.memory_space<vmem>>, vector<8x8x4xf32>
    tpu.vector_store %arg9[%c1, %c1_6, %c0_7], %10 {strides = array<i32>} : memref<10x10x4xf32, #tpu.memory_space<vmem>>, vector<8x8x4xf32>,
    %cst_8 = arith.constant 0.000000e+00 : f32
    %14 = vector.broadcast %cst_8 : f32 to vector<64x128xf32>
    %c0_9 = arith.constant 0 : index
    %c0_10 = arith.constant 0 : index
    %c0_11 = arith.constant 0 : index
    %15 = vector.load %arg9[%c0_9, %c0_10, %c0_11] : memref<10x10x4xf32, #tpu.memory_space<vmem>>, vector<8x8x4xf32>
    %16 = vector.shape_cast %15 : vector<8x8x4xf32> to vector<64x4xf32>
    %c0_12 = arith.constant 0 : index
    %c0_13 = arith.constant 0 : index
    %c0_14 = arith.constant 0 : index
    %c0_15 = arith.constant 0 : index
    %17 = vector.load %arg2[%c0_12, %c0_13, %c0_14, %c0_15] : memref<3x3x4x128xf32, #tpu.memory_space<vmem>>, vector<1x1x4x128xf32>
    %18 = vector.shape_cast %17 : vector<1x1x4x128xf32> to vector<4x128xf32>
    %cst_16 = arith.constant dense<0.000000e+00> : vector<64x128xf32>
    %19 = tpu.matmul %16, %18, %cst_16 {dimension_numbers = #tpu.dot_dimension_numbers<[1], [0], [0], [1], [0, 0, 1, 1], [], []>} : vector<64x4xf32>, vector<4x128xf32>, vector<64x128xf32> -> vector<64x128xf32>
    %20 = arith.addf %14, %19 : vector<64x128xf32>
    %c0_17 = arith.constant 0 : index
    %c1_18 = arith.constant 1 : index
    %c0_19 = arith.constant 0 : index
    %21 = vector.load %arg9[%c0_17, %c1_18, %c0_19] : memref<10x10x4xf32, #tpu.memory_space<vmem>>, vector<8x8x4xf32>
    %22 = vector.shape_cast %21 : vector<8x8x4xf32> to vector<64x4xf32>
    %c0_20 = arith.constant 0 : index
    %c1_21 = arith.constant 1 : index
    %c0_22 = arith.constant 0 : index
    %c0_23 = arith.constant 0 : index
    %23 = vector.load %arg2[%c0_20, %c1_21, %c0_22, %c0_23] : memref<3x3x4x128xf32, #tpu.memory_space<vmem>>, vector<1x1x4x128xf32>
    %24 = vector.shape_cast %23 : vector<1x1x4x128xf32> to vector<4x128xf32>
    %cst_24 = arith.constant dense<0.000000e+00> : vector<64x128xf32>
    %25 = tpu.matmul %22, %24, %cst_24 {dimension_numbers = #tpu.dot_dimension_numbers<[1], [0], [0], [1], [0, 0, 1, 1], [], []>} : vector<64x4xf32>, vector<4x128xf32>, vector<64x128xf32> -> vector<64x128xf32>
    %26 = arith.addf %20, %25 : vector<64x128xf32>
    %c0_25 = arith.constant 0 : index
    %c2 = arith.constant 2 : index
    %c0_26 = arith.constant 0 : index
    %27 = vector.load %arg9[%c0_25, %c2, %c0_26] : memref<10x10x4xf32, #tpu.memory_space<vmem>>, vector<8x8x4xf32>
    %28 = vector.shape_cast %27 : vector<8x8x4xf32> to vector<64x4xf32>
    %c0_27 = arith.constant 0 : index
    %c2_28 = arith.constant 2 : index
    %c0_29 = arith.constant 0 : index
    %c0_30 = arith.constant 0 : index
    %29 = vector.load %arg2[%c0_27, %c2_28, %c0_29, %c0_30] : memref<3x3x4x128xf32, #tpu.memory_space<vmem>>, vector<1x1x4x128xf32>
    %30 = vector.shape_cast %29 : vector<1x1x4x128xf32> to vector<4x128xf32>
    %cst_31 = arith.constant dense<0.000000e+00> : vector<64x128xf32>
    %31 = tpu.matmul %28, %30, %cst_31 {dimension_numbers = #tpu.dot_dimension_numbers<[1], [0], [0], [1], [0, 0, 1, 1], [], []>} : vector<64x4xf32>, vector<4x128xf32>, vector<64x128xf32> -> vector<64x128xf32>
    %32 = arith.addf %26, %31 : vector<64x128xf32>
    %c1_32 = arith.constant 1 : index
    %c0_33 = arith.constant 0 : index
    %c0_34 = arith.constant 0 : index
    %33 = vector.load %arg9[%c1_32, %c0_33, %c0_34] : memref<10x10x4xf32, #tpu.memory_space<vmem>>, vector<8x8x4xf32>
    %34 = vector.shape_cast %33 : vector<8x8x4xf32> to vector<64x4xf32>
    %c1_35 = arith.constant 1 : index
    %c0_36 = arith.constant 0 : index
    %c0_37 = arith.constant 0 : index
    %c0_38 = arith.constant 0 : index
    %35 = vector.load %arg2[%c1_35, %c0_36, %c0_37, %c0_38] : memref<3x3x4x128xf32, #tpu.memory_space<vmem>>, vector<1x1x4x128xf32>
    %36 = vector.shape_cast %35 : vector<1x1x4x128xf32> to vector<4x128xf32>
    %cst_39 = arith.constant dense<0.000000e+00> : vector<64x128xf32>
    %37 = tpu.matmul %34, %36, %cst_39 {dimension_numbers = #tpu.dot_dimension_numbers<[1], [0], [0], [1], [0, 0, 1, 1], [], []>} : vector<64x4xf32>, vector<4x128xf32>, vector<64x128xf32> -> vector<64x128xf32>
    %38 = arith.addf %32, %37 : vector<64x128xf32>
    %c1_40 = arith.constant 1 : index
    %c1_41 = arith.constant 1 : index
    %c0_42 = arith.constant 0 : index
    %39 = vector.load %arg9[%c1_40, %c1_41, %c0_42] : memref<10x10x4xf32, #tpu.memory_space<vmem>>, vector<8x8x4xf32>
    %40 = vector.shape_cast %39 : vector<8x8x4xf32> to vector<64x4xf32>
    %c1_43 = arith.constant 1 : index
    %c1_44 = arith.constant 1 : index
    %c0_45 = arith.constant 0 : index
    %c0_46 = arith.constant 0 : index
    %41 = vector.load %arg2[%c1_43, %c1_44, %c0_45, %c0_46] : memref<3x3x4x128xf32, #tpu.memory_space<vmem>>, vector<1x1x4x128xf32>
    %42 = vector.shape_cast %41 : vector<1x1x4x128xf32> to vector<4x128xf32>
    %cst_47 = arith.constant dense<0.000000e+00> : vector<64x128xf32>
    %43 = tpu.matmul %40, %42, %cst_47 {dimension_numbers = #tpu.dot_dimension_numbers<[1], [0], [0], [1], [0, 0, 1, 1], [], []>} : vector<64x4xf32>, vector<4x128xf32>, vector<64x128xf32> -> vector<64x128xf32>
    %44 = arith.addf %38, %43 : vector<64x128xf32>
    %c1_48 = arith.constant 1 : index
    %c2_49 = arith.constant 2 : index
    %c0_50 = arith.constant 0 : index
    %45 = vector.load %arg9[%c1_48, %c2_49, %c0_50] : memref<10x10x4xf32, #tpu.memory_space<vmem>>, vector<8x8x4xf32>
    %46 = vector.shape_cast %45 : vector<8x8x4xf32> to vector<64x4xf32>
    %c1_51 = arith.constant 1 : index
    %c2_52 = arith.constant 2 : index
    %c0_53 = arith.constant 0 : index
    %c0_54 = arith.constant 0 : index
    %47 = vector.load %arg2[%c1_51, %c2_52, %c0_53, %c0_54] : memref<3x3x4x128xf32, #tpu.memory_space<vmem>>, vector<1x1x4x128xf32>
    %48 = vector.shape_cast %47 : vector<1x1x4x128xf32> to vector<4x128xf32>
    %cst_55 = arith.constant dense<0.000000e+00> : vector<64x128xf32>
    %49 = tpu.matmul %46, %48, %cst_55 {dimension_numbers = #tpu.dot_dimension_numbers<[1], [0], [0], [1], [0, 0, 1, 1], [], []>} : vector<64x4xf32>, vector<4x128xf32>, vector<64x128xf32> -> vector<64x128xf32>
    %50 = arith.addf %44, %49 : vector<64x128xf32>
    %c2_56 = arith.constant 2 : index
    %c0_57 = arith.constant 0 : index
    %c0_58 = arith.constant 0 : index
    %51 = vector.load %arg9[%c2_56, %c0_57, %c0_58] : memref<10x10x4xf32, #tpu.memory_space<vmem>>, vector<8x8x4xf32>
    %52 = vector.shape_cast %51 : vector<8x8x4xf32> to vector<64x4xf32>
    %c2_59 = arith.constant 2 : index
    %c0_60 = arith.constant 0 : index
    %c0_61 = arith.constant 0 : index
    %c0_62 = arith.constant 0 : index
    %53 = vector.load %arg2[%c2_59, %c0_60, %c0_61, %c0_62] : memref<3x3x4x128xf32, #tpu.memory_space<vmem>>, vector<1x1x4x128xf32>
    %54 = vector.shape_cast %53 : vector<1x1x4x128xf32> to vector<4x128xf32>
    %cst_63 = arith.constant dense<0.000000e+00> : vector<64x128xf32>
    %55 = tpu.matmul %52, %54, %cst_63 {dimension_numbers = #tpu.dot_dimension_numbers<[1], [0], [0], [1], [0, 0, 1, 1], [], []>} : vector<64x4xf32>, vector<4x128xf32>, vector<64x128xf32> -> vector<64x128xf32>
    %56 = arith.addf %50, %55 : vector<64x128xf32>
    %c2_64 = arith.constant 2 : index
    %c1_65 = arith.constant 1 : index
    %c0_66 = arith.constant 0 : index
    %57 = vector.load %arg9[%c2_64, %c1_65, %c0_66] : memref<10x10x4xf32, #tpu.memory_space<vmem>>, vector<8x8x4xf32>
    %58 = vector.shape_cast %57 : vector<8x8x4xf32> to vector<64x4xf32>
    %c2_67 = arith.constant 2 : index
    %c1_68 = arith.constant 1 : index
    %c0_69 = arith.constant 0 : index
    %c0_70 = arith.constant 0 : index
    %59 = vector.load %arg2[%c2_67, %c1_68, %c0_69, %c0_70] : memref<3x3x4x128xf32, #tpu.memory_space<vmem>>, vector<1x1x4x128xf32>
    %60 = vector.shape_cast %59 : vector<1x1x4x128xf32> to vector<4x128xf32>
    %cst_71 = arith.constant dense<0.000000e+00> : vector<64x128xf32>
    %61 = tpu.matmul %58, %60, %cst_71 {dimension_numbers = #tpu.dot_dimension_numbers<[1], [0], [0], [1], [0, 0, 1, 1], [], []>} : vector<64x4xf32>, vector<4x128xf32>, vector<64x128xf32> -> vector<64x128xf32>
    %62 = arith.addf %56, %61 : vector<64x128xf32>
    %c2_72 = arith.constant 2 : index
    %c2_73 = arith.constant 2 : index
    %c0_74 = arith.constant 0 : index
    %63 = vector.load %arg9[%c2_72, %c2_73, %c0_74] : memref<10x10x4xf32, #tpu.memory_space<vmem>>, vector<8x8x4xf32>
    %64 = vector.shape_cast %63 : vector<8x8x4xf32> to vector<64x4xf32>
    %c2_75 = arith.constant 2 : index
    %c2_76 = arith.constant 2 : index
    %c0_77 = arith.constant 0 : index
    %c0_78 = arith.constant 0 : index
    %65 = vector.load %arg2[%c2_75, %c2_76, %c0_77, %c0_78] : memref<3x3x4x128xf32, #tpu.memory_space<vmem>>, vector<1x1x4x128xf32>
    %66 = vector.shape_cast %65 : vector<1x1x4x128xf32> to vector<4x128xf32>
    %cst_79 = arith.constant dense<0.000000e+00> : vector<64x128xf32>
    %67 = tpu.matmul %64, %66, %cst_79 {dimension_numbers = #tpu.dot_dimension_numbers<[1], [0], [0], [1], [0, 0, 1, 1], [], []>} : vector<64x4xf32>, vector<4x128xf32>, vector<64x128xf32> -> vector<64x128xf32>
    %68 = arith.addf %62, %67 : vector<64x128xf32>
    %c0_80 = arith.constant 0 : index
    %c0_81 = arith.constant 0 : index
    %69 = vector.load %arg3[%c0_80, %c0_81] : memref<1x128xf32, #tpu.memory_space<vmem>>, vector<1x128xf32>
    %70 = vector.broadcast %69 : vector<1x128xf32> to vector<64x128xf32>
    %71 = arith.mulf %68, %70 : vector<64x128xf32>
    %c0_82 = arith.constant 0 : index
    %c0_83 = arith.constant 0 : index
    %72 = vector.load %arg4[%c0_82, %c0_83] : memref<1x128xf32, #tpu.memory_space<vmem>>, vector<1x128xf32>
    %73 = vector.broadcast %72 : vector<1x128xf32> to vector<64x128xf32>
    %74 = arith.addf %71, %73 : vector<64x128xf32>
    %cst_84 = arith.constant 0.000000e+00 : f32
    %75 = vector.broadcast %cst_84 : f32 to vector<64x128xf32>
    %76 = arith.maximumf %74, %75 : vector<64x128xf32>
    %cst_85 = arith.constant 0.000000e+00 : f32
    %77 = vector.broadcast %cst_85 : f32 to vector<10x10x128xf32>
    %c0_86 = arith.constant 0 : index
    %c0_87 = arith.constant 0 : index
    %c0_88 = arith.constant 0 : index
    %78 = vector.load %arg10[%c0_86, %c0_87, %c0_88] : memref<10x10x128xf32, #tpu.memory_space<vmem>>, vector<10x10x128xf32>
    tpu.vector_store %arg10[%c0_86, %c0_87, %c0_88], %77 {strides = array<i32>} : memref<10x10x128xf32, #tpu.memory_space<vmem>>, vector<10x10x128xf32>,
    %79 = vector.shape_cast %76 : vector<64x128xf32> to vector<8x8x128xf32>
    %c1_89 = arith.constant 1 : index
    %c1_90 = arith.constant 1 : index
    %c0_91 = arith.constant 0 : index
    %80 = vector.load %arg10[%c1_89, %c1_90, %c0_91] : memref<10x10x128xf32, #tpu.memory_space<vmem>>, vector<8x8x128xf32>
    tpu.vector_store %arg10[%c1_89, %c1_90, %c0_91], %79 {strides = array<i32>} : memref<10x10x128xf32, #tpu.memory_space<vmem>>, vector<8x8x128xf32>,
    %cst_92 = arith.constant 0.000000e+00 : f32
    %81 = vector.broadcast %cst_92 : f32 to vector<64x128xf32>
    %c0_93 = arith.constant 0 : index
    %c0_94 = arith.constant 0 : index
    %c0_95 = arith.constant 0 : index
    %82 = vector.load %arg10[%c0_93, %c0_94, %c0_95] : memref<10x10x128xf32, #tpu.memory_space<vmem>>, vector<8x8x128xf32>
    %83 = vector.shape_cast %82 : vector<8x8x128xf32> to vector<64x128xf32>
    %c0_96 = arith.constant 0 : index
    %c0_97 = arith.constant 0 : index
    %c0_98 = arith.constant 0 : index
    %c0_99 = arith.constant 0 : index
    %84 = vector.load %arg5[%c0_96, %c0_97, %c0_98, %c0_99] : memref<3x3x128x128xf32, #tpu.memory_space<vmem>>, vector<1x1x128x128xf32>
    %85 = vector.shape_cast %84 : vector<1x1x128x128xf32> to vector<128x128xf32>
    %cst_100 = arith.constant dense<0.000000e+00> : vector<64x128xf32>
    %86 = tpu.matmul %83, %85, %cst_100 {dimension_numbers = #tpu.dot_dimension_numbers<[1], [0], [0], [1], [0, 0, 1, 1], [], []>} : vector<64x128xf32>, vector<128x128xf32>, vector<64x128xf32> -> vector<64x128xf32>
    %87 = arith.addf %81, %86 : vector<64x128xf32>
    %c0_101 = arith.constant 0 : index
    %c1_102 = arith.constant 1 : index
    %c0_103 = arith.constant 0 : index
    %88 = vector.load %arg10[%c0_101, %c1_102, %c0_103] : memref<10x10x128xf32, #tpu.memory_space<vmem>>, vector<8x8x128xf32>
    %89 = vector.shape_cast %88 : vector<8x8x128xf32> to vector<64x128xf32>
    %c0_104 = arith.constant 0 : index
    %c1_105 = arith.constant 1 : index
    %c0_106 = arith.constant 0 : index
    %c0_107 = arith.constant 0 : index
    %90 = vector.load %arg5[%c0_104, %c1_105, %c0_106, %c0_107] : memref<3x3x128x128xf32, #tpu.memory_space<vmem>>, vector<1x1x128x128xf32>
    %91 = vector.shape_cast %90 : vector<1x1x128x128xf32> to vector<128x128xf32>
    %cst_108 = arith.constant dense<0.000000e+00> : vector<64x128xf32>
    %92 = tpu.matmul %89, %91, %cst_108 {dimension_numbers = #tpu.dot_dimension_numbers<[1], [0], [0], [1], [0, 0, 1, 1], [], []>} : vector<64x128xf32>, vector<128x128xf32>, vector<64x128xf32> -> vector<64x128xf32>
    %93 = arith.addf %87, %92 : vector<64x128xf32>
    %c0_109 = arith.constant 0 : index
    %c2_110 = arith.constant 2 : index
    %c0_111 = arith.constant 0 : index
    %94 = vector.load %arg10[%c0_109, %c2_110, %c0_111] : memref<10x10x128xf32, #tpu.memory_space<vmem>>, vector<8x8x128xf32>
    %95 = vector.shape_cast %94 : vector<8x8x128xf32> to vector<64x128xf32>
    %c0_112 = arith.constant 0 : index
    %c2_113 = arith.constant 2 : index
    %c0_114 = arith.constant 0 : index
    %c0_115 = arith.constant 0 : index
    %96 = vector.load %arg5[%c0_112, %c2_113, %c0_114, %c0_115] : memref<3x3x128x128xf32, #tpu.memory_space<vmem>>, vector<1x1x128x128xf32>
    %97 = vector.shape_cast %96 : vector<1x1x128x128xf32> to vector<128x128xf32>
    %cst_116 = arith.constant dense<0.000000e+00> : vector<64x128xf32>
    %98 = tpu.matmul %95, %97, %cst_116 {dimension_numbers = #tpu.dot_dimension_numbers<[1], [0], [0], [1], [0, 0, 1, 1], [], []>} : vector<64x128xf32>, vector<128x128xf32>, vector<64x128xf32> -> vector<64x128xf32>
    %99 = arith.addf %93, %98 : vector<64x128xf32>
    %c1_117 = arith.constant 1 : index
    %c0_118 = arith.constant 0 : index
    %c0_119 = arith.constant 0 : index
    %100 = vector.load %arg10[%c1_117, %c0_118, %c0_119] : memref<10x10x128xf32, #tpu.memory_space<vmem>>, vector<8x8x128xf32>
    %101 = vector.shape_cast %100 : vector<8x8x128xf32> to vector<64x128xf32>
    %c1_120 = arith.constant 1 : index
    %c0_121 = arith.constant 0 : index
    %c0_122 = arith.constant 0 : index
    %c0_123 = arith.constant 0 : index
    %102 = vector.load %arg5[%c1_120, %c0_121, %c0_122, %c0_123] : memref<3x3x128x128xf32, #tpu.memory_space<vmem>>, vector<1x1x128x128xf32>
    %103 = vector.shape_cast %102 : vector<1x1x128x128xf32> to vector<128x128xf32>
    %cst_124 = arith.constant dense<0.000000e+00> : vector<64x128xf32>
    %104 = tpu.matmul %101, %103, %cst_124 {dimension_numbers = #tpu.dot_dimension_numbers<[1], [0], [0], [1], [0, 0, 1, 1], [], []>} : vector<64x128xf32>, vector<128x128xf32>, vector<64x128xf32> -> vector<64x128xf32>
    %105 = arith.addf %99, %104 : vector<64x128xf32>
    %c1_125 = arith.constant 1 : index
    %c1_126 = arith.constant 1 : index
    %c0_127 = arith.constant 0 : index
    %106 = vector.load %arg10[%c1_125, %c1_126, %c0_127] : memref<10x10x128xf32, #tpu.memory_space<vmem>>, vector<8x8x128xf32>
    %107 = vector.shape_cast %106 : vector<8x8x128xf32> to vector<64x128xf32>
    %c1_128 = arith.constant 1 : index
    %c1_129 = arith.constant 1 : index
    %c0_130 = arith.constant 0 : index
    %c0_131 = arith.constant 0 : index
    %108 = vector.load %arg5[%c1_128, %c1_129, %c0_130, %c0_131] : memref<3x3x128x128xf32, #tpu.memory_space<vmem>>, vector<1x1x128x128xf32>
    %109 = vector.shape_cast %108 : vector<1x1x128x128xf32> to vector<128x128xf32>
    %cst_132 = arith.constant dense<0.000000e+00> : vector<64x128xf32>
    %110 = tpu.matmul %107, %109, %cst_132 {dimension_numbers = #tpu.dot_dimension_numbers<[1], [0], [0], [1], [0, 0, 1, 1], [], []>} : vector<64x128xf32>, vector<128x128xf32>, vector<64x128xf32> -> vector<64x128xf32>
    %111 = arith.addf %105, %110 : vector<64x128xf32>
    %c1_133 = arith.constant 1 : index
    %c2_134 = arith.constant 2 : index
    %c0_135 = arith.constant 0 : index
    %112 = vector.load %arg10[%c1_133, %c2_134, %c0_135] : memref<10x10x128xf32, #tpu.memory_space<vmem>>, vector<8x8x128xf32>
    %113 = vector.shape_cast %112 : vector<8x8x128xf32> to vector<64x128xf32>
    %c1_136 = arith.constant 1 : index
    %c2_137 = arith.constant 2 : index
    %c0_138 = arith.constant 0 : index
    %c0_139 = arith.constant 0 : index
    %114 = vector.load %arg5[%c1_136, %c2_137, %c0_138, %c0_139] : memref<3x3x128x128xf32, #tpu.memory_space<vmem>>, vector<1x1x128x128xf32>
    %115 = vector.shape_cast %114 : vector<1x1x128x128xf32> to vector<128x128xf32>
    %cst_140 = arith.constant dense<0.000000e+00> : vector<64x128xf32>
    %116 = tpu.matmul %113, %115, %cst_140 {dimension_numbers = #tpu.dot_dimension_numbers<[1], [0], [0], [1], [0, 0, 1, 1], [], []>} : vector<64x128xf32>, vector<128x128xf32>, vector<64x128xf32> -> vector<64x128xf32>
    %117 = arith.addf %111, %116 : vector<64x128xf32>
    %c2_141 = arith.constant 2 : index
    %c0_142 = arith.constant 0 : index
    %c0_143 = arith.constant 0 : index
    %118 = vector.load %arg10[%c2_141, %c0_142, %c0_143] : memref<10x10x128xf32, #tpu.memory_space<vmem>>, vector<8x8x128xf32>
    %119 = vector.shape_cast %118 : vector<8x8x128xf32> to vector<64x128xf32>
    %c2_144 = arith.constant 2 : index
    %c0_145 = arith.constant 0 : index
    %c0_146 = arith.constant 0 : index
    %c0_147 = arith.constant 0 : index
    %120 = vector.load %arg5[%c2_144, %c0_145, %c0_146, %c0_147] : memref<3x3x128x128xf32, #tpu.memory_space<vmem>>, vector<1x1x128x128xf32>
    %121 = vector.shape_cast %120 : vector<1x1x128x128xf32> to vector<128x128xf32>
    %cst_148 = arith.constant dense<0.000000e+00> : vector<64x128xf32>
    %122 = tpu.matmul %119, %121, %cst_148 {dimension_numbers = #tpu.dot_dimension_numbers<[1], [0], [0], [1], [0, 0, 1, 1], [], []>} : vector<64x128xf32>, vector<128x128xf32>, vector<64x128xf32> -> vector<64x128xf32>
    %123 = arith.addf %117, %122 : vector<64x128xf32>
    %c2_149 = arith.constant 2 : index
    %c1_150 = arith.constant 1 : index
    %c0_151 = arith.constant 0 : index
    %124 = vector.load %arg10[%c2_149, %c1_150, %c0_151] : memref<10x10x128xf32, #tpu.memory_space<vmem>>, vector<8x8x128xf32>
    %125 = vector.shape_cast %124 : vector<8x8x128xf32> to vector<64x128xf32>
    %c2_152 = arith.constant 2 : index
    %c1_153 = arith.constant 1 : index
    %c0_154 = arith.constant 0 : index
    %c0_155 = arith.constant 0 : index
    %126 = vector.load %arg5[%c2_152, %c1_153, %c0_154, %c0_155] : memref<3x3x128x128xf32, #tpu.memory_space<vmem>>, vector<1x1x128x128xf32>
    %127 = vector.shape_cast %126 : vector<1x1x128x128xf32> to vector<128x128xf32>
    %cst_156 = arith.constant dense<0.000000e+00> : vector<64x128xf32>
    %128 = tpu.matmul %125, %127, %cst_156 {dimension_numbers = #tpu.dot_dimension_numbers<[1], [0], [0], [1], [0, 0, 1, 1], [], []>} : vector<64x128xf32>, vector<128x128xf32>, vector<64x128xf32> -> vector<64x128xf32>
    %129 = arith.addf %123, %128 : vector<64x128xf32>
    %c2_157 = arith.constant 2 : index
    %c2_158 = arith.constant 2 : index
    %c0_159 = arith.constant 0 : index
    %130 = vector.load %arg10[%c2_157, %c2_158, %c0_159] : memref<10x10x128xf32, #tpu.memory_space<vmem>>, vector<8x8x128xf32>
    %131 = vector.shape_cast %130 : vector<8x8x128xf32> to vector<64x128xf32>
    %c2_160 = arith.constant 2 : index
    %c2_161 = arith.constant 2 : index
    %c0_162 = arith.constant 0 : index
    %c0_163 = arith.constant 0 : index
    %132 = vector.load %arg5[%c2_160, %c2_161, %c0_162, %c0_163] : memref<3x3x128x128xf32, #tpu.memory_space<vmem>>, vector<1x1x128x128xf32>
    %133 = vector.shape_cast %132 : vector<1x1x128x128xf32> to vector<128x128xf32>
    %cst_164 = arith.constant dense<0.000000e+00> : vector<64x128xf32>
    %134 = tpu.matmul %131, %133, %cst_164 {dimension_numbers = #tpu.dot_dimension_numbers<[1], [0], [0], [1], [0, 0, 1, 1], [], []>} : vector<64x128xf32>, vector<128x128xf32>, vector<64x128xf32> -> vector<64x128xf32>
    %135 = arith.addf %129, %134 : vector<64x128xf32>
    %c0_165 = arith.constant 0 : index
    %c0_166 = arith.constant 0 : index
    %136 = vector.load %arg6[%c0_165, %c0_166] : memref<1x128xf32, #tpu.memory_space<vmem>>, vector<1x128xf32>
    %137 = vector.broadcast %136 : vector<1x128xf32> to vector<64x128xf32>
    %138 = arith.mulf %135, %137 : vector<64x128xf32>
    %c0_167 = arith.constant 0 : index
    %c0_168 = arith.constant 0 : index
    %139 = vector.load %arg7[%c0_167, %c0_168] : memref<1x128xf32, #tpu.memory_space<vmem>>, vector<1x128xf32>
    %140 = vector.broadcast %139 : vector<1x128xf32> to vector<64x128xf32>
    %141 = arith.addf %138, %140 : vector<64x128xf32>
    %cst_169 = arith.constant 0.000000e+00 : f32
    %142 = vector.broadcast %cst_169 : f32 to vector<64x128xf32>
    %143 = arith.maximumf %141, %142 : vector<64x128xf32>
    %144 = vector.shape_cast %143 : vector<64x128xf32> to vector<8x8x128xf32>
    %c0_170 = arith.constant 0 : index
    %c0_171 = arith.constant 0 : index
    %c0_172 = arith.constant 0 : index
    %c0_173 = arith.constant 0 : index
    %145 = vector.load %arg8[%c0_170, %c0_171, %c0_172, %c0_173] : memref<1x8x8x128xf32, #tpu.memory_space<vmem>>, vector<1x8x8x128xf32>
    %146 = vector.shape_cast %145 : vector<1x8x8x128xf32> to vector<8x8x128xf32>
    %147 = vector.shape_cast %144 : vector<8x8x128xf32> to vector<1x8x8x128xf32>
    tpu.vector_store %arg8[%c0_170, %c0_171, %c0_172, %c0_173], %147 {strides = array<i32>} : memref<1x8x8x128xf32, #tpu.memory_space<vmem>>, vector<1x8x8x128xf32>,
    return
  }
  func.func @transform_0(%arg0: i32) -> (i32, i32, i32, i32) {
    %c0_i32 = arith.constant 0 : i32
    %c0_i32_0 = arith.constant 0 : i32
    %c0_i32_1 = arith.constant 0 : i32
    %c0_i32_2 = arith.constant 0 : i32
    return %arg0, %c0_i32, %c0_i32_0, %c0_i32_1 : i32, i32, i32, i32
  }
  func.func @transform_1(%arg0: i32) -> (i32, i32, i32, i32) {
    %c0_i32 = arith.constant 0 : i32
    %c0_i32_0 = arith.constant 0 : i32
    %c0_i32_1 = arith.constant 0 : i32
    %c0_i32_2 = arith.constant 0 : i32
    %c0_i32_3 = arith.constant 0 : i32
    return %c0_i32, %c0_i32_0, %c0_i32_1, %c0_i32_2 : i32, i32, i32, i32
  }
  func.func @transform_2(%arg0: i32) -> (i32, i32) {
    %c0_i32 = arith.constant 0 : i32
    %c0_i32_0 = arith.constant 0 : i32
    %c0_i32_1 = arith.constant 0 : i32
    return %c0_i32, %c0_i32_0 : i32, i32
  }
  func.func @transform_3(%arg0: i32) -> (i32, i32) {
    %c0_i32 = arith.constant 0 : i32
    %c0_i32_0 = arith.constant 0 : i32
    %c0_i32_1 = arith.constant 0 : i32
    return %c0_i32, %c0_i32_0 : i32, i32
  }
  func.func @transform_4(%arg0: i32) -> (i32, i32, i32, i32) {
    %c0_i32 = arith.constant 0 : i32
    %c0_i32_0 = arith.constant 0 : i32
    %c0_i32_1 = arith.constant 0 : i32
    %c0_i32_2 = arith.constant 0 : i32
    %c0_i32_3 = arith.constant 0 : i32
    return %c0_i32, %c0_i32_0, %c0_i32_1, %c0_i32_2 : i32, i32, i32, i32
  }
  func.func @transform_5(%arg0: i32) -> (i32, i32) {
    %c0_i32 = arith.constant 0 : i32
    %c0_i32_0 = arith.constant 0 : i32
    %c0_i32_1 = arith.constant 0 : i32
    return %c0_i32, %c0_i32_0 : i32, i32
  }
  func.func @transform_6(%arg0: i32) -> (i32, i32) {
    %c0_i32 = arith.constant 0 : i32
    %c0_i32_0 = arith.constant 0 : i32
    %c0_i32_1 = arith.constant 0 : i32
    return %c0_i32, %c0_i32_0 : i32, i32
  }
  func.func @transform_7(%arg0: i32) -> (i32, i32, i32, i32) {
    %c0_i32 = arith.constant 0 : i32
    %c0_i32_0 = arith.constant 0 : i32
    %c0_i32_1 = arith.constant 0 : i32
    %c0_i32_2 = arith.constant 0 : i32
    return %arg0, %c0_i32, %c0_i32_0, %c0_i32_1 : i32, i32, i32, i32
  }
}

</mosaic_0001>

<llo_original>
// kernel: tpu_custom_call.1
$region0: #{tpu_custom_call.1}
  #allocation0 [shape = 'u32[]', space=smem, size = 0x4, offset = 0x4, fixed_abs, tag = 'smem constant byte address 0x4 - core index']
  #allocation1 [shape = 'u32[144,128]{1,0:T(1,128)}', space=vmem, size = 0x12000, scoped, tag = 'internal scratch']
  #allocation2 [shape = 'f32[10,10,4]{2,1,0:T(8,128)}', space=vmem, size = 0x14000, scoped, tag = 'scratch operand']
  #allocation3 [shape = 'f32[10,10,128]{2,1,0:T(8,128)}', space=vmem, size = 0x14000, scoped, tag = 'scratch operand']
  %s0 = inlined_call_operand.vmem [shape: f32[2,16,8,8], index: 0, kind: input, shape index: {}]
  %s1 = inlined_call_operand.vmem [shape: f32[3,3,4,128], index: 1, kind: input, shape index: {}]
  %s2 = inlined_call_operand.vmem [shape: f32[1,128], index: 2, kind: input, shape index: {}]
  %s3 = inlined_call_operand.vmem [shape: f32[1,128], index: 3, kind: input, shape index: {}]
  %s4 = inlined_call_operand.hbm [shape: f32[3,3,128,128], index: 4, kind: input, shape index: {}]
  %s5 = inlined_call_operand.vmem [shape: f32[1,128], index: 5, kind: input, shape index: {}]
  %s6 = inlined_call_operand.vmem [shape: f32[1,128], index: 6, kind: input, shape index: {}]
  %s7 = inlined_call_operand.hbm [shape: f32[2,8,8,128], index: 7, kind: output, shape index: {}]
  %s8 = sld [smem:[#allocation0]]
  $region65: #{tpu_custom_call.1} parent=0
    _
  %s10 = ssub.s32 1, %s8
  %s11 = scalar_select 0, %s10, %s8
  $region1: #{tpu_custom_call.1} parent=0
    #allocation4 [shape = 'u8[589824]{0}', space=vmem, size = 0x90000, scoped, tag = 'input window, operand 4, single buffered']
    #allocation5 [shape = 's32[2]{0}', space=sflag, size = 0x8, scoped, tag = 'scoped memory for tpu_custom_call.1']
    #allocation6 [shape = 's32[2]{0}', space=sflag, size = 0x8, scoped, tag = 'scoped memory for tpu_custom_call.1']
    #allocation7 [shape = 'u8[65536]{0}', space=vmem, size = 0x10000, scoped, tag = 'output window, operand 0']
    %12 = vsyncpa [#allocation5], 0
    %13 = vsyncpa [#allocation6], 0
    %s14 = scalar_lea.sflag [#allocation6], 1
    %15 = vsyncpa %s14, 0
    loop: start=0, step=1, limit=4
    $region2: #{tpu_custom_call.1} parent=1 // loop_pre_header
      _
    $region3: #{tpu_custom_call.1} parent=1 // loop_header
      %s17 = sphi 0, %s21
      %p18 = scmp.ge.s32.totalorder %s17, 4
      %s27 = sphi 0, %s29
      %s30 = sphi 0, %s27
      %s31 = sphi 0, %s30
      %s47 = sphi 0, %s31
      %s51 = sphi 0, %s51
      %s53 = sphi 0, %s51
      %s54 = sphi 0, %s53
      %s68 = sphi 0, %s54
      %s72 = sphi 0, %s72
      %s74 = sphi 0, %s72
      %s75 = sphi 0, %s74
      %s89 = sphi 0, %s75
      %s93 = sphi 0, %s93
      %s95 = sphi 0, %s93
      %s96 = sphi 0, %s95
      %s110 = sphi 0, %s96
      %s114 = sphi 0, %s114
      %s116 = sphi 0, %s114
      %s117 = sphi 0, %s116
      %s131 = sphi 0, %s117
      %s135 = sphi 0, %s135
      %s137 = sphi 0, %s135
      %s138 = sphi 0, %s137
      %s152 = sphi 0, %s138
      %s156 = sphi 0, %s156
      %s158 = sphi 0, %s156
      %s159 = sphi 0, %s158
      %s173 = sphi 0, %s159
      %s179 = sphi 0, %s181
      %s182 = sphi 0, %s179
      %s183 = sphi 0, %s182
      %s199 = sphi 0, %s183
    $region4: #{tpu_custom_call.1} parent=1 // loop_header_branch
      %20 = sbr.rel (%p18) target = $region8
    $region5: #{tpu_custom_call.1} parent=1 // loop_body
      %s22 = ssub.s32 %s17, 1
      %s23 = ssub.s32 %s17, 2
      %s24 = sadd.s32 %s17, 1
      %s25 = ssub.s32 %s17, %s24
      %p26 = scmp.eq.s32.totalorder %s25, 0
      %s28 = sadd.s32 %s27, 1
      %s29 = scalar_select %p26, %s27, %s28
      %p32 = pneg %p26
      %p33 = scmp.eq.s32.totalorder %s17, 1
      %p34 = por %p32, %p33
      %p35 = scmp.ne.s32.totalorder %s27, %s30
      %p36 = scmp.eq.s32.totalorder %s17, 0
      %p37 = por %p35, %p36
      %p38 = scmp.ne.s32.totalorder %s27, %s30
      %p39 = scmp.eq.s32.totalorder %s22, 1
      %p40 = por %p38, %p39
      %p41 = scmp.ne.s32.totalorder %s30, %s31
      %p42 = scmp.eq.s32.totalorder %s22, 0
      %p43 = por %p41, %p42
      %p44 = scmp.ne.s32.totalorder %s30, %s31
      %p45 = scmp.eq.s32.totalorder %s23, 1
      %p46 = por %p44, %p45
      %p48 = scmp.ne.s32.totalorder %s31, %s47
      %p49 = scmp.eq.s32.totalorder %s23, 0
      %p50 = por %p48, %p49
      %s52 = sadd.s32 %s51, 1
      %p55 = scmp.eq.s32.totalorder %s17, 1
      %p56 = scmp.ne.s32.totalorder %s51, %s53
      %p57 = scmp.eq.s32.totalorder %s17, 0
      %p58 = por %p56, %p57
      %p59 = scmp.ne.s32.totalorder %s51, %s53
      %p60 = scmp.eq.s32.totalorder %s22, 1
      %p61 = por %p59, %p60
      %p62 = scmp.ne.s32.totalorder %s53, %s54
      %p63 = scmp.eq.s32.totalorder %s22, 0
      %p64 = por %p62, %p63
      %p65 = scmp.ne.s32.totalorder %s53, %s54
      %p66 = scmp.eq.s32.totalorder %s23, 1
      %p67 = por %p65, %p66
      %p69 = scmp.ne.s32.totalorder %s54, %s68
      %p70 = scmp.eq.s32.totalorder %s23, 0
      %p71 = por %p69, %p70
      %s73 = sadd.s32 %s72, 1
      %p76 = scmp.eq.s32.totalorder %s17, 1
      %p77 = scmp.ne.s32.totalorder %s72, %s74
      %p78 = scmp.eq.s32.totalorder %s17, 0
      %p79 = por %p77, %p78
      %p80 = scmp.ne.s32.totalorder %s72, %s74
      %p81 = scmp.eq.s32.totalorder %s22, 1
      %p82 = por %p80, %p81
      %p83 = scmp.ne.s32.totalorder %s74, %s75
      %p84 = scmp.eq.s32.totalorder %s22, 0
      %p85 = por %p83, %p84
      %p86 = scmp.ne.s32.totalorder %s74, %s75
      %p87 = scmp.eq.s32.totalorder %s23, 1
      %p88 = por %p86, %p87
      %p90 = scmp.ne.s32.totalorder %s75, %s89
      %p91 = scmp.eq.s32.totalorder %s23, 0
      %p92 = por %p90, %p91
      %s94 = sadd.s32 %s93, 1
      %p97 = scmp.eq.s32.totalorder %s17, 1
      %p98 = scmp.ne.s32.totalorder %s93, %s95
      %p99 = scmp.eq.s32.totalorder %s17, 0
      %p100 = por %p98, %p99
      %p101 = scmp.ne.s32.totalorder %s93, %s95
      %p102 = scmp.eq.s32.totalorder %s22, 1
      %p103 = por %p101, %p102
      %p104 = scmp.ne.s32.totalorder %s95, %s96
      %p105 = scmp.eq.s32.totalorder %s22, 0
      %p106 = por %p104, %p105
      %p107 = scmp.ne.s32.totalorder %s95, %s96
      %p108 = scmp.eq.s32.totalorder %s23, 1
      %p109 = por %p107, %p108
      %p111 = scmp.ne.s32.totalorder %s96, %s110
      %p112 = scmp.eq.s32.totalorder %s23, 0
      %p113 = por %p111, %p112
      %s115 = sadd.s32 %s114, 1
      %p118 = scmp.eq.s32.totalorder %s17, 1
      %p119 = scmp.ne.s32.totalorder %s114, %s116
      %p120 = scmp.eq.s32.totalorder %s17, 0
      %p121 = por %p119, %p120
      %p122 = scmp.ne.s32.totalorder %s114, %s116
      %p123 = scmp.eq.s32.totalorder %s22, 1
      %p124 = por %p122, %p123
      %p125 = scmp.ne.s32.totalorder %s116, %s117
      %p126 = scmp.eq.s32.totalorder %s22, 0
      %p127 = por %p125, %p126
      %p128 = scmp.ne.s32.totalorder %s116, %s117
      %p129 = scmp.eq.s32.totalorder %s23, 1
      %p130 = por %p128, %p129
      %p132 = scmp.ne.s32.totalorder %s117, %s131
      %p133 = scmp.eq.s32.totalorder %s23, 0
      %p134 = por %p132, %p133
      %s136 = sadd.s32 %s135, 1
      %p139 = scmp.eq.s32.totalorder %s17, 1
      %p140 = scmp.ne.s32.totalorder %s135, %s137
      %p141 = scmp.eq.s32.totalorder %s17, 0
      %p142 = por %p140, %p141
      %p143 = scmp.ne.s32.totalorder %s135, %s137
      %p144 = scmp.eq.s32.totalorder %s22, 1
      %p145 = por %p143, %p144
      %p146 = scmp.ne.s32.totalorder %s137, %s138
      %p147 = scmp.eq.s32.totalorder %s22, 0
      %p148 = por %p146, %p147
      %p149 = scmp.ne.s32.totalorder %s137, %s138
      %p150 = scmp.eq.s32.totalorder %s23, 1
      %p151 = por %p149, %p150
      %p153 = scmp.ne.s32.totalorder %s138, %s152
      %p154 = scmp.eq.s32.totalorder %s23, 0
      %p155 = por %p153, %p154
      %s157 = sadd.s32 %s156, 1
      %p160 = scmp.eq.s32.totalorder %s17, 1
      %p161 = scmp.ne.s32.totalorder %s156, %s158
      %p162 = scmp.eq.s32.totalorder %s17, 0
      %p163 = por %p161, %p162
      %p164 = scmp.ne.s32.totalorder %s156, %s158
      %p165 = scmp.eq.s32.totalorder %s22, 1
      %p166 = por %p164, %p165
      %p167 = scmp.ne.s32.totalorder %s158, %s159
      %p168 = scmp.eq.s32.totalorder %s22, 0
      %p169 = por %p167, %p168
      %p170 = scmp.ne.s32.totalorder %s158, %s159
      %p171 = scmp.eq.s32.totalorder %s23, 1
      %p172 = por %p170, %p171
      %p174 = scmp.ne.s32.totalorder %s159, %s173
      %p175 = scmp.eq.s32.totalorder %s23, 0
      %p176 = por %p174, %p175
      %s177 = ssub.s32 %s17, %s24
      %p178 = scmp.eq.s32.totalorder %s177, 0
      %s180 = sadd.s32 %s179, 1
      %s181 = scalar_select %p178, %s179, %s180
      %p184 = pneg %p178
      %p185 = scmp.eq.s32.totalorder %s17, 1
      %p186 = por %p184, %p185
      %p187 = scmp.ne.s32.totalorder %s179, %s182
      %p188 = scmp.eq.s32.totalorder %s17, 0
      %p189 = por %p187, %p188
      %p190 = scmp.ne.s32.totalorder %s179, %s182
      %p191 = scmp.eq.s32.totalorder %s22, 1
      %p192 = por %p190, %p191
      %p193 = scmp.ne.s32.totalorder %s182, %s183
      %p194 = scmp.eq.s32.totalorder %s22, 0
      %p195 = por %p193, %p194
      %p196 = scmp.ne.s32.totalorder %s182, %s183
      %p197 = scmp.eq.s32.totalorder %s23, 1
      %p198 = por %p196, %p197
      %p200 = scmp.ne.s32.totalorder %s183, %s199
      %p201 = scmp.eq.s32.totalorder %s23, 0
      %p202 = por %p200, %p201
      %p203 = scmp.le.s32.totalorder 1, %s17
      %p204 = scmp.lt.s32.totalorder %s17, 3
      %p205 = pnand %p203, %p204
      %p206 = pneg %p205
      // Predicated region
      $region9: #{tpu_custom_call.1} parent=5 // pred_check
        _
      $region10: #{tpu_custom_call.1} parent=5 // pred_check_branch
        %208 = sbr.rel (%p205) target = $region12
      $region11: #{tpu_custom_call.1} parent=5 // pred_region
        %s209 = ssub.s32 %s17, 1
        // Predicated region
        $region13: #{tpu_custom_call.1} parent=11 // pred_check
          %p210 = pneg %p64
        $region14: #{tpu_custom_call.1} parent=11 // pred_check_branch
          %212 = sbr.rel (%p210) target = $region16
        $region15: #{tpu_custom_call.1} parent=11 // pred_region
          _
        $region16: #{tpu_custom_call.1} parent=11 // pred_fallthru
          _
        // Predicated region
        $region17: #{tpu_custom_call.1} parent=11 // pred_check
          %p213 = pneg %p85
        $region18: #{tpu_custom_call.1} parent=11 // pred_check_branch
          %215 = sbr.rel (%p213) target = $region20
        $region19: #{tpu_custom_call.1} parent=11 // pred_region
          _
        $region20: #{tpu_custom_call.1} parent=11 // pred_fallthru
          _
        // Predicated region
        $region21: #{tpu_custom_call.1} parent=11 // pred_check
          %p216 = pneg %p106
        $region22: #{tpu_custom_call.1} parent=11 // pred_check_branch
          %218 = sbr.rel (%p216) target = $region24
        $region23: #{tpu_custom_call.1} parent=11 // pred_region
          _
        $region24: #{tpu_custom_call.1} parent=11 // pred_fallthru
          _
        // Predicated region
        $region25: #{tpu_custom_call.1} parent=11 // pred_check
          %p219 = pneg %p127
        $region26: #{tpu_custom_call.1} parent=11 // pred_check_branch
          %221 = sbr.rel (%p219) target = $region28
        $region27: #{tpu_custom_call.1} parent=11 // pred_region
          %s223 = ssub.s32 18432, 18432
          %224 = vsyncadd [#allocation5], %s223
          %s225 = sshll.u32 [#allocation4], 4
          %s226 = int_to_ptr.vmem [resolvable:$true] %s225
          %231 = dma.hbm_to_vmem [thread:$0]  %s4, 18432, %s226, [#allocation5], 128, 128, 8
        $region28: #{tpu_custom_call.1} parent=11 // pred_fallthru
          _
        // Predicated region
        $region29: #{tpu_custom_call.1} parent=11 // pred_check
          %p232 = pneg %p148
        $region30: #{tpu_custom_call.1} parent=11 // pred_check_branch
          %234 = sbr.rel (%p232) target = $region32
        $region31: #{tpu_custom_call.1} parent=11 // pred_region
          _
        $region32: #{tpu_custom_call.1} parent=11 // pred_fallthru
          _
        // Predicated region
        $region33: #{tpu_custom_call.1} parent=11 // pred_check
          %p235 = pneg %p169
        $region34: #{tpu_custom_call.1} parent=11 // pred_check_branch
          %237 = sbr.rel (%p235) target = $region36
        $region35: #{tpu_custom_call.1} parent=11 // pred_region
          _
        $region36: #{tpu_custom_call.1} parent=11 // pred_fallthru
          _
      $region12: #{tpu_custom_call.1} parent=5 // pred_fallthru
        _
      %p238 = scmp.lt.s32.totalorder %s17, 2
      // Predicated region
      $region37: #{tpu_custom_call.1} parent=5 // pred_check
        %p239 = pneg %p238
      $region38: #{tpu_custom_call.1} parent=5 // pred_check_branch
        %241 = sbr.rel (%p239) target = $region40
      $region39: #{tpu_custom_call.1} parent=5 // pred_region
        // Predicated region
        $region41: #{tpu_custom_call.1} parent=39 // pred_check
          %p242 = pneg %p37
        $region42: #{tpu_custom_call.1} parent=39 // pred_check_branch
          %244 = sbr.rel (%p242) target = $region44
        $region43: #{tpu_custom_call.1} parent=39 // pred_region
          %p245 = scmp.lt.s32.totalorder %s17, 1
          %s246 = scalar_select %p245, %s17, 1
          %s247 = smul.addr %s246, 16
          %s248 = smul.addr %s247, 8
          %s249 = scalar_lea.vmem %s0, %s248
        $region44: #{tpu_custom_call.1} parent=39 // pred_fallthru
          _
      $region40: #{tpu_custom_call.1} parent=5 // pred_fallthru
        _
      %p250 = scmp.le.s32.totalorder 1, %s17
      %p251 = scmp.lt.s32.totalorder %s17, 3
      %p252 = pnand %p250, %p251
      %p253 = pneg %p252
      // Predicated region
      $region45: #{tpu_custom_call.1} parent=5 // pred_check
        _
      $region46: #{tpu_custom_call.1} parent=5 // pred_check_branch
        %255 = sbr.rel (%p252) target = $region48
      $region47: #{tpu_custom_call.1} parent=5 // pred_region
        %s256 = ssub.s32 %s17, 1
        // Predicated region
        $region49: #{tpu_custom_call.1} parent=47 // pred_check
          %p257 = pneg %p127
        $region50: #{tpu_custom_call.1} parent=47 // pred_check_branch
          %259 = sbr.rel (%p257) target = $region52
        $region51: #{tpu_custom_call.1} parent=47 // pred_region
          %260 = dma.done [#allocation5], 18432
        $region52: #{tpu_custom_call.1} parent=47 // pred_fallthru
          _
        %p261 = scmp.lt.s32.totalorder %s22, 1
        %s262 = scalar_select %p261, %s22, 1
        %s263 = smul.addr %s262, 16
        %s264 = smul.addr %s263, 8
        %s265 = scalar_lea.vmem %s0, %s264
        %p266 = pneg %p43
        %p267 = pneg %p40
        %p268 = pneg %p64
        %p269 = pneg %p61
        %p270 = pneg %p85
        %p271 = pneg %p82
        %p272 = pneg %p106
        %p273 = pneg %p103
        %p274 = pneg %p127
        %p275 = pneg %p124
        %p276 = pneg %p148
        %p277 = pneg %p145
        %p278 = pneg %p169
        %p279 = pneg %p166
        %p280 = pneg %p195
        %p281 = pneg %p192
        %s282 = sand.u32 %s182, 1
        %s283 = scalar_lea.sflag [#allocation6], %s282
        %s284 = sand.u32 %s182, 1
        %s285 = smul.addr %s284, 64
        %s286 = scalar_lea.vmem [#allocation7], %s285
        %p287 = scmp.lt.s32.totalorder %s22, 1
        %s288 = scalar_select %p287, %s22, 1
        %s289 = smul.addr %s288, 16
        %s290 = smul.addr %s289, 8
        %s291 = scalar_lea.vmem %s0, %s290
        %v292 = vld [vmem:[%s291] sm:$0xff]
        %v293 = vld [vmem:[%s291 + $0x8] sm:$0xff]
        %v294 = vld [vmem:[%s291 + $0x10] sm:$0xff]
        %v295 = vld [vmem:[%s291 + $0x18] sm:$0xff]
        %v296 = vld [vmem:[%s291 + $0x20] sm:$0xff]
        %v297 = vld [vmem:[%s291 + $0x28] sm:$0xff]
        %v298 = vld [vmem:[%s291 + $0x30] sm:$0xff]
        %v299 = vld [vmem:[%s291 + $0x38] sm:$0xff]
        %v300 = vld [vmem:[%s291 + $0x40] sm:$0xff]
        %v301 = vld [vmem:[%s291 + $0x48] sm:$0xff]
        %v302 = vld [vmem:[%s291 + $0x50] sm:$0xff]
        %v303 = vld [vmem:[%s291 + $0x58] sm:$0xff]
        %v304 = vld [vmem:[%s291 + $0x60] sm:$0xff]
        %v305 = vld [vmem:[%s291 + $0x68] sm:$0xff]
        %v306 = vld [vmem:[%s291 + $0x70] sm:$0xff]
        %v307 = vld [vmem:[%s291 + $0x78] sm:$0xff]
        %324 = vrot.lane.b32.xlu0 %v292, 124
        %v325 = vpop.permute.xlu0 %324
        %326 = vrot.lane.b32.xlu0 %v293, 124
        %v327 = vpop.permute.xlu0 %326
        %328 = vrot.lane.b32.xlu0 %v294, 124
        %v329 = vpop.permute.xlu0 %328
        %330 = vrot.lane.b32.xlu0 %v295, 124
        %v331 = vpop.permute.xlu0 %330
        %332 = vrot.lane.b32.xlu0 %v296, 124
        %v333 = vpop.permute.xlu0 %332
        %334 = vrot.lane.b32.xlu0 %v297, 124
        %v335 = vpop.permute.xlu0 %334
        %336 = vrot.lane.b32.xlu0 %v298, 124
        %v337 = vpop.permute.xlu0 %336
        %338 = vrot.lane.b32.xlu0 %v299, 124
        %v339 = vpop.permute.xlu0 %338
        %340 = vrot.lane.b32.xlu0 %v300, 124
        %v341 = vpop.permute.xlu0 %340
        %342 = vrot.lane.b32.xlu0 %v301, 124
        %v343 = vpop.permute.xlu0 %342
        %344 = vrot.lane.b32.xlu0 %v302, 124
        %v345 = vpop.permute.xlu0 %344
        %346 = vrot.lane.b32.xlu0 %v303, 124
        %v347 = vpop.permute.xlu0 %346
        %348 = vrot.lane.b32.xlu0 %v304, 124
        %v349 = vpop.permute.xlu0 %348
        %350 = vrot.lane.b32.xlu0 %v305, 124
        %v351 = vpop.permute.xlu0 %350
        %352 = vrot.lane.b32.xlu0 %v306, 124
        %v353 = vpop.permute.xlu0 %352
        %354 = vrot.lane.b32.xlu0 %v307, 124
        %v355 = vpop.permute.xlu0 %354
        %v372 = vmax.f32 %v292, %v325
        %v373 = vmax.f32 %v293, %v327
        %v374 = vmax.f32 %v294, %v329
        %v375 = vmax.f32 %v295, %v331
        %v376 = vmax.f32 %v296, %v333
        %v377 = vmax.f32 %v297, %v335
        %v378 = vmax.f32 %v298, %v337
        %v379 = vmax.f32 %v299, %v339
        %v380 = vmax.f32 %v300, %v341
        %v381 = vmax.f32 %v301, %v343
        %v382 = vmax.f32 %v302, %v345
        %v383 = vmax.f32 %v303, %v347
        %v384 = vmax.f32 %v304, %v349
        %v385 = vmax.f32 %v305, %v351
        %v386 = vmax.f32 %v306, %v353
        %v387 = vmax.f32 %v307, %v355
        %v388 = vmax.f32 %v372, %v373
        %v389 = vmax.f32 %v374, %v375
        %v390 = vmax.f32 %v376, %v377
        %v391 = vmax.f32 %v378, %v379
        %v392 = vmax.f32 %v380, %v381
        %v393 = vmax.f32 %v382, %v383
        %v394 = vmax.f32 %v384, %v385
        %v395 = vmax.f32 %v386, %v387
        %vm396 = vcmask 31744
        %397 = vst.msk [vmem:[#allocation2] sm:$0xff] %vm396, 0.0
        %vm398 = vcmask 25600
        %399 = vst.msk [vmem:[#allocation2 + $0x8] sm:$0x3] %vm398, 0.0
        %400 = vst.msk [vmem:[#allocation2 + $0x10] sm:$0xff] %vm396, 0.0
        %401 = vst.msk [vmem:[#allocation2 + $0x18] sm:$0x3] %vm398, 0.0
        %402 = vst.msk [vmem:[#allocation2 + $0x20] sm:$0xff] %vm396, 0.0
        %403 = vst.msk [vmem:[#allocation2 + $0x28] sm:$0x3] %vm398, 0.0
        %404 = vst.msk [vmem:[#allocation2 + $0x30] sm:$0xff] %vm396, 0.0
        %405 = vst.msk [vmem:[#allocation2 + $0x38] sm:$0x3] %vm398, 0.0
        %406 = vst.msk [vmem:[#allocation2 + $0x40] sm:$0xff] %vm396, 0.0
        %407 = vst.msk [vmem:[#allocation2 + $0x48] sm:$0x3] %vm398, 0.0
        %408 = vst.msk [vmem:[#allocation2 + $0x50] sm:$0xff] %vm396, 0.0
        %409 = vst.msk [vmem:[#allocation2 + $0x58] sm:$0x3] %vm398, 0.0
        %410 = vst.msk [vmem:[#allocation2 + $0x60] sm:$0xff] %vm396, 0.0
        %411 = vst.msk [vmem:[#allocation2 + $0x68] sm:$0x3] %vm398, 0.0
        %412 = vst.msk [vmem:[#allocation2 + $0x70] sm:$0xff] %vm396, 0.0
        %413 = vst.msk [vmem:[#allocation2 + $0x78] sm:$0x3] %vm398, 0.0
        %414 = vst.msk [vmem:[#allocation2 + $0x80] sm:$0xff] %vm396, 0.0
        %415 = vst.msk [vmem:[#allocation2 + $0x88] sm:$0x3] %vm398, 0.0
        %416 = vst.msk [vmem:[#allocation2 + $0x90] sm:$0xff] %vm396, 0.0
        %417 = vst.msk [vmem:[#allocation2 + $0x98] sm:$0x3] %vm398, 0.0
        %s418 = scalar_lea.vmem [#allocation2], 16
        %419 = vst.msk [vmem:[%s418 + $0x1] sm:$0xff] %vm396, %v388
        %420 = vst.msk [vmem:[%s418 + $0x11] sm:$0xff] %vm396, %v389
        %421 = vst.msk [vmem:[%s418 + $0x21] sm:$0xff] %vm396, %v390
        %422 = vst.msk [vmem:[%s418 + $0x31] sm:$0xff] %vm396, %v391
        %423 = vst.msk [vmem:[%s418 + $0x41] sm:$0xff] %vm396, %v392
        %424 = vst.msk [vmem:[%s418 + $0x51] sm:$0xff] %vm396, %v393
        %425 = vst.msk [vmem:[%s418 + $0x61] sm:$0xff] %vm396, %v394
        %426 = vst.msk [vmem:[%s418 + $0x71] sm:$0xff] %vm396, %v395
        %v427 = vld [vmem:[#allocation2] sm:$0xff]
        %v428 = vld [vmem:[#allocation2 + $0x10] sm:$0xff]
        %v429 = vld [vmem:[#allocation2 + $0x20] sm:$0xff]
        %v430 = vld [vmem:[#allocation2 + $0x30] sm:$0xff]
        %v431 = vld [vmem:[#allocation2 + $0x40] sm:$0xff]
        %v432 = vld [vmem:[#allocation2 + $0x50] sm:$0xff]
        %v433 = vld [vmem:[#allocation2 + $0x60] sm:$0xff]
        %v434 = vld [vmem:[#allocation2 + $0x70] sm:$0xff]
        %v435 = vld [vmem:[%s1] sm:$0xf]
        %v436 = vld [vmem:[#allocation2 + $0x1] sm:$0xff]
        %v437 = vld [vmem:[#allocation2 + $0x11] sm:$0xff]
        %v438 = vld [vmem:[#allocation2 + $0x21] sm:$0xff]
        %v439 = vld [vmem:[#allocation2 + $0x31] sm:$0xff]
        %v440 = vld [vmem:[#allocation2 + $0x41] sm:$0xff]
        %v441 = vld [vmem:[#allocation2 + $0x51] sm:$0xff]
        %v442 = vld [vmem:[#allocation2 + $0x61] sm:$0xff]
        %v443 = vld [vmem:[#allocation2 + $0x71] sm:$0xff]
        %s444 = scalar_lea.vmem %s1, 4
        %v445 = vld [vmem:[%s444] sm:$0xf]
        %v447 = vsel %vm396, %v436, 0
        %v450 = vsel %vm396, %v437, 0
        %v453 = vsel %vm396, %v438, 0
        %v456 = vsel %vm396, %v439, 0
        %v459 = vsel %vm396, %v440, 0
        %v462 = vsel %vm396, %v441, 0
        %v465 = vsel %vm396, %v442, 0
        %v468 = vsel %vm396, %v443, 0
        %vm470 = vcmask 1043456
        %v472 = vsel %vm470, %v445, 0
        %474 = vmatprep.subr.mxu0 0.0
        %475 = vmatpush1.msra.mxu0 0.0
        %476 = vmatprep.subr.mxu0 0.0
        %477 = vmatpush1.msra.mxu0 0.0
        %478 = vmatprep.subr.mxu0 0.0
        %479 = vmatpush1.msra.mxu0 0.0
        %480 = vmatprep.subr.mxu0 0.0
        %481 = vmatpush1.msra.mxu0 0.0
        %482 = vmatprep.subr.mxu0 0.0
        %483 = vmatpush1.msra.mxu0 0.0
        %484 = vmatprep.subr.mxu0 0.0
        %485 = vmatpush1.msra.mxu0 0.0
        %486 = vmatprep.subr.mxu0 0.0
        %487 = vmatpush1.msra.mxu0 0.0
        %488 = vmatprep.subr.mxu0 0.0
        %489 = vmatpush1.msra.mxu0 0.0
        %490 = vmatprep.subr.mxu0 0.0
        %491 = vmatpush1.msra.mxu0 0.0
        %492 = vmatprep.subr.mxu0 0.0
        %493 = vmatpush1.msra.mxu0 0.0
        %494 = vmatprep.subr.mxu0 0.0
        %495 = vmatpush1.msra.mxu0 0.0
        %496 = vmatprep.subr.mxu0 0.0
        %497 = vmatpush1.msra.mxu0 0.0
        %498 = vmatprep.subr.mxu0 0.0
        %499 = vmatpush1.msra.mxu0 0.0
        %500 = vmatprep.subr.mxu0 0.0
        %501 = vmatpush1.msra.mxu0 0.0
        %502 = vmatprep.subr.mxu0 0.0
        %503 = vmatpush1.msra.mxu0 0.0
        %504 = vmatprep.subr.mxu0 0.0
        %505 = vmatpush1.msra.mxu0 %v472
        %506 = vmatprep.subr.mxu0 0.0
        %507 = vmatpush2.msra.mxu0 0.0
        %508 = vmatprep.subr.mxu0 0.0
        %509 = vmatpush2.msra.mxu0 0.0
        %510 = vmatprep.subr.mxu0 0.0
        %511 = vmatpush2.msra.mxu0 0.0
        %512 = vmatprep.subr.mxu0 0.0
        %513 = vmatpush2.msra.mxu0 0.0
        %514 = vmatprep.subr.mxu0 0.0
        %515 = vmatpush2.msra.mxu0 0.0
        %516 = vmatprep.subr.mxu0 0.0
        %517 = vmatpush2.msra.mxu0 0.0
        %518 = vmatprep.subr.mxu0 0.0
        %519 = vmatpush2.msra.mxu0 0.0
        %520 = vmatprep.subr.mxu0 0.0
        %521 = vmatpush2.msra.mxu0 0.0
        %522 = vmatprep.subr.mxu0 0.0
        %523 = vmatpush2.msra.mxu0 0.0
        %524 = vmatprep.subr.mxu0 0.0
        %525 = vmatpush2.msra.mxu0 0.0
        %526 = vmatprep.subr.mxu0 0.0
        %527 = vmatpush2.msra.mxu0 0.0
        %528 = vmatprep.subr.mxu0 0.0
        %529 = vmatpush2.msra.mxu0 0.0
        %530 = vmatprep.subr.mxu0 0.0
        %531 = vmatpush2.msra.mxu0 0.0
        %532 = vmatprep.subr.mxu0 0.0
        %533 = vmatpush2.msra.mxu0 0.0
        %534 = vmatprep.subr.mxu0 0.0
        %535 = vmatpush2.msra.mxu0 0.0
        %536 = vmatprep.subr.mxu0 0.0
        %537 = vmatpush2.msra.mxu0 0.0
        %538 = vmatprep.mubr.f32.mxu0 0.0
        %539 = vmatmul.mubr.f32.gmra.mxu0 %v447
        %v540 = vpop.f32.mrf.mxu0
        %v541 = vadd.f32 0.0, %v540
        %v542 = vpop.f32.mrf.mxu0
        %543 = vmatprep.mubr.f32.mxu0 0.0
        %544 = vmatmul.mubr.f32.gmra.mxu0 %v450
        %v545 = vpop.f32.mrf.mxu0
        %v546 = vadd.f32 0.0, %v545
        %v547 = vpop.f32.mrf.mxu0
        %548 = vmatprep.mubr.f32.mxu0 0.0
        %549 = vmatmul.mubr.f32.gmra.mxu0 %v453
        %v550 = vpop.f32.mrf.mxu0
        %v551 = vadd.f32 0.0, %v550
        %v552 = vpop.f32.mrf.mxu0
        %553 = vmatprep.mubr.f32.mxu0 0.0
        %554 = vmatmul.mubr.f32.gmra.mxu0 %v456
        %v555 = vpop.f32.mrf.mxu0
        %v556 = vadd.f32 0.0, %v555
        %v557 = vpop.f32.mrf.mxu0
        %558 = vmatprep.mubr.f32.mxu0 0.0
        %559 = vmatmul.mubr.f32.gmra.mxu0 %v459
        %v560 = vpop.f32.mrf.mxu0
        %v561 = vadd.f32 0.0, %v560
        %v562 = vpop.f32.mrf.mxu0
        %563 = vmatprep.mubr.f32.mxu0 0.0
        %564 = vmatmul.mubr.f32.gmra.mxu0 %v462
        %v565 = vpop.f32.mrf.mxu0
        %v566 = vadd.f32 0.0, %v565
        %v567 = vpop.f32.mrf.mxu0
        %568 = vmatprep.mubr.f32.mxu0 0.0
        %569 = vmatmul.mubr.f32.gmra.mxu0 %v465
        %v570 = vpop.f32.mrf.mxu0
        %v571 = vadd.f32 0.0, %v570
        %v572 = vpop.f32.mrf.mxu0
        %573 = vmatprep.mubr.f32.mxu0 0.0
        %574 = vmatmul.mubr.f32.gmra.mxu0 %v468
        %v575 = vpop.f32.mrf.mxu0
        %v576 = vadd.f32 0.0, %v575
        %v577 = vpop.f32.mrf.mxu0
        %578 = vdwg.mxu0
        %v580 = vsel %vm396, %v427, 0
        %v583 = vsel %vm396, %v428, 0
        %v586 = vsel %vm396, %v429, 0
        %v589 = vsel %vm396, %v430, 0
        %v592 = vsel %vm396, %v431, 0
        %v595 = vsel %vm396, %v432, 0
        %v598 = vsel %vm396, %v433, 0
        %v601 = vsel %vm396, %v434, 0
        %v604 = vsel %vm470, %v435, 0
        %606 = vmatprep.subr.mxu0 0.0
        %607 = vmatpush1.msra.mxu0 0.0
        %608 = vmatprep.subr.mxu0 0.0
        %609 = vmatpush1.msra.mxu0 0.0
        %610 = vmatprep.subr.mxu0 0.0
        %611 = vmatpush1.msra.mxu0 0.0
        %612 = vmatprep.subr.mxu0 0.0
        %613 = vmatpush1.msra.mxu0 0.0
        %614 = vmatprep.subr.mxu0 0.0
        %615 = vmatpush1.msra.mxu0 0.0
        %616 = vmatprep.subr.mxu0 0.0
        %617 = vmatpush1.msra.mxu0 0.0
        %618 = vmatprep.subr.mxu0 0.0
        %619 = vmatpush1.msra.mxu0 0.0
        %620 = vmatprep.subr.mxu0 0.0
        %621 = vmatpush1.msra.mxu0 0.0
        %622 = vmatprep.subr.mxu0 0.0
        %623 = vmatpush1.msra.mxu0 0.0
        %624 = vmatprep.subr.mxu0 0.0
        %625 = vmatpush1.msra.mxu0 0.0
        %626 = vmatprep.subr.mxu0 0.0
        %627 = vmatpush1.msra.mxu0 0.0
        %628 = vmatprep.subr.mxu0 0.0
        %629 = vmatpush1.msra.mxu0 0.0
        %630 = vmatprep.subr.mxu0 0.0
        %631 = vmatpush1.msra.mxu0 0.0
        %632 = vmatprep.subr.mxu0 0.0
        %633 = vmatpush1.msra.mxu0 0.0
        %634 = vmatprep.subr.mxu0 0.0
        %635 = vmatpush1.msra.mxu0 0.0
        %636 = vmatprep.subr.mxu0 0.0
        %637 = vmatpush1.msra.mxu0 %v604
        %638 = vmatprep.subr.mxu0 0.0
        %639 = vmatpush2.msra.mxu0 0.0
        %640 = vmatprep.subr.mxu0 0.0
        %641 = vmatpush2.msra.mxu0 0.0
        %642 = vmatprep.subr.mxu0 0.0
        %643 = vmatpush2.msra.mxu0 0.0
        %644 = vmatprep.subr.mxu0 0.0
        %645 = vmatpush2.msra.mxu0 0.0
        %646 = vmatprep.subr.mxu0 0.0
        %647 = vmatpush2.msra.mxu0 0.0
        %648 = vmatprep.subr.mxu0 0.0
        %649 = vmatpush2.msra.mxu0 0.0
        %650 = vmatprep.subr.mxu0 0.0
        %651 = vmatpush2.msra.mxu0 0.0
        %652 = vmatprep.subr.mxu0 0.0
        %653 = vmatpush2.msra.mxu0 0.0
        %654 = vmatprep.subr.mxu0 0.0
        %655 = vmatpush2.msra.mxu0 0.0
        %656 = vmatprep.subr.mxu0 0.0
        %657 = vmatpush2.msra.mxu0 0.0
        %658 = vmatprep.subr.mxu0 0.0
        %659 = vmatpush2.msra.mxu0 0.0
        %660 = vmatprep.subr.mxu0 0.0
        %661 = vmatpush2.msra.mxu0 0.0
        %662 = vmatprep.subr.mxu0 0.0
        %663 = vmatpush2.msra.mxu0 0.0
        %664 = vmatprep.subr.mxu0 0.0
        %665 = vmatpush2.msra.mxu0 0.0
        %666 = vmatprep.subr.mxu0 0.0
        %667 = vmatpush2.msra.mxu0 0.0
        %668 = vmatprep.subr.mxu0 0.0
        %669 = vmatpush2.msra.mxu0 0.0
        %670 = vmatprep.mubr.f32.mxu0 0.0
        %671 = vmatmul.mubr.f32.gmra.mxu0 %v580
        %v672 = vpop.f32.mrf.mxu0
        %v673 = vadd.f32 %v541, %v672
        %v674 = vpop.f32.mrf.mxu0
        %675 = vmatprep.mubr.f32.mxu0 0.0
        %676 = vmatmul.mubr.f32.gmra.mxu0 %v583
        %v677 = vpop.f32.mrf.mxu0
        %v678 = vadd.f32 %v546, %v677
        %v679 = vpop.f32.mrf.mxu0
        %680 = vmatprep.mubr.f32.mxu0 0.0
        %681 = vmatmul.mubr.f32.gmra.mxu0 %v586
        %v682 = vpop.f32.mrf.mxu0
        %v683 = vadd.f32 %v551, %v682
        %v684 = vpop.f32.mrf.mxu0
        %685 = vmatprep.mubr.f32.mxu0 0.0
        %686 = vmatmul.mubr.f32.gmra.mxu0 %v589
        %v687 = vpop.f32.mrf.mxu0
        %v688 = vadd.f32 %v556, %v687
        %v689 = vpop.f32.mrf.mxu0
        %690 = vmatprep.mubr.f32.mxu0 0.0
        %691 = vmatmul.mubr.f32.gmra.mxu0 %v592
        %v692 = vpop.f32.mrf.mxu0
        %v693 = vadd.f32 %v561, %v692
        %v694 = vpop.f32.mrf.mxu0
        %695 = vmatprep.mubr.f32.mxu0 0.0
        %696 = vmatmul.mubr.f32.gmra.mxu0 %v595
        %v697 = vpop.f32.mrf.mxu0
        %v698 = vadd.f32 %v566, %v697
        %v699 = vpop.f32.mrf.mxu0
        %700 = vmatprep.mubr.f32.mxu0 0.0
        %701 = vmatmul.mubr.f32.gmra.mxu0 %v598
        %v702 = vpop.f32.mrf.mxu0
        %v703 = vadd.f32 %v571, %v702
        %v704 = vpop.f32.mrf.mxu0
        %705 = vmatprep.mubr.f32.mxu0 0.0
        %706 = vmatmul.mubr.f32.gmra.mxu0 %v601
        %v707 = vpop.f32.mrf.mxu0
        %v708 = vadd.f32 %v576, %v707
        %v709 = vpop.f32.mrf.mxu0
        %710 = vdwg.mxu0
        %v711 = vld [vmem:[#allocation2 + $0x2] sm:$0xff]
        %v712 = vld [vmem:[#allocation2 + $0x12] sm:$0xff]
        %v713 = vld [vmem:[#allocation2 + $0x22] sm:$0xff]
        %v714 = vld [vmem:[#allocation2 + $0x32] sm:$0xff]
        %v715 = vld [vmem:[#allocation2 + $0x42] sm:$0xff]
        %v716 = vld [vmem:[#allocation2 + $0x52] sm:$0xff]
        %v717 = vld [vmem:[#allocation2 + $0x62] sm:$0xff]
        %v718 = vld [vmem:[#allocation2 + $0x72] sm:$0xff]
        %s719 = scalar_lea.vmem %s1, 8
        %v720 = vld [vmem:[%s719] sm:$0xf]
        %v722 = vsel %vm396, %v711, 0
        %v725 = vsel %vm396, %v712, 0
        %v728 = vsel %vm396, %v713, 0
        %v731 = vsel %vm396, %v714, 0
        %v734 = vsel %vm396, %v715, 0
        %v737 = vsel %vm396, %v716, 0
        %v740 = vsel %vm396, %v717, 0
        %v743 = vsel %vm396, %v718, 0
        %v746 = vsel %vm470, %v720, 0
        %748 = vmatprep.subr.mxu0 0.0
        %749 = vmatpush1.msra.mxu0 0.0
        %750 = vmatprep.subr.mxu0 0.0
        %751 = vmatpush1.msra.mxu0 0.0
        %752 = vmatprep.subr.mxu0 0.0
        %753 = vmatpush1.msra.mxu0 0.0
        %754 = vmatprep.subr.mxu0 0.0
        %755 = vmatpush1.msra.mxu0 0.0
        %756 = vmatprep.subr.mxu0 0.0
        %757 = vmatpush1.msra.mxu0 0.0
        %758 = vmatprep.subr.mxu0 0.0
        %759 = vmatpush1.msra.mxu0 0.0
        %760 = vmatprep.subr.mxu0 0.0
        %761 = vmatpush1.msra.mxu0 0.0
        %762 = vmatprep.subr.mxu0 0.0
        %763 = vmatpush1.msra.mxu0 0.0
        %764 = vmatprep.subr.mxu0 0.0
        %765 = vmatpush1.msra.mxu0 0.0
        %766 = vmatprep.subr.mxu0 0.0
        %767 = vmatpush1.msra.mxu0 0.0
        %768 = vmatprep.subr.mxu0 0.0
        %769 = vmatpush1.msra.mxu0 0.0
        %770 = vmatprep.subr.mxu0 0.0
        %771 = vmatpush1.msra.mxu0 0.0
        %772 = vmatprep.subr.mxu0 0.0
        %773 = vmatpush1.msra.mxu0 0.0
        %774 = vmatprep.subr.mxu0 0.0
        %775 = vmatpush1.msra.mxu0 0.0
        %776 = vmatprep.subr.mxu0 0.0
        %777 = vmatpush1.msra.mxu0 0.0
        %778 = vmatprep.subr.mxu0 0.0
        %779 = vmatpush1.msra.mxu0 %v746
        %780 = vmatprep.subr.mxu0 0.0
        %781 = vmatpush2.msra.mxu0 0.0
        %782 = vmatprep.subr.mxu0 0.0
        %783 = vmatpush2.msra.mxu0 0.0
        %784 = vmatprep.subr.mxu0 0.0
        %785 = vmatpush2.msra.mxu0 0.0
        %786 = vmatprep.subr.mxu0 0.0
        %787 = vmatpush2.msra.mxu0 0.0
        %788 = vmatprep.subr.mxu0 0.0
        %789 = vmatpush2.msra.mxu0 0.0
        %790 = vmatprep.subr.mxu0 0.0
        %791 = vmatpush2.msra.mxu0 0.0
        %792 = vmatprep.subr.mxu0 0.0
        %793 = vmatpush2.msra.mxu0 0.0
        %794 = vmatprep.subr.mxu0 0.0
        %795 = vmatpush2.msra.mxu0 0.0
        %796 = vmatprep.subr.mxu0 0.0
        %797 = vmatpush2.msra.mxu0 0.0
        %798 = vmatprep.subr.mxu0 0.0
        %799 = vmatpush2.msra.mxu0 0.0
        %800 = vmatprep.subr.mxu0 0.0
        %801 = vmatpush2.msra.mxu0 0.0
        %802 = vmatprep.subr.mxu0 0.0
        %803 = vmatpush2.msra.mxu0 0.0
        %804 = vmatprep.subr.mxu0 0.0
        %805 = vmatpush2.msra.mxu0 0.0
        %806 = vmatprep.subr.mxu0 0.0
        %807 = vmatpush2.msra.mxu0 0.0
        %808 = vmatprep.subr.mxu0 0.0
        %809 = vmatpush2.msra.mxu0 0.0
        %810 = vmatprep.subr.mxu0 0.0
        %811 = vmatpush2.msra.mxu0 0.0
        %812 = vmatprep.mubr.f32.mxu0 0.0
        %813 = vmatmul.mubr.f32.gmra.mxu0 %v722
        %v814 = vpop.f32.mrf.mxu0
        %v815 = vadd.f32 0.0, %v814
        %v816 = vpop.f32.mrf.mxu0
        %817 = vmatprep.mubr.f32.mxu0 0.0
        %818 = vmatmul.mubr.f32.gmra.mxu0 %v725
        %v819 = vpop.f32.mrf.mxu0
        %v820 = vadd.f32 0.0, %v819
        %v821 = vpop.f32.mrf.mxu0
        %822 = vmatprep.mubr.f32.mxu0 0.0
        %823 = vmatmul.mubr.f32.gmra.mxu0 %v728
        %v824 = vpop.f32.mrf.mxu0
        %v825 = vadd.f32 0.0, %v824
        %v826 = vpop.f32.mrf.mxu0
        %827 = vmatprep.mubr.f32.mxu0 0.0
        %828 = vmatmul.mubr.f32.gmra.mxu0 %v731
        %v829 = vpop.f32.mrf.mxu0
        %v830 = vadd.f32 0.0, %v829
        %v831 = vpop.f32.mrf.mxu0
        %832 = vmatprep.mubr.f32.mxu0 0.0
        %833 = vmatmul.mubr.f32.gmra.mxu0 %v734
        %v834 = vpop.f32.mrf.mxu0
        %v835 = vadd.f32 0.0, %v834
        %v836 = vpop.f32.mrf.mxu0
        %837 = vmatprep.mubr.f32.mxu0 0.0
        %838 = vmatmul.mubr.f32.gmra.mxu0 %v737
        %v839 = vpop.f32.mrf.mxu0
        %v840 = vadd.f32 0.0, %v839
        %v841 = vpop.f32.mrf.mxu0
        %842 = vmatprep.mubr.f32.mxu0 0.0
        %843 = vmatmul.mubr.f32.gmra.mxu0 %v740
        %v844 = vpop.f32.mrf.mxu0
        %v845 = vadd.f32 0.0, %v844
        %v846 = vpop.f32.mrf.mxu0
        %847 = vmatprep.mubr.f32.mxu0 0.0
        %848 = vmatmul.mubr.f32.gmra.mxu0 %v743
        %v849 = vpop.f32.mrf.mxu0
        %v850 = vadd.f32 0.0, %v849
        %v851 = vpop.f32.mrf.mxu0
        %852 = vdwg.mxu0
        %v853 = vadd.f32 %v673, %v815
        %v854 = vadd.f32 %v678, %v820
        %v855 = vadd.f32 %v683, %v825
        %v856 = vadd.f32 %v688, %v830
        %v857 = vadd.f32 %v693, %v835
        %v858 = vadd.f32 %v698, %v840
        %v859 = vadd.f32 %v703, %v845
        %v860 = vadd.f32 %v708, %v850
        %v861 = vld [vmem:[%s418] sm:$0xff]
        %v862 = vld [vmem:[%s418 + $0x10] sm:$0xff]
        %v863 = vld [vmem:[%s418 + $0x20] sm:$0xff]
        %v864 = vld [vmem:[%s418 + $0x30] sm:$0xff]
        %v865 = vld [vmem:[%s418 + $0x40] sm:$0xff]
        %v866 = vld [vmem:[%s418 + $0x50] sm:$0xff]
        %v867 = vld [vmem:[%s418 + $0x60] sm:$0xff]
        %v868 = vld [vmem:[%s418 + $0x70] sm:$0xff]
        %s869 = scalar_lea.vmem %s1, 12
        %v870 = vld [vmem:[%s869] sm:$0xf]
        %v872 = vsel %vm396, %v861, 0
        %v875 = vsel %vm396, %v862, 0
        %v878 = vsel %vm396, %v863, 0
        %v881 = vsel %vm396, %v864, 0
        %v884 = vsel %vm396, %v865, 0
        %v887 = vsel %vm396, %v866, 0
        %v890 = vsel %vm396, %v867, 0
        %v893 = vsel %vm396, %v868, 0
        %v896 = vsel %vm470, %v870, 0
        %898 = vmatprep.subr.mxu0 0.0
        %899 = vmatpush1.msra.mxu0 0.0
        %900 = vmatprep.subr.mxu0 0.0
        %901 = vmatpush1.msra.mxu0 0.0
        %902 = vmatprep.subr.mxu0 0.0
        %903 = vmatpush1.msra.mxu0 0.0
        %904 = vmatprep.subr.mxu0 0.0
        %905 = vmatpush1.msra.mxu0 0.0
        %906 = vmatprep.subr.mxu0 0.0
        %907 = vmatpush1.msra.mxu0 0.0
        %908 = vmatprep.subr.mxu0 0.0
        %909 = vmatpush1.msra.mxu0 0.0
        %910 = vmatprep.subr.mxu0 0.0
        %911 = vmatpush1.msra.mxu0 0.0
        %912 = vmatprep.subr.mxu0 0.0
        %913 = vmatpush1.msra.mxu0 0.0
        %914 = vmatprep.subr.mxu0 0.0
        %915 = vmatpush1.msra.mxu0 0.0
        %916 = vmatprep.subr.mxu0 0.0
        %917 = vmatpush1.msra.mxu0 0.0
        %918 = vmatprep.subr.mxu0 0.0
        %919 = vmatpush1.msra.mxu0 0.0
        %920 = vmatprep.subr.mxu0 0.0
        %921 = vmatpush1.msra.mxu0 0.0
        %922 = vmatprep.subr.mxu0 0.0
        %923 = vmatpush1.msra.mxu0 0.0
        %924 = vmatprep.subr.mxu0 0.0
        %925 = vmatpush1.msra.mxu0 0.0
        %926 = vmatprep.subr.mxu0 0.0
        %927 = vmatpush1.msra.mxu0 0.0
        %928 = vmatprep.subr.mxu0 0.0
        %929 = vmatpush1.msra.mxu0 %v896
        %930 = vmatprep.subr.mxu0 0.0
        %931 = vmatpush2.msra.mxu0 0.0
        %932 = vmatprep.subr.mxu0 0.0
        %933 = vmatpush2.msra.mxu0 0.0
        %934 = vmatprep.subr.mxu0 0.0
        %935 = vmatpush2.msra.mxu0 0.0
        %936 = vmatprep.subr.mxu0 0.0
        %937 = vmatpush2.msra.mxu0 0.0
        %938 = vmatprep.subr.mxu0 0.0
        %939 = vmatpush2.msra.mxu0 0.0
        %940 = vmatprep.subr.mxu0 0.0
        %941 = vmatpush2.msra.mxu0 0.0
        %942 = vmatprep.subr.mxu0 0.0
        %943 = vmatpush2.msra.mxu0 0.0
        %944 = vmatprep.subr.mxu0 0.0
        %945 = vmatpush2.msra.mxu0 0.0
        %946 = vmatprep.subr.mxu0 0.0
        %947 = vmatpush2.msra.mxu0 0.0
        %948 = vmatprep.subr.mxu0 0.0
        %949 = vmatpush2.msra.mxu0 0.0
        %950 = vmatprep.subr.mxu0 0.0
        %951 = vmatpush2.msra.mxu0 0.0
        %952 = vmatprep.subr.mxu0 0.0
        %953 = vmatpush2.msra.mxu0 0.0
        %954 = vmatprep.subr.mxu0 0.0
        %955 = vmatpush2.msra.mxu0 0.0
        %956 = vmatprep.subr.mxu0 0.0
        %957 = vmatpush2.msra.mxu0 0.0
        %958 = vmatprep.subr.mxu0 0.0
        %959 = vmatpush2.msra.mxu0 0.0
        %960 = vmatprep.subr.mxu0 0.0
        %961 = vmatpush2.msra.mxu0 0.0
        %962 = vmatprep.mubr.f32.mxu0 0.0
        %963 = vmatmul.mubr.f32.gmra.mxu0 %v872
        %v964 = vpop.f32.mrf.mxu0
        %v965 = vadd.f32 0.0, %v964
        %v966 = vpop.f32.mrf.mxu0
        %967 = vmatprep.mubr.f32.mxu0 0.0
        %968 = vmatmul.mubr.f32.gmra.mxu0 %v875
        %v969 = vpop.f32.mrf.mxu0
        %v970 = vadd.f32 0.0, %v969
        %v971 = vpop.f32.mrf.mxu0
        %972 = vmatprep.mubr.f32.mxu0 0.0
        %973 = vmatmul.mubr.f32.gmra.mxu0 %v878
        %v974 = vpop.f32.mrf.mxu0
        %v975 = vadd.f32 0.0, %v974
        %v976 = vpop.f32.mrf.mxu0
        %977 = vmatprep.mubr.f32.mxu0 0.0
        %978 = vmatmul.mubr.f32.gmra.mxu0 %v881
        %v979 = vpop.f32.mrf.mxu0
        %v980 = vadd.f32 0.0, %v979
        %v981 = vpop.f32.mrf.mxu0
        %982 = vmatprep.mubr.f32.mxu0 0.0
        %983 = vmatmul.mubr.f32.gmra.mxu0 %v884
        %v984 = vpop.f32.mrf.mxu0
        %v985 = vadd.f32 0.0, %v984
        %v986 = vpop.f32.mrf.mxu0
        %987 = vmatprep.mubr.f32.mxu0 0.0
        %988 = vmatmul.mubr.f32.gmra.mxu0 %v887
        %v989 = vpop.f32.mrf.mxu0
        %v990 = vadd.f32 0.0, %v989
        %v991 = vpop.f32.mrf.mxu0
        %992 = vmatprep.mubr.f32.mxu0 0.0
        %993 = vmatmul.mubr.f32.gmra.mxu0 %v890
        %v994 = vpop.f32.mrf.mxu0
        %v995 = vadd.f32 0.0, %v994
        %v996 = vpop.f32.mrf.mxu0
        %997 = vmatprep.mubr.f32.mxu0 0.0
        %998 = vmatmul.mubr.f32.gmra.mxu0 %v893
        %v999 = vpop.f32.mrf.mxu0
        %v1000 = vadd.f32 0.0, %v999
        %v1001 = vpop.f32.mrf.mxu0
        %1002 = vdwg.mxu0
        %v1003 = vadd.f32 %v853, %v965
        %v1004 = vadd.f32 %v854, %v970
        %v1005 = vadd.f32 %v855, %v975
        %v1006 = vadd.f32 %v856, %v980
        %v1007 = vadd.f32 %v857, %v985
        %v1008 = vadd.f32 %v858, %v990
        %v1009 = vadd.f32 %v859, %v995
        %v1010 = vadd.f32 %v860, %v1000
        %v1011 = vld [vmem:[%s418 + $0x1] sm:$0xff]
        %v1012 = vld [vmem:[%s418 + $0x11] sm:$0xff]
        %v1013 = vld [vmem:[%s418 + $0x21] sm:$0xff]
        %v1014 = vld [vmem:[%s418 + $0x31] sm:$0xff]
        %v1015 = vld [vmem:[%s418 + $0x41] sm:$0xff]
        %v1016 = vld [vmem:[%s418 + $0x51] sm:$0xff]
        %v1017 = vld [vmem:[%s418 + $0x61] sm:$0xff]
        %v1018 = vld [vmem:[%s418 + $0x71] sm:$0xff]
        %s1019 = scalar_lea.vmem %s1, 16
        %v1020 = vld [vmem:[%s1019] sm:$0xf]
        %v1022 = vsel %vm396, %v1011, 0
        %v1025 = vsel %vm396, %v1012, 0
        %v1028 = vsel %vm396, %v1013, 0
        %v1031 = vsel %vm396, %v1014, 0
        %v1034 = vsel %vm396, %v1015, 0
        %v1037 = vsel %vm396, %v1016, 0
        %v1040 = vsel %vm396, %v1017, 0
        %v1043 = vsel %vm396, %v1018, 0
        %v1046 = vsel %vm470, %v1020, 0
        %1048 = vmatprep.subr.mxu0 0.0
        %1049 = vmatpush1.msra.mxu0 0.0
        %1050 = vmatprep.subr.mxu0 0.0
        %1051 = vmatpush1.msra.mxu0 0.0
        %1052 = vmatprep.subr.mxu0 0.0
        %1053 = vmatpush1.msra.mxu0 0.0
        %1054 = vmatprep.subr.mxu0 0.0
        %1055 = vmatpush1.msra.mxu0 0.0
        %1056 = vmatprep.subr.mxu0 0.0
        %1057 = vmatpush1.msra.mxu0 0.0
        %1058 = vmatprep.subr.mxu0 0.0
        %1059 = vmatpush1.msra.mxu0 0.0
        %1060 = vmatprep.subr.mxu0 0.0
        %1061 = vmatpush1.msra.mxu0 0.0
        %1062 = vmatprep.subr.mxu0 0.0
        %1063 = vmatpush1.msra.mxu0 0.0
        %1064 = vmatprep.subr.mxu0 0.0
        %1065 = vmatpush1.msra.mxu0 0.0
        %1066 = vmatprep.subr.mxu0 0.0
        %1067 = vmatpush1.msra.mxu0 0.0
        %1068 = vmatprep.subr.mxu0 0.0
        %1069 = vmatpush1.msra.mxu0 0.0
        %1070 = vmatprep.subr.mxu0 0.0
        %1071 = vmatpush1.msra.mxu0 0.0
        %1072 = vmatprep.subr.mxu0 0.0
        %1073 = vmatpush1.msra.mxu0 0.0
        %1074 = vmatprep.subr.mxu0 0.0
        %1075 = vmatpush1.msra.mxu0 0.0
        %1076 = vmatprep.subr.mxu0 0.0
        %1077 = vmatpush1.msra.mxu0 0.0
        %1078 = vmatprep.subr.mxu0 0.0
        %1079 = vmatpush1.msra.mxu0 %v1046
        %1080 = vmatprep.subr.mxu0 0.0
        %1081 = vmatpush2.msra.mxu0 0.0
        %1082 = vmatprep.subr.mxu0 0.0
        %1083 = vmatpush2.msra.mxu0 0.0
        %1084 = vmatprep.subr.mxu0 0.0
        %1085 = vmatpush2.msra.mxu0 0.0
        %1086 = vmatprep.subr.mxu0 0.0
        %1087 = vmatpush2.msra.mxu0 0.0
        %1088 = vmatprep.subr.mxu0 0.0
        %1089 = vmatpush2.msra.mxu0 0.0
        %1090 = vmatprep.subr.mxu0 0.0
        %1091 = vmatpush2.msra.mxu0 0.0
        %1092 = vmatprep.subr.mxu0 0.0
        %1093 = vmatpush2.msra.mxu0 0.0
        %1094 = vmatprep.subr.mxu0 0.0
        %1095 = vmatpush2.msra.mxu0 0.0
        %1096 = vmatprep.subr.mxu0 0.0
        %1097 = vmatpush2.msra.mxu0 0.0
        %1098 = vmatprep.subr.mxu0 0.0
        %1099 = vmatpush2.msra.mxu0 0.0
        %1100 = vmatprep.subr.mxu0 0.0
        %1101 = vmatpush2.msra.mxu0 0.0
        %1102 = vmatprep.subr.mxu0 0.0
        %1103 = vmatpush2.msra.mxu0 0.0
        %1104 = vmatprep.subr.mxu0 0.0
        %1105 = vmatpush2.msra.mxu0 0.0
        %1106 = vmatprep.subr.mxu0 0.0
        %1107 = vmatpush2.msra.mxu0 0.0
        %1108 = vmatprep.subr.mxu0 0.0
        %1109 = vmatpush2.msra.mxu0 0.0
        %1110 = vmatprep.subr.mxu0 0.0
        %1111 = vmatpush2.msra.mxu0 0.0
        %1112 = vmatprep.mubr.f32.mxu0 0.0
        %1113 = vmatmul.mubr.f32.gmra.mxu0 %v1022
        %v1114 = vpop.f32.mrf.mxu0
        %v1115 = vadd.f32 0.0, %v1114
        %v1116 = vpop.f32.mrf.mxu0
        %1117 = vmatprep.mubr.f32.mxu0 0.0
        %1118 = vmatmul.mubr.f32.gmra.mxu0 %v1025
        %v1119 = vpop.f32.mrf.mxu0
        %v1120 = vadd.f32 0.0, %v1119
        %v1121 = vpop.f32.mrf.mxu0
        %1122 = vmatprep.mubr.f32.mxu0 0.0
        %1123 = vmatmul.mubr.f32.gmra.mxu0 %v1028
        %v1124 = vpop.f32.mrf.mxu0
        %v1125 = vadd.f32 0.0, %v1124
        %v1126 = vpop.f32.mrf.mxu0
        %1127 = vmatprep.mubr.f32.mxu0 0.0
        %1128 = vmatmul.mubr.f32.gmra.mxu0 %v1031
        %v1129 = vpop.f32.mrf.mxu0
        %v1130 = vadd.f32 0.0, %v1129
        %v1131 = vpop.f32.mrf.mxu0
        %1132 = vmatprep.mubr.f32.mxu0 0.0
        %1133 = vmatmul.mubr.f32.gmra.mxu0 %v1034
        %v1134 = vpop.f32.mrf.mxu0
        %v1135 = vadd.f32 0.0, %v1134
        %v1136 = vpop.f32.mrf.mxu0
        %1137 = vmatprep.mubr.f32.mxu0 0.0
        %1138 = vmatmul.mubr.f32.gmra.mxu0 %v1037
        %v1139 = vpop.f32.mrf.mxu0
        %v1140 = vadd.f32 0.0, %v1139
        %v1141 = vpop.f32.mrf.mxu0
        %1142 = vmatprep.mubr.f32.mxu0 0.0
        %1143 = vmatmul.mubr.f32.gmra.mxu0 %v1040
        %v1144 = vpop.f32.mrf.mxu0
        %v1145 = vadd.f32 0.0, %v1144
        %v1146 = vpop.f32.mrf.mxu0
        %1147 = vmatprep.mubr.f32.mxu0 0.0
        %1148 = vmatmul.mubr.f32.gmra.mxu0 %v1043
        %v1149 = vpop.f32.mrf.mxu0
        %v1150 = vadd.f32 0.0, %v1149
        %v1151 = vpop.f32.mrf.mxu0
        %1152 = vdwg.mxu0
        %v1153 = vadd.f32 %v1003, %v1115
        %v1154 = vadd.f32 %v1004, %v1120
        %v1155 = vadd.f32 %v1005, %v1125
        %v1156 = vadd.f32 %v1006, %v1130
        %v1157 = vadd.f32 %v1007, %v1135
        %v1158 = vadd.f32 %v1008, %v1140
        %v1159 = vadd.f32 %v1009, %v1145
        %v1160 = vadd.f32 %v1010, %v1150
        %v1161 = vld [vmem:[%s418 + $0x2] sm:$0xff]
        %v1162 = vld [vmem:[%s418 + $0x12] sm:$0xff]
        %v1163 = vld [vmem:[%s418 + $0x22] sm:$0xff]
        %v1164 = vld [vmem:[%s418 + $0x32] sm:$0xff]
        %v1165 = vld [vmem:[%s418 + $0x42] sm:$0xff]
        %v1166 = vld [vmem:[%s418 + $0x52] sm:$0xff]
        %v1167 = vld [vmem:[%s418 + $0x62] sm:$0xff]
        %v1168 = vld [vmem:[%s418 + $0x72] sm:$0xff]
        %s1169 = scalar_lea.vmem %s1, 20
        %v1170 = vld [vmem:[%s1169] sm:$0xf]
        %v1172 = vsel %vm396, %v1161, 0
        %v1175 = vsel %vm396, %v1162, 0
        %v1178 = vsel %vm396, %v1163, 0
        %v1181 = vsel %vm396, %v1164, 0
        %v1184 = vsel %vm396, %v1165, 0
        %v1187 = vsel %vm396, %v1166, 0
        %v1190 = vsel %vm396, %v1167, 0
        %v1193 = vsel %vm396, %v1168, 0
        %v1196 = vsel %vm470, %v1170, 0
        %1198 = vmatprep.subr.mxu0 0.0
        %1199 = vmatpush1.msra.mxu0 0.0
        %1200 = vmatprep.subr.mxu0 0.0
        %1201 = vmatpush1.msra.mxu0 0.0
        %1202 = vmatprep.subr.mxu0 0.0
        %1203 = vmatpush1.msra.mxu0 0.0
        %1204 = vmatprep.subr.mxu0 0.0
        %1205 = vmatpush1.msra.mxu0 0.0
        %1206 = vmatprep.subr.mxu0 0.0
        %1207 = vmatpush1.msra.mxu0 0.0
        %1208 = vmatprep.subr.mxu0 0.0
        %1209 = vmatpush1.msra.mxu0 0.0
        %1210 = vmatprep.subr.mxu0 0.0
        %1211 = vmatpush1.msra.mxu0 0.0
        %1212 = vmatprep.subr.mxu0 0.0
        %1213 = vmatpush1.msra.mxu0 0.0
        %1214 = vmatprep.subr.mxu0 0.0
        %1215 = vmatpush1.msra.mxu0 0.0
        %1216 = vmatprep.subr.mxu0 0.0
        %1217 = vmatpush1.msra.mxu0 0.0
        %1218 = vmatprep.subr.mxu0 0.0
        %1219 = vmatpush1.msra.mxu0 0.0
        %1220 = vmatprep.subr.mxu0 0.0
        %1221 = vmatpush1.msra.mxu0 0.0
        %1222 = vmatprep.subr.mxu0 0.0
        %1223 = vmatpush1.msra.mxu0 0.0
        %1224 = vmatprep.subr.mxu0 0.0
        %1225 = vmatpush1.msra.mxu0 0.0
        %1226 = vmatprep.subr.mxu0 0.0
        %1227 = vmatpush1.msra.mxu0 0.0
        %1228 = vmatprep.subr.mxu0 0.0
        %1229 = vmatpush1.msra.mxu0 %v1196
        %1230 = vmatprep.subr.mxu0 0.0
        %1231 = vmatpush2.msra.mxu0 0.0
        %1232 = vmatprep.subr.mxu0 0.0
        %1233 = vmatpush2.msra.mxu0 0.0
        %1234 = vmatprep.subr.mxu0 0.0
        %1235 = vmatpush2.msra.mxu0 0.0
        %1236 = vmatprep.subr.mxu0 0.0
        %1237 = vmatpush2.msra.mxu0 0.0
        %1238 = vmatprep.subr.mxu0 0.0
        %1239 = vmatpush2.msra.mxu0 0.0
        %1240 = vmatprep.subr.mxu0 0.0
        %1241 = vmatpush2.msra.mxu0 0.0
        %1242 = vmatprep.subr.mxu0 0.0
        %1243 = vmatpush2.msra.mxu0 0.0
        %1244 = vmatprep.subr.mxu0 0.0
        %1245 = vmatpush2.msra.mxu0 0.0
        %1246 = vmatprep.subr.mxu0 0.0
        %1247 = vmatpush2.msra.mxu0 0.0
        %1248 = vmatprep.subr.mxu0 0.0
        %1249 = vmatpush2.msra.mxu0 0.0
        %1250 = vmatprep.subr.mxu0 0.0
        %1251 = vmatpush2.msra.mxu0 0.0
        %1252 = vmatprep.subr.mxu0 0.0
        %1253 = vmatpush2.msra.mxu0 0.0
        %1254 = vmatprep.subr.mxu0 0.0
        %1255 = vmatpush2.msra.mxu0 0.0
        %1256 = vmatprep.subr.mxu0 0.0
        %1257 = vmatpush2.msra.mxu0 0.0
        %1258 = vmatprep.subr.mxu0 0.0
        %1259 = vmatpush2.msra.mxu0 0.0
        %1260 = vmatprep.subr.mxu0 0.0
        %1261 = vmatpush2.msra.mxu0 0.0
        %1262 = vmatprep.mubr.f32.mxu0 0.0
        %1263 = vmatmul.mubr.f32.gmra.mxu0 %v1172
        %v1264 = vpop.f32.mrf.mxu0
        %v1265 = vadd.f32 0.0, %v1264
        %v1266 = vpop.f32.mrf.mxu0
        %1267 = vmatprep.mubr.f32.mxu0 0.0
        %1268 = vmatmul.mubr.f32.gmra.mxu0 %v1175
        %v1269 = vpop.f32.mrf.mxu0
        %v1270 = vadd.f32 0.0, %v1269
        %v1271 = vpop.f32.mrf.mxu0
        %1272 = vmatprep.mubr.f32.mxu0 0.0
        %1273 = vmatmul.mubr.f32.gmra.mxu0 %v1178
        %v1274 = vpop.f32.mrf.mxu0
        %v1275 = vadd.f32 0.0, %v1274
        %v1276 = vpop.f32.mrf.mxu0
        %1277 = vmatprep.mubr.f32.mxu0 0.0
        %1278 = vmatmul.mubr.f32.gmra.mxu0 %v1181
        %v1279 = vpop.f32.mrf.mxu0
        %v1280 = vadd.f32 0.0, %v1279
        %v1281 = vpop.f32.mrf.mxu0
        %1282 = vmatprep.mubr.f32.mxu0 0.0
        %1283 = vmatmul.mubr.f32.gmra.mxu0 %v1184
        %v1284 = vpop.f32.mrf.mxu0
        %v1285 = vadd.f32 0.0, %v1284
        %v1286 = vpop.f32.mrf.mxu0
        %1287 = vmatprep.mubr.f32.mxu0 0.0
        %1288 = vmatmul.mubr.f32.gmra.mxu0 %v1187
        %v1289 = vpop.f32.mrf.mxu0
        %v1290 = vadd.f32 0.0, %v1289
        %v1291 = vpop.f32.mrf.mxu0
        %1292 = vmatprep.mubr.f32.mxu0 0.0
        %1293 = vmatmul.mubr.f32.gmra.mxu0 %v1190
        %v1294 = vpop.f32.mrf.mxu0
        %v1295 = vadd.f32 0.0, %v1294
        %v1296 = vpop.f32.mrf.mxu0
        %1297 = vmatprep.mubr.f32.mxu0 0.0
        %1298 = vmatmul.mubr.f32.gmra.mxu0 %v1193
        %v1299 = vpop.f32.mrf.mxu0
        %v1300 = vadd.f32 0.0, %v1299
        %v1301 = vpop.f32.mrf.mxu0
        %1302 = vdwg.mxu0
        %v1303 = vadd.f32 %v1153, %v1265
        %v1304 = vadd.f32 %v1154, %v1270
        %v1305 = vadd.f32 %v1155, %v1275
        %v1306 = vadd.f32 %v1156, %v1280
        %v1307 = vadd.f32 %v1157, %v1285
        %v1308 = vadd.f32 %v1158, %v1290
        %v1309 = vadd.f32 %v1159, %v1295
        %v1310 = vadd.f32 %v1160, %v1300
        %s1311 = scalar_lea.vmem [#allocation2], 32
        %v1312 = vld [vmem:[%s1311] sm:$0xff]
        %v1313 = vld [vmem:[%s1311 + $0x10] sm:$0xff]
        %v1314 = vld [vmem:[%s1311 + $0x20] sm:$0xff]
        %v1315 = vld [vmem:[%s1311 + $0x30] sm:$0xff]
        %v1316 = vld [vmem:[%s1311 + $0x40] sm:$0xff]
        %v1317 = vld [vmem:[%s1311 + $0x50] sm:$0xff]
        %v1318 = vld [vmem:[%s1311 + $0x60] sm:$0xff]
        %v1319 = vld [vmem:[%s1311 + $0x70] sm:$0xff]
        %s1320 = scalar_lea.vmem %s1, 24
        %v1321 = vld [vmem:[%s1320] sm:$0xf]
        %v1323 = vsel %vm396, %v1312, 0
        %v1326 = vsel %vm396, %v1313, 0
        %v1329 = vsel %vm396, %v1314, 0
        %v1332 = vsel %vm396, %v1315, 0
        %v1335 = vsel %vm396, %v1316, 0
        %v1338 = vsel %vm396, %v1317, 0
        %v1341 = vsel %vm396, %v1318, 0
        %v1344 = vsel %vm396, %v1319, 0
        %v1347 = vsel %vm470, %v1321, 0
        %1349 = vmatprep.subr.mxu0 0.0
        %1350 = vmatpush1.msra.mxu0 0.0
        %1351 = vmatprep.subr.mxu0 0.0
        %1352 = vmatpush1.msra.mxu0 0.0
        %1353 = vmatprep.subr.mxu0 0.0
        %1354 = vmatpush1.msra.mxu0 0.0
        %1355 = vmatprep.subr.mxu0 0.0
        %1356 = vmatpush1.msra.mxu0 0.0
        %1357 = vmatprep.subr.mxu0 0.0
        %1358 = vmatpush1.msra.mxu0 0.0
        %1359 = vmatprep.subr.mxu0 0.0
        %1360 = vmatpush1.msra.mxu0 0.0
        %1361 = vmatprep.subr.mxu0 0.0
        %1362 = vmatpush1.msra.mxu0 0.0
        %1363 = vmatprep.subr.mxu0 0.0
        %1364 = vmatpush1.msra.mxu0 0.0
        %1365 = vmatprep.subr.mxu0 0.0
        %1366 = vmatpush1.msra.mxu0 0.0
        %1367 = vmatprep.subr.mxu0 0.0
        %1368 = vmatpush1.msra.mxu0 0.0
        %1369 = vmatprep.subr.mxu0 0.0
        %1370 = vmatpush1.msra.mxu0 0.0
        %1371 = vmatprep.subr.mxu0 0.0
        %1372 = vmatpush1.msra.mxu0 0.0
        %1373 = vmatprep.subr.mxu0 0.0
        %1374 = vmatpush1.msra.mxu0 0.0
        %1375 = vmatprep.subr.mxu0 0.0
        %1376 = vmatpush1.msra.mxu0 0.0
        %1377 = vmatprep.subr.mxu0 0.0
        %1378 = vmatpush1.msra.mxu0 0.0
        %1379 = vmatprep.subr.mxu0 0.0
        %1380 = vmatpush1.msra.mxu0 %v1347
        %1381 = vmatprep.subr.mxu0 0.0
        %1382 = vmatpush2.msra.mxu0 0.0
        %1383 = vmatprep.subr.mxu0 0.0
        %1384 = vmatpush2.msra.mxu0 0.0
        %1385 = vmatprep.subr.mxu0 0.0
        %1386 = vmatpush2.msra.mxu0 0.0
        %1387 = vmatprep.subr.mxu0 0.0
        %1388 = vmatpush2.msra.mxu0 0.0
        %1389 = vmatprep.subr.mxu0 0.0
        %1390 = vmatpush2.msra.mxu0 0.0
        %1391 = vmatprep.subr.mxu0 0.0
        %1392 = vmatpush2.msra.mxu0 0.0
        %1393 = vmatprep.subr.mxu0 0.0
        %1394 = vmatpush2.msra.mxu0 0.0
        %1395 = vmatprep.subr.mxu0 0.0
        %1396 = vmatpush2.msra.mxu0 0.0
        %1397 = vmatprep.subr.mxu0 0.0
        %1398 = vmatpush2.msra.mxu0 0.0
        %1399 = vmatprep.subr.mxu0 0.0
        %1400 = vmatpush2.msra.mxu0 0.0
        %1401 = vmatprep.subr.mxu0 0.0
        %1402 = vmatpush2.msra.mxu0 0.0
        %1403 = vmatprep.subr.mxu0 0.0
        %1404 = vmatpush2.msra.mxu0 0.0
        %1405 = vmatprep.subr.mxu0 0.0
        %1406 = vmatpush2.msra.mxu0 0.0
        %1407 = vmatprep.subr.mxu0 0.0
        %1408 = vmatpush2.msra.mxu0 0.0
        %1409 = vmatprep.subr.mxu0 0.0
        %1410 = vmatpush2.msra.mxu0 0.0
        %1411 = vmatprep.subr.mxu0 0.0
        %1412 = vmatpush2.msra.mxu0 0.0
        %1413 = vmatprep.mubr.f32.mxu0 0.0
        %1414 = vmatmul.mubr.f32.gmra.mxu0 %v1323
        %v1415 = vpop.f32.mrf.mxu0
        %v1416 = vadd.f32 0.0, %v1415
        %v1417 = vpop.f32.mrf.mxu0
        %1418 = vmatprep.mubr.f32.mxu0 0.0
        %1419 = vmatmul.mubr.f32.gmra.mxu0 %v1326
        %v1420 = vpop.f32.mrf.mxu0
        %v1421 = vadd.f32 0.0, %v1420
        %v1422 = vpop.f32.mrf.mxu0
        %1423 = vmatprep.mubr.f32.mxu0 0.0
        %1424 = vmatmul.mubr.f32.gmra.mxu0 %v1329
        %v1425 = vpop.f32.mrf.mxu0
        %v1426 = vadd.f32 0.0, %v1425
        %v1427 = vpop.f32.mrf.mxu0
        %1428 = vmatprep.mubr.f32.mxu0 0.0
        %1429 = vmatmul.mubr.f32.gmra.mxu0 %v1332
        %v1430 = vpop.f32.mrf.mxu0
        %v1431 = vadd.f32 0.0, %v1430
        %v1432 = vpop.f32.mrf.mxu0
        %1433 = vmatprep.mubr.f32.mxu0 0.0
        %1434 = vmatmul.mubr.f32.gmra.mxu0 %v1335
        %v1435 = vpop.f32.mrf.mxu0
        %v1436 = vadd.f32 0.0, %v1435
        %v1437 = vpop.f32.mrf.mxu0
        %1438 = vmatprep.mubr.f32.mxu0 0.0
        %1439 = vmatmul.mubr.f32.gmra.mxu0 %v1338
        %v1440 = vpop.f32.mrf.mxu0
        %v1441 = vadd.f32 0.0, %v1440
        %v1442 = vpop.f32.mrf.mxu0
        %1443 = vmatprep.mubr.f32.mxu0 0.0
        %1444 = vmatmul.mubr.f32.gmra.mxu0 %v1341
        %v1445 = vpop.f32.mrf.mxu0
        %v1446 = vadd.f32 0.0, %v1445
        %v1447 = vpop.f32.mrf.mxu0
        %1448 = vmatprep.mubr.f32.mxu0 0.0
        %1449 = vmatmul.mubr.f32.gmra.mxu0 %v1344
        %v1450 = vpop.f32.mrf.mxu0
        %v1451 = vadd.f32 0.0, %v1450
        %v1452 = vpop.f32.mrf.mxu0
        %1453 = vdwg.mxu0
        %v1454 = vadd.f32 %v1303, %v1416
        %v1455 = vadd.f32 %v1304, %v1421
        %v1456 = vadd.f32 %v1305, %v1426
        %v1457 = vadd.f32 %v1306, %v1431
        %v1458 = vadd.f32 %v1307, %v1436
        %v1459 = vadd.f32 %v1308, %v1441
        %v1460 = vadd.f32 %v1309, %v1446
        %v1461 = vadd.f32 %v1310, %v1451
        %v1462 = vld [vmem:[%s1311 + $0x1] sm:$0xff]
        %v1463 = vld [vmem:[%s1311 + $0x11] sm:$0xff]
        %v1464 = vld [vmem:[%s1311 + $0x21] sm:$0xff]
        %v1465 = vld [vmem:[%s1311 + $0x31] sm:$0xff]
        %v1466 = vld [vmem:[%s1311 + $0x41] sm:$0xff]
        %v1467 = vld [vmem:[%s1311 + $0x51] sm:$0xff]
        %v1468 = vld [vmem:[%s1311 + $0x61] sm:$0xff]
        %v1469 = vld [vmem:[%s1311 + $0x71] sm:$0xff]
        %s1470 = scalar_lea.vmem %s1, 28
        %v1471 = vld [vmem:[%s1470] sm:$0xf]
        %v1473 = vsel %vm396, %v1462, 0
        %v1476 = vsel %vm396, %v1463, 0
        %v1479 = vsel %vm396, %v1464, 0
        %v1482 = vsel %vm396, %v1465, 0
        %v1485 = vsel %vm396, %v1466, 0
        %v1488 = vsel %vm396, %v1467, 0
        %v1491 = vsel %vm396, %v1468, 0
        %v1494 = vsel %vm396, %v1469, 0
        %v1497 = vsel %vm470, %v1471, 0
        %1499 = vmatprep.subr.mxu0 0.0
        %1500 = vmatpush1.msra.mxu0 0.0
        %1501 = vmatprep.subr.mxu0 0.0
        %1502 = vmatpush1.msra.mxu0 0.0
        %1503 = vmatprep.subr.mxu0 0.0
        %1504 = vmatpush1.msra.mxu0 0.0
        %1505 = vmatprep.subr.mxu0 0.0
        %1506 = vmatpush1.msra.mxu0 0.0
        %1507 = vmatprep.subr.mxu0 0.0
        %1508 = vmatpush1.msra.mxu0 0.0
        %1509 = vmatprep.subr.mxu0 0.0
        %1510 = vmatpush1.msra.mxu0 0.0
        %1511 = vmatprep.subr.mxu0 0.0
        %1512 = vmatpush1.msra.mxu0 0.0
        %1513 = vmatprep.subr.mxu0 0.0
        %1514 = vmatpush1.msra.mxu0 0.0
        %1515 = vmatprep.subr.mxu0 0.0
        %1516 = vmatpush1.msra.mxu0 0.0
        %1517 = vmatprep.subr.mxu0 0.0
        %1518 = vmatpush1.msra.mxu0 0.0
        %1519 = vmatprep.subr.mxu0 0.0
        %1520 = vmatpush1.msra.mxu0 0.0
        %1521 = vmatprep.subr.mxu0 0.0
        %1522 = vmatpush1.msra.mxu0 0.0
        %1523 = vmatprep.subr.mxu0 0.0
        %1524 = vmatpush1.msra.mxu0 0.0
        %1525 = vmatprep.subr.mxu0 0.0
        %1526 = vmatpush1.msra.mxu0 0.0
        %1527 = vmatprep.subr.mxu0 0.0
        %1528 = vmatpush1.msra.mxu0 0.0
        %1529 = vmatprep.subr.mxu0 0.0
        %1530 = vmatpush1.msra.mxu0 %v1497
        %1531 = vmatprep.subr.mxu0 0.0
        %1532 = vmatpush2.msra.mxu0 0.0
        %1533 = vmatprep.subr.mxu0 0.0
        %1534 = vmatpush2.msra.mxu0 0.0
        %1535 = vmatprep.subr.mxu0 0.0
        %1536 = vmatpush2.msra.mxu0 0.0
        %1537 = vmatprep.subr.mxu0 0.0
        %1538 = vmatpush2.msra.mxu0 0.0
        %1539 = vmatprep.subr.mxu0 0.0
        %1540 = vmatpush2.msra.mxu0 0.0
        %1541 = vmatprep.subr.mxu0 0.0
        %1542 = vmatpush2.msra.mxu0 0.0
        %1543 = vmatprep.subr.mxu0 0.0
        %1544 = vmatpush2.msra.mxu0 0.0
        %1545 = vmatprep.subr.mxu0 0.0
        %1546 = vmatpush2.msra.mxu0 0.0
        %1547 = vmatprep.subr.mxu0 0.0
        %1548 = vmatpush2.msra.mxu0 0.0
        %1549 = vmatprep.subr.mxu0 0.0
        %1550 = vmatpush2.msra.mxu0 0.0
        %1551 = vmatprep.subr.mxu0 0.0
        %1552 = vmatpush2.msra.mxu0 0.0
        %1553 = vmatprep.subr.mxu0 0.0
        %1554 = vmatpush2.msra.mxu0 0.0
        %1555 = vmatprep.subr.mxu0 0.0
        %1556 = vmatpush2.msra.mxu0 0.0
        %1557 = vmatprep.subr.mxu0 0.0
        %1558 = vmatpush2.msra.mxu0 0.0
        %1559 = vmatprep.subr.mxu0 0.0
        %1560 = vmatpush2.msra.mxu0 0.0
        %1561 = vmatprep.subr.mxu0 0.0
        %1562 = vmatpush2.msra.mxu0 0.0
        %1563 = vmatprep.mubr.f32.mxu0 0.0
        %1564 = vmatmul.mubr.f32.gmra.mxu0 %v1473
        %v1565 = vpop.f32.mrf.mxu0
        %v1566 = vadd.f32 0.0, %v1565
        %v1567 = vpop.f32.mrf.mxu0
        %1568 = vmatprep.mubr.f32.mxu0 0.0
        %1569 = vmatmul.mubr.f32.gmra.mxu0 %v1476
        %v1570 = vpop.f32.mrf.mxu0
        %v1571 = vadd.f32 0.0, %v1570
        %v1572 = vpop.f32.mrf.mxu0
        %1573 = vmatprep.mubr.f32.mxu0 0.0
        %1574 = vmatmul.mubr.f32.gmra.mxu0 %v1479
        %v1575 = vpop.f32.mrf.mxu0
        %v1576 = vadd.f32 0.0, %v1575
        %v1577 = vpop.f32.mrf.mxu0
        %1578 = vmatprep.mubr.f32.mxu0 0.0
        %1579 = vmatmul.mubr.f32.gmra.mxu0 %v1482
        %v1580 = vpop.f32.mrf.mxu0
        %v1581 = vadd.f32 0.0, %v1580
        %v1582 = vpop.f32.mrf.mxu0
        %1583 = vmatprep.mubr.f32.mxu0 0.0
        %1584 = vmatmul.mubr.f32.gmra.mxu0 %v1485
        %v1585 = vpop.f32.mrf.mxu0
        %v1586 = vadd.f32 0.0, %v1585
        %v1587 = vpop.f32.mrf.mxu0
        %1588 = vmatprep.mubr.f32.mxu0 0.0
        %1589 = vmatmul.mubr.f32.gmra.mxu0 %v1488
        %v1590 = vpop.f32.mrf.mxu0
        %v1591 = vadd.f32 0.0, %v1590
        %v1592 = vpop.f32.mrf.mxu0
        %1593 = vmatprep.mubr.f32.mxu0 0.0
        %1594 = vmatmul.mubr.f32.gmra.mxu0 %v1491
        %v1595 = vpop.f32.mrf.mxu0
        %v1596 = vadd.f32 0.0, %v1595
        %v1597 = vpop.f32.mrf.mxu0
        %1598 = vmatprep.mubr.f32.mxu0 0.0
        %1599 = vmatmul.mubr.f32.gmra.mxu0 %v1494
        %v1600 = vpop.f32.mrf.mxu0
        %v1601 = vadd.f32 0.0, %v1600
        %v1602 = vpop.f32.mrf.mxu0
        %1603 = vdwg.mxu0
        %v1604 = vadd.f32 %v1454, %v1566
        %v1605 = vadd.f32 %v1455, %v1571
        %v1606 = vadd.f32 %v1456, %v1576
        %v1607 = vadd.f32 %v1457, %v1581
        %v1608 = vadd.f32 %v1458, %v1586
        %v1609 = vadd.f32 %v1459, %v1591
        %v1610 = vadd.f32 %v1460, %v1596
        %v1611 = vadd.f32 %v1461, %v1601
        %v1612 = vld [vmem:[%s1311 + $0x2] sm:$0xff]
        %v1613 = vld [vmem:[%s1311 + $0x12] sm:$0xff]
        %v1614 = vld [vmem:[%s1311 + $0x22] sm:$0xff]
        %v1615 = vld [vmem:[%s1311 + $0x32] sm:$0xff]
        %v1616 = vld [vmem:[%s1311 + $0x42] sm:$0xff]
        %v1617 = vld [vmem:[%s1311 + $0x52] sm:$0xff]
        %v1618 = vld [vmem:[%s1311 + $0x62] sm:$0xff]
        %v1619 = vld [vmem:[%s1311 + $0x72] sm:$0xff]
        %s1620 = scalar_lea.vmem %s1, 32
        %v1621 = vld [vmem:[%s1620] sm:$0xf]
        %v1623 = vsel %vm396, %v1612, 0
        %v1626 = vsel %vm396, %v1613, 0
        %v1629 = vsel %vm396, %v1614, 0
        %v1632 = vsel %vm396, %v1615, 0
        %v1635 = vsel %vm396, %v1616, 0
        %v1638 = vsel %vm396, %v1617, 0
        %v1641 = vsel %vm396, %v1618, 0
        %v1644 = vsel %vm396, %v1619, 0
        %v1647 = vsel %vm470, %v1621, 0
        %1649 = vmatprep.subr.mxu0 0.0
        %1650 = vmatpush1.msra.mxu0 0.0
        %1651 = vmatprep.subr.mxu0 0.0
        %1652 = vmatpush1.msra.mxu0 0.0
        %1653 = vmatprep.subr.mxu0 0.0
        %1654 = vmatpush1.msra.mxu0 0.0
        %1655 = vmatprep.subr.mxu0 0.0
        %1656 = vmatpush1.msra.mxu0 0.0
        %1657 = vmatprep.subr.mxu0 0.0
        %1658 = vmatpush1.msra.mxu0 0.0
        %1659 = vmatprep.subr.mxu0 0.0
        %1660 = vmatpush1.msra.mxu0 0.0
        %1661 = vmatprep.subr.mxu0 0.0
        %1662 = vmatpush1.msra.mxu0 0.0
        %1663 = vmatprep.subr.mxu0 0.0
        %1664 = vmatpush1.msra.mxu0 0.0
        %1665 = vmatprep.subr.mxu0 0.0
        %1666 = vmatpush1.msra.mxu0 0.0
        %1667 = vmatprep.subr.mxu0 0.0
        %1668 = vmatpush1.msra.mxu0 0.0
        %1669 = vmatprep.subr.mxu0 0.0
        %1670 = vmatpush1.msra.mxu0 0.0
        %1671 = vmatprep.subr.mxu0 0.0
        %1672 = vmatpush1.msra.mxu0 0.0
        %1673 = vmatprep.subr.mxu0 0.0
        %1674 = vmatpush1.msra.mxu0 0.0
        %1675 = vmatprep.subr.mxu0 0.0
        %1676 = vmatpush1.msra.mxu0 0.0
        %1677 = vmatprep.subr.mxu0 0.0
        %1678 = vmatpush1.msra.mxu0 0.0
        %1679 = vmatprep.subr.mxu0 0.0
        %1680 = vmatpush1.msra.mxu0 %v1647
        %1681 = vmatprep.subr.mxu0 0.0
        %1682 = vmatpush2.msra.mxu0 0.0
        %1683 = vmatprep.subr.mxu0 0.0
        %1684 = vmatpush2.msra.mxu0 0.0
        %1685 = vmatprep.subr.mxu0 0.0
        %1686 = vmatpush2.msra.mxu0 0.0
        %1687 = vmatprep.subr.mxu0 0.0
        %1688 = vmatpush2.msra.mxu0 0.0
        %1689 = vmatprep.subr.mxu0 0.0
        %1690 = vmatpush2.msra.mxu0 0.0
        %1691 = vmatprep.subr.mxu0 0.0
        %1692 = vmatpush2.msra.mxu0 0.0
        %1693 = vmatprep.subr.mxu0 0.0
        %1694 = vmatpush2.msra.mxu0 0.0
        %1695 = vmatprep.subr.mxu0 0.0
        %1696 = vmatpush2.msra.mxu0 0.0
        %1697 = vmatprep.subr.mxu0 0.0
        %1698 = vmatpush2.msra.mxu0 0.0
        %1699 = vmatprep.subr.mxu0 0.0
        %1700 = vmatpush2.msra.mxu0 0.0
        %1701 = vmatprep.subr.mxu0 0.0
        %1702 = vmatpush2.msra.mxu0 0.0
        %1703 = vmatprep.subr.mxu0 0.0
        %1704 = vmatpush2.msra.mxu0 0.0
        %1705 = vmatprep.subr.mxu0 0.0
        %1706 = vmatpush2.msra.mxu0 0.0
        %1707 = vmatprep.subr.mxu0 0.0
        %1708 = vmatpush2.msra.mxu0 0.0
        %1709 = vmatprep.subr.mxu0 0.0
        %1710 = vmatpush2.msra.mxu0 0.0
        %1711 = vmatprep.subr.mxu0 0.0
        %1712 = vmatpush2.msra.mxu0 0.0
        %1713 = vmatprep.mubr.f32.mxu0 0.0
        %1714 = vmatmul.mubr.f32.gmra.mxu0 %v1623
        %v1715 = vpop.f32.mrf.mxu0
        %v1716 = vadd.f32 0.0, %v1715
        %v1717 = vpop.f32.mrf.mxu0
        %1718 = vmatprep.mubr.f32.mxu0 0.0
        %1719 = vmatmul.mubr.f32.gmra.mxu0 %v1626
        %v1720 = vpop.f32.mrf.mxu0
        %v1721 = vadd.f32 0.0, %v1720
        %v1722 = vpop.f32.mrf.mxu0
        %1723 = vmatprep.mubr.f32.mxu0 0.0
        %1724 = vmatmul.mubr.f32.gmra.mxu0 %v1629
        %v1725 = vpop.f32.mrf.mxu0
        %v1726 = vadd.f32 0.0, %v1725
        %v1727 = vpop.f32.mrf.mxu0
        %1728 = vmatprep.mubr.f32.mxu0 0.0
        %1729 = vmatmul.mubr.f32.gmra.mxu0 %v1632
        %v1730 = vpop.f32.mrf.mxu0
        %v1731 = vadd.f32 0.0, %v1730
        %v1732 = vpop.f32.mrf.mxu0
        %1733 = vmatprep.mubr.f32.mxu0 0.0
        %1734 = vmatmul.mubr.f32.gmra.mxu0 %v1635
        %v1735 = vpop.f32.mrf.mxu0
        %v1736 = vadd.f32 0.0, %v1735
        %v1737 = vpop.f32.mrf.mxu0
        %1738 = vmatprep.mubr.f32.mxu0 0.0
        %1739 = vmatmul.mubr.f32.gmra.mxu0 %v1638
        %v1740 = vpop.f32.mrf.mxu0
        %v1741 = vadd.f32 0.0, %v1740
        %v1742 = vpop.f32.mrf.mxu0
        %1743 = vmatprep.mubr.f32.mxu0 0.0
        %1744 = vmatmul.mubr.f32.gmra.mxu0 %v1641
        %v1745 = vpop.f32.mrf.mxu0
        %v1746 = vadd.f32 0.0, %v1745
        %v1747 = vpop.f32.mrf.mxu0
        %1748 = vmatprep.mubr.f32.mxu0 0.0
        %1749 = vmatmul.mubr.f32.gmra.mxu0 %v1644
        %v1750 = vpop.f32.mrf.mxu0
        %v1751 = vadd.f32 0.0, %v1750
        %v1752 = vpop.f32.mrf.mxu0
        %1753 = vdwg.mxu0
        %v1754 = vadd.f32 %v1604, %v1716
        %v1755 = vadd.f32 %v1605, %v1721
        %v1756 = vadd.f32 %v1606, %v1726
        %v1757 = vadd.f32 %v1607, %v1731
        %v1758 = vadd.f32 %v1608, %v1736
        %v1759 = vadd.f32 %v1609, %v1741
        %v1760 = vadd.f32 %v1610, %v1746
        %v1761 = vadd.f32 %v1611, %v1751
        %v1762 = vld [vmem:[%s2] sm:$0x1]
        %v1764 = vlaneseq
        %v1765 = vshrl.u32 %v1764, 7
        %v1766 = vsub.s32 0, %v1765
        %v1767 = vrot.slane %v1762, %v1766
        %v1769 = vmul.f32 %v1754, %v1767
        %v1770 = vmul.f32 %v1755, %v1767
        %v1771 = vmul.f32 %v1756, %v1767
        %v1772 = vmul.f32 %v1757, %v1767
        %v1773 = vmul.f32 %v1758, %v1767
        %v1774 = vmul.f32 %v1759, %v1767
        %v1775 = vmul.f32 %v1760, %v1767
        %v1776 = vmul.f32 %v1761, %v1767
        %v1777 = vld [vmem:[%s3] sm:$0x1]
        %v1779 = vlaneseq
        %v1780 = vshrl.u32 %v1779, 7
        %v1781 = vsub.s32 0, %v1780
        %v1782 = vrot.slane %v1777, %v1781
        %v1784 = vadd.f32 %v1769, %v1782
        %v1785 = vadd.f32 %v1770, %v1782
        %v1786 = vadd.f32 %v1771, %v1782
        %v1787 = vadd.f32 %v1772, %v1782
        %v1788 = vadd.f32 %v1773, %v1782
        %v1789 = vadd.f32 %v1774, %v1782
        %v1790 = vadd.f32 %v1775, %v1782
        %v1791 = vadd.f32 %v1776, %v1782
        %v1792 = vmax.f32 %v1784, 0.0
        %v1793 = vmax.f32 %v1785, 0.0
        %v1794 = vmax.f32 %v1786, 0.0
        %v1795 = vmax.f32 %v1787, 0.0
        %v1796 = vmax.f32 %v1788, 0.0
        %v1797 = vmax.f32 %v1789, 0.0
        %v1798 = vmax.f32 %v1790, 0.0
        %v1799 = vmax.f32 %v1791, 0.0
        %1800 = vst [vmem:[#allocation3] sm:$0xff] 0.0
        %1801 = vst [vmem:[#allocation3 + $0x8] sm:$0x3] 0.0
        %1802 = vst [vmem:[#allocation3 + $0x10] sm:$0xff] 0.0
        %1803 = vst [vmem:[#allocation3 + $0x18] sm:$0x3] 0.0
        %1804 = vst [vmem:[#allocation3 + $0x20] sm:$0xff] 0.0
        %1805 = vst [vmem:[#allocation3 + $0x28] sm:$0x3] 0.0
        %1806 = vst [vmem:[#allocation3 + $0x30] sm:$0xff] 0.0
        %1807 = vst [vmem:[#allocation3 + $0x38] sm:$0x3] 0.0
        %1808 = vst [vmem:[#allocation3 + $0x40] sm:$0xff] 0.0
        %1809 = vst [vmem:[#allocation3 + $0x48] sm:$0x3] 0.0
        %1810 = vst [vmem:[#allocation3 + $0x50] sm:$0xff] 0.0
        %1811 = vst [vmem:[#allocation3 + $0x58] sm:$0x3] 0.0
        %1812 = vst [vmem:[#allocation3 + $0x60] sm:$0xff] 0.0
        %1813 = vst [vmem:[#allocation3 + $0x68] sm:$0x3] 0.0
        %1814 = vst [vmem:[#allocation3 + $0x70] sm:$0xff] 0.0
        %1815 = vst [vmem:[#allocation3 + $0x78] sm:$0x3] 0.0
        %1816 = vst [vmem:[#allocation3 + $0x80] sm:$0xff] 0.0
        %1817 = vst [vmem:[#allocation3 + $0x88] sm:$0x3] 0.0
        %1818 = vst [vmem:[#allocation3 + $0x90] sm:$0xff] 0.0
        %1819 = vst [vmem:[#allocation3 + $0x98] sm:$0x3] 0.0
        %s1820 = scalar_lea.vmem [#allocation3], 16
        %1821 = vst [vmem:[%s1820 + $0x1] sm:$0xff] %v1792
        %1822 = vst [vmem:[%s1820 + $0x11] sm:$0xff] %v1793
        %1823 = vst [vmem:[%s1820 + $0x21] sm:$0xff] %v1794
        %1824 = vst [vmem:[%s1820 + $0x31] sm:$0xff] %v1795
        %1825 = vst [vmem:[%s1820 + $0x41] sm:$0xff] %v1796
        %1826 = vst [vmem:[%s1820 + $0x51] sm:$0xff] %v1797
        %1827 = vst [vmem:[%s1820 + $0x61] sm:$0xff] %v1798
        %1828 = vst [vmem:[%s1820 + $0x71] sm:$0xff] %v1799
        %v1829 = vld [vmem:[#allocation3] sm:$0xff]
        %v1830 = vld [vmem:[#allocation3 + $0x10] sm:$0xff]
        %v1831 = vld [vmem:[#allocation3 + $0x20] sm:$0xff]
        %v1832 = vld [vmem:[#allocation3 + $0x30] sm:$0xff]
        %v1833 = vld [vmem:[#allocation3 + $0x40] sm:$0xff]
        %v1834 = vld [vmem:[#allocation3 + $0x50] sm:$0xff]
        %v1835 = vld [vmem:[#allocation3 + $0x60] sm:$0xff]
        %v1836 = vld [vmem:[#allocation3 + $0x70] sm:$0xff]
        %v1837 = vld [vmem:[#allocation4] sm:$0xff]
        %v1838 = vld [vmem:[#allocation4 + $0x8] sm:$0xff]
        %v1839 = vld [vmem:[#allocation4 + $0x10] sm:$0xff]
        %v1840 = vld [vmem:[#allocation4 + $0x18] sm:$0xff]
        %v1841 = vld [vmem:[#allocation4 + $0x20] sm:$0xff]
        %v1842 = vld [vmem:[#allocation4 + $0x28] sm:$0xff]
        %v1843 = vld [vmem:[#allocation4 + $0x30] sm:$0xff]
        %v1844 = vld [vmem:[#allocation4 + $0x38] sm:$0xff]
        %v1845 = vld [vmem:[#allocation4 + $0x40] sm:$0xff]
        %v1846 = vld [vmem:[#allocation4 + $0x48] sm:$0xff]
        %v1847 = vld [vmem:[#allocation4 + $0x50] sm:$0xff]
        %v1848 = vld [vmem:[#allocation4 + $0x58] sm:$0xff]
        %v1849 = vld [vmem:[#allocation4 + $0x60] sm:$0xff]
        %v1850 = vld [vmem:[#allocation4 + $0x68] sm:$0xff]
        %v1851 = vld [vmem:[#allocation4 + $0x70] sm:$0xff]
        %v1852 = vld [vmem:[#allocation4 + $0x78] sm:$0xff]
        %v1853 = vld [vmem:[#allocation3 + $0x1] sm:$0xff]
        %v1854 = vld [vmem:[#allocation3 + $0x11] sm:$0xff]
        %v1855 = vld [vmem:[#allocation3 + $0x21] sm:$0xff]
        %v1856 = vld [vmem:[#allocation3 + $0x31] sm:$0xff]
        %v1857 = vld [vmem:[#allocation3 + $0x41] sm:$0xff]
        %v1858 = vld [vmem:[#allocation3 + $0x51] sm:$0xff]
        %v1859 = vld [vmem:[#allocation3 + $0x61] sm:$0xff]
        %v1860 = vld [vmem:[#allocation3 + $0x71] sm:$0xff]
        %s1861 = scalar_lea.vmem [#allocation4], 128
        %v1862 = vld [vmem:[%s1861] sm:$0xff]
        %v1863 = vld [vmem:[%s1861 + $0x8] sm:$0xff]
        %v1864 = vld [vmem:[%s1861 + $0x10] sm:$0xff]
        %v1865 = vld [vmem:[%s1861 + $0x18] sm:$0xff]
        %v1866 = vld [vmem:[%s1861 + $0x20] sm:$0xff]
        %v1867 = vld [vmem:[%s1861 + $0x28] sm:$0xff]
        %v1868 = vld [vmem:[%s1861 + $0x30] sm:$0xff]
        %v1869 = vld [vmem:[%s1861 + $0x38] sm:$0xff]
        %v1870 = vld [vmem:[%s1861 + $0x40] sm:$0xff]
        %v1871 = vld [vmem:[%s1861 + $0x48] sm:$0xff]
        %v1872 = vld [vmem:[%s1861 + $0x50] sm:$0xff]
        %v1873 = vld [vmem:[%s1861 + $0x58] sm:$0xff]
        %v1874 = vld [vmem:[%s1861 + $0x60] sm:$0xff]
        %v1875 = vld [vmem:[%s1861 + $0x68] sm:$0xff]
        %v1876 = vld [vmem:[%s1861 + $0x70] sm:$0xff]
        %v1877 = vld [vmem:[%s1861 + $0x78] sm:$0xff]
        %1878 = vmatprep.subr.mxu0 0.0
        %1879 = vmatpush1.msra.mxu0 %v1877
        %1880 = vmatprep.subr.mxu0 0.0
        %1881 = vmatpush1.msra.mxu0 %v1876
        %1882 = vmatprep.subr.mxu0 0.0
        %1883 = vmatpush1.msra.mxu0 %v1875
        %1884 = vmatprep.subr.mxu0 0.0
        %1885 = vmatpush1.msra.mxu0 %v1874
        %1886 = vmatprep.subr.mxu0 0.0
        %1887 = vmatpush1.msra.mxu0 %v1873
        %1888 = vmatprep.subr.mxu0 0.0
        %1889 = vmatpush1.msra.mxu0 %v1872
        %1890 = vmatprep.subr.mxu0 0.0
        %1891 = vmatpush1.msra.mxu0 %v1871
        %1892 = vmatprep.subr.mxu0 0.0
        %1893 = vmatpush1.msra.mxu0 %v1870
        %1894 = vmatprep.subr.mxu0 0.0
        %1895 = vmatpush1.msra.mxu0 %v1869
        %1896 = vmatprep.subr.mxu0 0.0
        %1897 = vmatpush1.msra.mxu0 %v1868
        %1898 = vmatprep.subr.mxu0 0.0
        %1899 = vmatpush1.msra.mxu0 %v1867
        %1900 = vmatprep.subr.mxu0 0.0
        %1901 = vmatpush1.msra.mxu0 %v1866
        %1902 = vmatprep.subr.mxu0 0.0
        %1903 = vmatpush1.msra.mxu0 %v1865
        %1904 = vmatprep.subr.mxu0 0.0
        %1905 = vmatpush1.msra.mxu0 %v1864
        %1906 = vmatprep.subr.mxu0 0.0
        %1907 = vmatpush1.msra.mxu0 %v1863
        %1908 = vmatprep.subr.mxu0 0.0
        %1909 = vmatpush1.msra.mxu0 %v1862
        %1910 = vmatprep.subr.mxu0 0.0
        %1911 = vmatpush2.msra.mxu0 0.0
        %1912 = vmatprep.subr.mxu0 0.0
        %1913 = vmatpush2.msra.mxu0 0.0
        %1914 = vmatprep.subr.mxu0 0.0
        %1915 = vmatpush2.msra.mxu0 0.0
        %1916 = vmatprep.subr.mxu0 0.0
        %1917 = vmatpush2.msra.mxu0 0.0
        %1918 = vmatprep.subr.mxu0 0.0
        %1919 = vmatpush2.msra.mxu0 0.0
        %1920 = vmatprep.subr.mxu0 0.0
        %1921 = vmatpush2.msra.mxu0 0.0
        %1922 = vmatprep.subr.mxu0 0.0
        %1923 = vmatpush2.msra.mxu0 0.0
        %1924 = vmatprep.subr.mxu0 0.0
        %1925 = vmatpush2.msra.mxu0 0.0
        %1926 = vmatprep.subr.mxu0 0.0
        %1927 = vmatpush2.msra.mxu0 0.0
        %1928 = vmatprep.subr.mxu0 0.0
        %1929 = vmatpush2.msra.mxu0 0.0
        %1930 = vmatprep.subr.mxu0 0.0
        %1931 = vmatpush2.msra.mxu0 0.0
        %1932 = vmatprep.subr.mxu0 0.0
        %1933 = vmatpush2.msra.mxu0 0.0
        %1934 = vmatprep.subr.mxu0 0.0
        %1935 = vmatpush2.msra.mxu0 0.0
        %1936 = vmatprep.subr.mxu0 0.0
        %1937 = vmatpush2.msra.mxu0 0.0
        %1938 = vmatprep.subr.mxu0 0.0
        %1939 = vmatpush2.msra.mxu0 0.0
        %1940 = vmatprep.subr.mxu0 0.0
        %1941 = vmatpush2.msra.mxu0 0.0
        %1942 = vmatprep.mubr.f32.mxu0 0.0
        %1943 = vmatmul.mubr.f32.gmra.mxu0 %v1853
        %v1944 = vpop.f32.mrf.mxu0
        %v1945 = vadd.f32 0.0, %v1944
        %v1946 = vpop.f32.mrf.mxu0
        %1947 = vmatprep.mubr.f32.mxu0 0.0
        %1948 = vmatmul.mubr.f32.gmra.mxu0 %v1854
        %v1949 = vpop.f32.mrf.mxu0
        %v1950 = vadd.f32 0.0, %v1949
        %v1951 = vpop.f32.mrf.mxu0
        %1952 = vmatprep.mubr.f32.mxu0 0.0
        %1953 = vmatmul.mubr.f32.gmra.mxu0 %v1855
        %v1954 = vpop.f32.mrf.mxu0
        %v1955 = vadd.f32 0.0, %v1954
        %v1956 = vpop.f32.mrf.mxu0
        %1957 = vmatprep.mubr.f32.mxu0 0.0
        %1958 = vmatmul.mubr.f32.gmra.mxu0 %v1856
        %v1959 = vpop.f32.mrf.mxu0
        %v1960 = vadd.f32 0.0, %v1959
        %v1961 = vpop.f32.mrf.mxu0
        %1962 = vmatprep.mubr.f32.mxu0 0.0
        %1963 = vmatmul.mubr.f32.gmra.mxu0 %v1857
        %v1964 = vpop.f32.mrf.mxu0
        %v1965 = vadd.f32 0.0, %v1964
        %v1966 = vpop.f32.mrf.mxu0
        %1967 = vmatprep.mubr.f32.mxu0 0.0
        %1968 = vmatmul.mubr.f32.gmra.mxu0 %v1858
        %v1969 = vpop.f32.mrf.mxu0
        %v1970 = vadd.f32 0.0, %v1969
        %v1971 = vpop.f32.mrf.mxu0
        %1972 = vmatprep.mubr.f32.mxu0 0.0
        %1973 = vmatmul.mubr.f32.gmra.mxu0 %v1859
        %v1974 = vpop.f32.mrf.mxu0
        %v1975 = vadd.f32 0.0, %v1974
        %v1976 = vpop.f32.mrf.mxu0
        %1977 = vmatprep.mubr.f32.mxu0 0.0
        %1978 = vmatmul.mubr.f32.gmra.mxu0 %v1860
        %v1979 = vpop.f32.mrf.mxu0
        %v1980 = vadd.f32 0.0, %v1979
        %v1981 = vpop.f32.mrf.mxu0
        %1982 = vdwg.mxu0
        %1983 = vmatprep.subr.mxu0 0.0
        %1984 = vmatpush1.msra.mxu0 %v1852
        %1985 = vmatprep.subr.mxu0 0.0
        %1986 = vmatpush1.msra.mxu0 %v1851
        %1987 = vmatprep.subr.mxu0 0.0
        %1988 = vmatpush1.msra.mxu0 %v1850
        %1989 = vmatprep.subr.mxu0 0.0
        %1990 = vmatpush1.msra.mxu0 %v1849
        %1991 = vmatprep.subr.mxu0 0.0
        %1992 = vmatpush1.msra.mxu0 %v1848
        %1993 = vmatprep.subr.mxu0 0.0
        %1994 = vmatpush1.msra.mxu0 %v1847
        %1995 = vmatprep.subr.mxu0 0.0
        %1996 = vmatpush1.msra.mxu0 %v1846
        %1997 = vmatprep.subr.mxu0 0.0
        %1998 = vmatpush1.msra.mxu0 %v1845
        %1999 = vmatprep.subr.mxu0 0.0
        %2000 = vmatpush1.msra.mxu0 %v1844
        %2001 = vmatprep.subr.mxu0 0.0
        %2002 = vmatpush1.msra.mxu0 %v1843
        %2003 = vmatprep.subr.mxu0 0.0
        %2004 = vmatpush1.msra.mxu0 %v1842
        %2005 = vmatprep.subr.mxu0 0.0
        %2006 = vmatpush1.msra.mxu0 %v1841
        %2007 = vmatprep.subr.mxu0 0.0
        %2008 = vmatpush1.msra.mxu0 %v1840
        %2009 = vmatprep.subr.mxu0 0.0
        %2010 = vmatpush1.msra.mxu0 %v1839
        %2011 = vmatprep.subr.mxu0 0.0
        %2012 = vmatpush1.msra.mxu0 %v1838
        %2013 = vmatprep.subr.mxu0 0.0
        %2014 = vmatpush1.msra.mxu0 %v1837
        %2015 = vmatprep.subr.mxu0 0.0
        %2016 = vmatpush2.msra.mxu0 0.0
        %2017 = vmatprep.subr.mxu0 0.0
        %2018 = vmatpush2.msra.mxu0 0.0
        %2019 = vmatprep.subr.mxu0 0.0
        %2020 = vmatpush2.msra.mxu0 0.0
        %2021 = vmatprep.subr.mxu0 0.0
        %2022 = vmatpush2.msra.mxu0 0.0
        %2023 = vmatprep.subr.mxu0 0.0
        %2024 = vmatpush2.msra.mxu0 0.0
        %2025 = vmatprep.subr.mxu0 0.0
        %2026 = vmatpush2.msra.mxu0 0.0
        %2027 = vmatprep.subr.mxu0 0.0
        %2028 = vmatpush2.msra.mxu0 0.0
        %2029 = vmatprep.subr.mxu0 0.0
        %2030 = vmatpush2.msra.mxu0 0.0
        %2031 = vmatprep.subr.mxu0 0.0
        %2032 = vmatpush2.msra.mxu0 0.0
        %2033 = vmatprep.subr.mxu0 0.0
        %2034 = vmatpush2.msra.mxu0 0.0
        %2035 = vmatprep.subr.mxu0 0.0
        %2036 = vmatpush2.msra.mxu0 0.0
        %2037 = vmatprep.subr.mxu0 0.0
        %2038 = vmatpush2.msra.mxu0 0.0
        %2039 = vmatprep.subr.mxu0 0.0
        %2040 = vmatpush2.msra.mxu0 0.0
        %2041 = vmatprep.subr.mxu0 0.0
        %2042 = vmatpush2.msra.mxu0 0.0
        %2043 = vmatprep.subr.mxu0 0.0
        %2044 = vmatpush2.msra.mxu0 0.0
        %2045 = vmatprep.subr.mxu0 0.0
        %2046 = vmatpush2.msra.mxu0 0.0
        %2047 = vmatprep.mubr.f32.mxu0 0.0
        %2048 = vmatmul.mubr.f32.gmra.mxu0 %v1829
        %v2049 = vpop.f32.mrf.mxu0
        %v2050 = vadd.f32 %v1945, %v2049
        %v2051 = vpop.f32.mrf.mxu0
        %2052 = vmatprep.mubr.f32.mxu0 0.0
        %2053 = vmatmul.mubr.f32.gmra.mxu0 %v1830
        %v2054 = vpop.f32.mrf.mxu0
        %v2055 = vadd.f32 %v1950, %v2054
        %v2056 = vpop.f32.mrf.mxu0
        %2057 = vmatprep.mubr.f32.mxu0 0.0
        %2058 = vmatmul.mubr.f32.gmra.mxu0 %v1831
        %v2059 = vpop.f32.mrf.mxu0
        %v2060 = vadd.f32 %v1955, %v2059
        %v2061 = vpop.f32.mrf.mxu0
        %2062 = vmatprep.mubr.f32.mxu0 0.0
        %2063 = vmatmul.mubr.f32.gmra.mxu0 %v1832
        %v2064 = vpop.f32.mrf.mxu0
        %v2065 = vadd.f32 %v1960, %v2064
        %v2066 = vpop.f32.mrf.mxu0
        %2067 = vmatprep.mubr.f32.mxu0 0.0
        %2068 = vmatmul.mubr.f32.gmra.mxu0 %v1833
        %v2069 = vpop.f32.mrf.mxu0
        %v2070 = vadd.f32 %v1965, %v2069
        %v2071 = vpop.f32.mrf.mxu0
        %2072 = vmatprep.mubr.f32.mxu0 0.0
        %2073 = vmatmul.mubr.f32.gmra.mxu0 %v1834
        %v2074 = vpop.f32.mrf.mxu0
        %v2075 = vadd.f32 %v1970, %v2074
        %v2076 = vpop.f32.mrf.mxu0
        %2077 = vmatprep.mubr.f32.mxu0 0.0
        %2078 = vmatmul.mubr.f32.gmra.mxu0 %v1835
        %v2079 = vpop.f32.mrf.mxu0
        %v2080 = vadd.f32 %v1975, %v2079
        %v2081 = vpop.f32.mrf.mxu0
        %2082 = vmatprep.mubr.f32.mxu0 0.0
        %2083 = vmatmul.mubr.f32.gmra.mxu0 %v1836
        %v2084 = vpop.f32.mrf.mxu0
        %v2085 = vadd.f32 %v1980, %v2084
        %v2086 = vpop.f32.mrf.mxu0
        %2087 = vdwg.mxu0
        %v2088 = vld [vmem:[#allocation3 + $0x2] sm:$0xff]
        %v2089 = vld [vmem:[#allocation3 + $0x12] sm:$0xff]
        %v2090 = vld [vmem:[#allocation3 + $0x22] sm:$0xff]
        %v2091 = vld [vmem:[#allocation3 + $0x32] sm:$0xff]
        %v2092 = vld [vmem:[#allocation3 + $0x42] sm:$0xff]
        %v2093 = vld [vmem:[#allocation3 + $0x52] sm:$0xff]
        %v2094 = vld [vmem:[#allocation3 + $0x62] sm:$0xff]
        %v2095 = vld [vmem:[#allocation3 + $0x72] sm:$0xff]
        %s2096 = scalar_lea.vmem [#allocation4], 256
        %v2097 = vld [vmem:[%s2096] sm:$0xff]
        %v2098 = vld [vmem:[%s2096 + $0x8] sm:$0xff]
        %v2099 = vld [vmem:[%s2096 + $0x10] sm:$0xff]
        %v2100 = vld [vmem:[%s2096 + $0x18] sm:$0xff]
        %v2101 = vld [vmem:[%s2096 + $0x20] sm:$0xff]
        %v2102 = vld [vmem:[%s2096 + $0x28] sm:$0xff]
        %v2103 = vld [vmem:[%s2096 + $0x30] sm:$0xff]
        %v2104 = vld [vmem:[%s2096 + $0x38] sm:$0xff]
        %v2105 = vld [vmem:[%s2096 + $0x40] sm:$0xff]
        %v2106 = vld [vmem:[%s2096 + $0x48] sm:$0xff]
        %v2107 = vld [vmem:[%s2096 + $0x50] sm:$0xff]
        %v2108 = vld [vmem:[%s2096 + $0x58] sm:$0xff]
        %v2109 = vld [vmem:[%s2096 + $0x60] sm:$0xff]
        %v2110 = vld [vmem:[%s2096 + $0x68] sm:$0xff]
        %v2111 = vld [vmem:[%s2096 + $0x70] sm:$0xff]
        %v2112 = vld [vmem:[%s2096 + $0x78] sm:$0xff]
        %2113 = vmatprep.subr.mxu0 0.0
        %2114 = vmatpush1.msra.mxu0 %v2112
        %2115 = vmatprep.subr.mxu0 0.0
        %2116 = vmatpush1.msra.mxu0 %v2111
        %2117 = vmatprep.subr.mxu0 0.0
        %2118 = vmatpush1.msra.mxu0 %v2110
        %2119 = vmatprep.subr.mxu0 0.0
        %2120 = vmatpush1.msra.mxu0 %v2109
        %2121 = vmatprep.subr.mxu0 0.0
        %2122 = vmatpush1.msra.mxu0 %v2108
        %2123 = vmatprep.subr.mxu0 0.0
        %2124 = vmatpush1.msra.mxu0 %v2107
        %2125 = vmatprep.subr.mxu0 0.0
        %2126 = vmatpush1.msra.mxu0 %v2106
        %2127 = vmatprep.subr.mxu0 0.0
        %2128 = vmatpush1.msra.mxu0 %v2105
        %2129 = vmatprep.subr.mxu0 0.0
        %2130 = vmatpush1.msra.mxu0 %v2104
        %2131 = vmatprep.subr.mxu0 0.0
        %2132 = vmatpush1.msra.mxu0 %v2103
        %2133 = vmatprep.subr.mxu0 0.0
        %2134 = vmatpush1.msra.mxu0 %v2102
        %2135 = vmatprep.subr.mxu0 0.0
        %2136 = vmatpush1.msra.mxu0 %v2101
        %2137 = vmatprep.subr.mxu0 0.0
        %2138 = vmatpush1.msra.mxu0 %v2100
        %2139 = vmatprep.subr.mxu0 0.0
        %2140 = vmatpush1.msra.mxu0 %v2099
        %2141 = vmatprep.subr.mxu0 0.0
        %2142 = vmatpush1.msra.mxu0 %v2098
        %2143 = vmatprep.subr.mxu0 0.0
        %2144 = vmatpush1.msra.mxu0 %v2097
        %2145 = vmatprep.subr.mxu0 0.0
        %2146 = vmatpush2.msra.mxu0 0.0
        %2147 = vmatprep.subr.mxu0 0.0
        %2148 = vmatpush2.msra.mxu0 0.0
        %2149 = vmatprep.subr.mxu0 0.0
        %2150 = vmatpush2.msra.mxu0 0.0
        %2151 = vmatprep.subr.mxu0 0.0
        %2152 = vmatpush2.msra.mxu0 0.0
        %2153 = vmatprep.subr.mxu0 0.0
        %2154 = vmatpush2.msra.mxu0 0.0
        %2155 = vmatprep.subr.mxu0 0.0
        %2156 = vmatpush2.msra.mxu0 0.0
        %2157 = vmatprep.subr.mxu0 0.0
        %2158 = vmatpush2.msra.mxu0 0.0
        %2159 = vmatprep.subr.mxu0 0.0
        %2160 = vmatpush2.msra.mxu0 0.0
        %2161 = vmatprep.subr.mxu0 0.0
        %2162 = vmatpush2.msra.mxu0 0.0
        %2163 = vmatprep.subr.mxu0 0.0
        %2164 = vmatpush2.msra.mxu0 0.0
        %2165 = vmatprep.subr.mxu0 0.0
        %2166 = vmatpush2.msra.mxu0 0.0
        %2167 = vmatprep.subr.mxu0 0.0
        %2168 = vmatpush2.msra.mxu0 0.0
        %2169 = vmatprep.subr.mxu0 0.0
        %2170 = vmatpush2.msra.mxu0 0.0
        %2171 = vmatprep.subr.mxu0 0.0
        %2172 = vmatpush2.msra.mxu0 0.0
        %2173 = vmatprep.subr.mxu0 0.0
        %2174 = vmatpush2.msra.mxu0 0.0
        %2175 = vmatprep.subr.mxu0 0.0
        %2176 = vmatpush2.msra.mxu0 0.0
        %2177 = vmatprep.mubr.f32.mxu0 0.0
        %2178 = vmatmul.mubr.f32.gmra.mxu0 %v2088
        %v2179 = vpop.f32.mrf.mxu0
        %v2180 = vadd.f32 0.0, %v2179
        %v2181 = vpop.f32.mrf.mxu0
        %2182 = vmatprep.mubr.f32.mxu0 0.0
        %2183 = vmatmul.mubr.f32.gmra.mxu0 %v2089
        %v2184 = vpop.f32.mrf.mxu0
        %v2185 = vadd.f32 0.0, %v2184
        %v2186 = vpop.f32.mrf.mxu0
        %2187 = vmatprep.mubr.f32.mxu0 0.0
        %2188 = vmatmul.mubr.f32.gmra.mxu0 %v2090
        %v2189 = vpop.f32.mrf.mxu0
        %v2190 = vadd.f32 0.0, %v2189
        %v2191 = vpop.f32.mrf.mxu0
        %2192 = vmatprep.mubr.f32.mxu0 0.0
        %2193 = vmatmul.mubr.f32.gmra.mxu0 %v2091
        %v2194 = vpop.f32.mrf.mxu0
        %v2195 = vadd.f32 0.0, %v2194
        %v2196 = vpop.f32.mrf.mxu0
        %2197 = vmatprep.mubr.f32.mxu0 0.0
        %2198 = vmatmul.mubr.f32.gmra.mxu0 %v2092
        %v2199 = vpop.f32.mrf.mxu0
        %v2200 = vadd.f32 0.0, %v2199
        %v2201 = vpop.f32.mrf.mxu0
        %2202 = vmatprep.mubr.f32.mxu0 0.0
        %2203 = vmatmul.mubr.f32.gmra.mxu0 %v2093
        %v2204 = vpop.f32.mrf.mxu0
        %v2205 = vadd.f32 0.0, %v2204
        %v2206 = vpop.f32.mrf.mxu0
        %2207 = vmatprep.mubr.f32.mxu0 0.0
        %2208 = vmatmul.mubr.f32.gmra.mxu0 %v2094
        %v2209 = vpop.f32.mrf.mxu0
        %v2210 = vadd.f32 0.0, %v2209
        %v2211 = vpop.f32.mrf.mxu0
        %2212 = vmatprep.mubr.f32.mxu0 0.0
        %2213 = vmatmul.mubr.f32.gmra.mxu0 %v2095
        %v2214 = vpop.f32.mrf.mxu0
        %v2215 = vadd.f32 0.0, %v2214
        %v2216 = vpop.f32.mrf.mxu0
        %2217 = vdwg.mxu0
        %v2218 = vadd.f32 %v2050, %v2180
        %v2219 = vadd.f32 %v2055, %v2185
        %v2220 = vadd.f32 %v2060, %v2190
        %v2221 = vadd.f32 %v2065, %v2195
        %v2222 = vadd.f32 %v2070, %v2200
        %v2223 = vadd.f32 %v2075, %v2205
        %v2224 = vadd.f32 %v2080, %v2210
        %v2225 = vadd.f32 %v2085, %v2215
        %v2226 = vld [vmem:[%s1820] sm:$0xff]
        %v2227 = vld [vmem:[%s1820 + $0x10] sm:$0xff]
        %v2228 = vld [vmem:[%s1820 + $0x20] sm:$0xff]
        %v2229 = vld [vmem:[%s1820 + $0x30] sm:$0xff]
        %v2230 = vld [vmem:[%s1820 + $0x40] sm:$0xff]
        %v2231 = vld [vmem:[%s1820 + $0x50] sm:$0xff]
        %v2232 = vld [vmem:[%s1820 + $0x60] sm:$0xff]
        %v2233 = vld [vmem:[%s1820 + $0x70] sm:$0xff]
        %s2234 = scalar_lea.vmem [#allocation4], 384
        %v2235 = vld [vmem:[%s2234] sm:$0xff]
        %v2236 = vld [vmem:[%s2234 + $0x8] sm:$0xff]
        %v2237 = vld [vmem:[%s2234 + $0x10] sm:$0xff]
        %v2238 = vld [vmem:[%s2234 + $0x18] sm:$0xff]
        %v2239 = vld [vmem:[%s2234 + $0x20] sm:$0xff]
        %v2240 = vld [vmem:[%s2234 + $0x28] sm:$0xff]
        %v2241 = vld [vmem:[%s2234 + $0x30] sm:$0xff]
        %v2242 = vld [vmem:[%s2234 + $0x38] sm:$0xff]
        %v2243 = vld [vmem:[%s2234 + $0x40] sm:$0xff]
        %v2244 = vld [vmem:[%s2234 + $0x48] sm:$0xff]
        %v2245 = vld [vmem:[%s2234 + $0x50] sm:$0xff]
        %v2246 = vld [vmem:[%s2234 + $0x58] sm:$0xff]
        %v2247 = vld [vmem:[%s2234 + $0x60] sm:$0xff]
        %v2248 = vld [vmem:[%s2234 + $0x68] sm:$0xff]
        %v2249 = vld [vmem:[%s2234 + $0x70] sm:$0xff]
        %v2250 = vld [vmem:[%s2234 + $0x78] sm:$0xff]
        %2251 = vmatprep.subr.mxu0 0.0
        %2252 = vmatpush1.msra.mxu0 %v2250
        %2253 = vmatprep.subr.mxu0 0.0
        %2254 = vmatpush1.msra.mxu0 %v2249
        %2255 = vmatprep.subr.mxu0 0.0
        %2256 = vmatpush1.msra.mxu0 %v2248
        %2257 = vmatprep.subr.mxu0 0.0
        %2258 = vmatpush1.msra.mxu0 %v2247
        %2259 = vmatprep.subr.mxu0 0.0
        %2260 = vmatpush1.msra.mxu0 %v2246
        %2261 = vmatprep.subr.mxu0 0.0
        %2262 = vmatpush1.msra.mxu0 %v2245
        %2263 = vmatprep.subr.mxu0 0.0
        %2264 = vmatpush1.msra.mxu0 %v2244
        %2265 = vmatprep.subr.mxu0 0.0
        %2266 = vmatpush1.msra.mxu0 %v2243
        %2267 = vmatprep.subr.mxu0 0.0
        %2268 = vmatpush1.msra.mxu0 %v2242
        %2269 = vmatprep.subr.mxu0 0.0
        %2270 = vmatpush1.msra.mxu0 %v2241
        %2271 = vmatprep.subr.mxu0 0.0
        %2272 = vmatpush1.msra.mxu0 %v2240
        %2273 = vmatprep.subr.mxu0 0.0
        %2274 = vmatpush1.msra.mxu0 %v2239
        %2275 = vmatprep.subr.mxu0 0.0
        %2276 = vmatpush1.msra.mxu0 %v2238
        %2277 = vmatprep.subr.mxu0 0.0
        %2278 = vmatpush1.msra.mxu0 %v2237
        %2279 = vmatprep.subr.mxu0 0.0
        %2280 = vmatpush1.msra.mxu0 %v2236
        %2281 = vmatprep.subr.mxu0 0.0
        %2282 = vmatpush1.msra.mxu0 %v2235
        %2283 = vmatprep.subr.mxu0 0.0
        %2284 = vmatpush2.msra.mxu0 0.0
        %2285 = vmatprep.subr.mxu0 0.0
        %2286 = vmatpush2.msra.mxu0 0.0
        %2287 = vmatprep.subr.mxu0 0.0
        %2288 = vmatpush2.msra.mxu0 0.0
        %2289 = vmatprep.subr.mxu0 0.0
        %2290 = vmatpush2.msra.mxu0 0.0
        %2291 = vmatprep.subr.mxu0 0.0
        %2292 = vmatpush2.msra.mxu0 0.0
        %2293 = vmatprep.subr.mxu0 0.0
        %2294 = vmatpush2.msra.mxu0 0.0
        %2295 = vmatprep.subr.mxu0 0.0
        %2296 = vmatpush2.msra.mxu0 0.0
        %2297 = vmatprep.subr.mxu0 0.0
        %2298 = vmatpush2.msra.mxu0 0.0
        %2299 = vmatprep.subr.mxu0 0.0
        %2300 = vmatpush2.msra.mxu0 0.0
        %2301 = vmatprep.subr.mxu0 0.0
        %2302 = vmatpush2.msra.mxu0 0.0
        %2303 = vmatprep.subr.mxu0 0.0
        %2304 = vmatpush2.msra.mxu0 0.0
        %2305 = vmatprep.subr.mxu0 0.0
        %2306 = vmatpush2.msra.mxu0 0.0
        %2307 = vmatprep.subr.mxu0 0.0
        %2308 = vmatpush2.msra.mxu0 0.0
        %2309 = vmatprep.subr.mxu0 0.0
        %2310 = vmatpush2.msra.mxu0 0.0
        %2311 = vmatprep.subr.mxu0 0.0
        %2312 = vmatpush2.msra.mxu0 0.0
        %2313 = vmatprep.subr.mxu0 0.0
        %2314 = vmatpush2.msra.mxu0 0.0
        %2315 = vmatprep.mubr.f32.mxu0 0.0
        %2316 = vmatmul.mubr.f32.gmra.mxu0 %v2226
        %v2317 = vpop.f32.mrf.mxu0
        %v2318 = vadd.f32 0.0, %v2317
        %v2319 = vpop.f32.mrf.mxu0
        %2320 = vmatprep.mubr.f32.mxu0 0.0
        %2321 = vmatmul.mubr.f32.gmra.mxu0 %v2227
        %v2322 = vpop.f32.mrf.mxu0
        %v2323 = vadd.f32 0.0, %v2322
        %v2324 = vpop.f32.mrf.mxu0
        %2325 = vmatprep.mubr.f32.mxu0 0.0
        %2326 = vmatmul.mubr.f32.gmra.mxu0 %v2228
        %v2327 = vpop.f32.mrf.mxu0
        %v2328 = vadd.f32 0.0, %v2327
        %v2329 = vpop.f32.mrf.mxu0
        %2330 = vmatprep.mubr.f32.mxu0 0.0
        %2331 = vmatmul.mubr.f32.gmra.mxu0 %v2229
        %v2332 = vpop.f32.mrf.mxu0
        %v2333 = vadd.f32 0.0, %v2332
        %v2334 = vpop.f32.mrf.mxu0
        %2335 = vmatprep.mubr.f32.mxu0 0.0
        %2336 = vmatmul.mubr.f32.gmra.mxu0 %v2230
        %v2337 = vpop.f32.mrf.mxu0
        %v2338 = vadd.f32 0.0, %v2337
        %v2339 = vpop.f32.mrf.mxu0
        %2340 = vmatprep.mubr.f32.mxu0 0.0
        %2341 = vmatmul.mubr.f32.gmra.mxu0 %v2231
        %v2342 = vpop.f32.mrf.mxu0
        %v2343 = vadd.f32 0.0, %v2342
        %v2344 = vpop.f32.mrf.mxu0
        %2345 = vmatprep.mubr.f32.mxu0 0.0
        %2346 = vmatmul.mubr.f32.gmra.mxu0 %v2232
        %v2347 = vpop.f32.mrf.mxu0
        %v2348 = vadd.f32 0.0, %v2347
        %v2349 = vpop.f32.mrf.mxu0
        %2350 = vmatprep.mubr.f32.mxu0 0.0
        %2351 = vmatmul.mubr.f32.gmra.mxu0 %v2233
        %v2352 = vpop.f32.mrf.mxu0
        %v2353 = vadd.f32 0.0, %v2352
        %v2354 = vpop.f32.mrf.mxu0
        %2355 = vdwg.mxu0
        %v2356 = vadd.f32 %v2218, %v2318
        %v2357 = vadd.f32 %v2219, %v2323
        %v2358 = vadd.f32 %v2220, %v2328
        %v2359 = vadd.f32 %v2221, %v2333
        %v2360 = vadd.f32 %v2222, %v2338
        %v2361 = vadd.f32 %v2223, %v2343
        %v2362 = vadd.f32 %v2224, %v2348
        %v2363 = vadd.f32 %v2225, %v2353
        %v2364 = vld [vmem:[%s1820 + $0x1] sm:$0xff]
        %v2365 = vld [vmem:[%s1820 + $0x11] sm:$0xff]
        %v2366 = vld [vmem:[%s1820 + $0x21] sm:$0xff]
        %v2367 = vld [vmem:[%s1820 + $0x31] sm:$0xff]
        %v2368 = vld [vmem:[%s1820 + $0x41] sm:$0xff]
        %v2369 = vld [vmem:[%s1820 + $0x51] sm:$0xff]
        %v2370 = vld [vmem:[%s1820 + $0x61] sm:$0xff]
        %v2371 = vld [vmem:[%s1820 + $0x71] sm:$0xff]
        %s2372 = scalar_lea.vmem [#allocation4], 512
        %v2373 = vld [vmem:[%s2372] sm:$0xff]
        %v2374 = vld [vmem:[%s2372 + $0x8] sm:$0xff]
        %v2375 = vld [vmem:[%s2372 + $0x10] sm:$0xff]
        %v2376 = vld [vmem:[%s2372 + $0x18] sm:$0xff]
        %v2377 = vld [vmem:[%s2372 + $0x20] sm:$0xff]
        %v2378 = vld [vmem:[%s2372 + $0x28] sm:$0xff]
        %v2379 = vld [vmem:[%s2372 + $0x30] sm:$0xff]
        %v2380 = vld [vmem:[%s2372 + $0x38] sm:$0xff]
        %v2381 = vld [vmem:[%s2372 + $0x40] sm:$0xff]
        %v2382 = vld [vmem:[%s2372 + $0x48] sm:$0xff]
        %v2383 = vld [vmem:[%s2372 + $0x50] sm:$0xff]
        %v2384 = vld [vmem:[%s2372 + $0x58] sm:$0xff]
        %v2385 = vld [vmem:[%s2372 + $0x60] sm:$0xff]
        %v2386 = vld [vmem:[%s2372 + $0x68] sm:$0xff]
        %v2387 = vld [vmem:[%s2372 + $0x70] sm:$0xff]
        %v2388 = vld [vmem:[%s2372 + $0x78] sm:$0xff]
        %2389 = vmatprep.subr.mxu0 0.0
        %2390 = vmatpush1.msra.mxu0 %v2388
        %2391 = vmatprep.subr.mxu0 0.0
        %2392 = vmatpush1.msra.mxu0 %v2387
        %2393 = vmatprep.subr.mxu0 0.0
        %2394 = vmatpush1.msra.mxu0 %v2386
        %2395 = vmatprep.subr.mxu0 0.0
        %2396 = vmatpush1.msra.mxu0 %v2385
        %2397 = vmatprep.subr.mxu0 0.0
        %2398 = vmatpush1.msra.mxu0 %v2384
        %2399 = vmatprep.subr.mxu0 0.0
        %2400 = vmatpush1.msra.mxu0 %v2383
        %2401 = vmatprep.subr.mxu0 0.0
        %2402 = vmatpush1.msra.mxu0 %v2382
        %2403 = vmatprep.subr.mxu0 0.0
        %2404 = vmatpush1.msra.mxu0 %v2381
        %2405 = vmatprep.subr.mxu0 0.0
        %2406 = vmatpush1.msra.mxu0 %v2380
        %2407 = vmatprep.subr.mxu0 0.0
        %2408 = vmatpush1.msra.mxu0 %v2379
        %2409 = vmatprep.subr.mxu0 0.0
        %2410 = vmatpush1.msra.mxu0 %v2378
        %2411 = vmatprep.subr.mxu0 0.0
        %2412 = vmatpush1.msra.mxu0 %v2377
        %2413 = vmatprep.subr.mxu0 0.0
        %2414 = vmatpush1.msra.mxu0 %v2376
        %2415 = vmatprep.subr.mxu0 0.0
        %2416 = vmatpush1.msra.mxu0 %v2375
        %2417 = vmatprep.subr.mxu0 0.0
        %2418 = vmatpush1.msra.mxu0 %v2374
        %2419 = vmatprep.subr.mxu0 0.0
        %2420 = vmatpush1.msra.mxu0 %v2373
        %2421 = vmatprep.subr.mxu0 0.0
        %2422 = vmatpush2.msra.mxu0 0.0
        %2423 = vmatprep.subr.mxu0 0.0
        %2424 = vmatpush2.msra.mxu0 0.0
        %2425 = vmatprep.subr.mxu0 0.0
        %2426 = vmatpush2.msra.mxu0 0.0
        %2427 = vmatprep.subr.mxu0 0.0
        %2428 = vmatpush2.msra.mxu0 0.0
        %2429 = vmatprep.subr.mxu0 0.0
        %2430 = vmatpush2.msra.mxu0 0.0
        %2431 = vmatprep.subr.mxu0 0.0
        %2432 = vmatpush2.msra.mxu0 0.0
        %2433 = vmatprep.subr.mxu0 0.0
        %2434 = vmatpush2.msra.mxu0 0.0
        %2435 = vmatprep.subr.mxu0 0.0
        %2436 = vmatpush2.msra.mxu0 0.0
        %2437 = vmatprep.subr.mxu0 0.0
        %2438 = vmatpush2.msra.mxu0 0.0
        %2439 = vmatprep.subr.mxu0 0.0
        %2440 = vmatpush2.msra.mxu0 0.0
        %2441 = vmatprep.subr.mxu0 0.0
        %2442 = vmatpush2.msra.mxu0 0.0
        %2443 = vmatprep.subr.mxu0 0.0
        %2444 = vmatpush2.msra.mxu0 0.0
        %2445 = vmatprep.subr.mxu0 0.0
        %2446 = vmatpush2.msra.mxu0 0.0
        %2447 = vmatprep.subr.mxu0 0.0
        %2448 = vmatpush2.msra.mxu0 0.0
        %2449 = vmatprep.subr.mxu0 0.0
        %2450 = vmatpush2.msra.mxu0 0.0
        %2451 = vmatprep.subr.mxu0 0.0
        %2452 = vmatpush2.msra.mxu0 0.0
        %2453 = vmatprep.mubr.f32.mxu0 0.0
        %2454 = vmatmul.mubr.f32.gmra.mxu0 %v2364
        %v2455 = vpop.f32.mrf.mxu0
        %v2456 = vadd.f32 0.0, %v2455
        %v2457 = vpop.f32.mrf.mxu0
        %2458 = vmatprep.mubr.f32.mxu0 0.0
        %2459 = vmatmul.mubr.f32.gmra.mxu0 %v2365
        %v2460 = vpop.f32.mrf.mxu0
        %v2461 = vadd.f32 0.0, %v2460
        %v2462 = vpop.f32.mrf.mxu0
        %2463 = vmatprep.mubr.f32.mxu0 0.0
        %2464 = vmatmul.mubr.f32.gmra.mxu0 %v2366
        %v2465 = vpop.f32.mrf.mxu0
        %v2466 = vadd.f32 0.0, %v2465
        %v2467 = vpop.f32.mrf.mxu0
        %2468 = vmatprep.mubr.f32.mxu0 0.0
        %2469 = vmatmul.mubr.f32.gmra.mxu0 %v2367
        %v2470 = vpop.f32.mrf.mxu0
        %v2471 = vadd.f32 0.0, %v2470
        %v2472 = vpop.f32.mrf.mxu0
        %2473 = vmatprep.mubr.f32.mxu0 0.0
        %2474 = vmatmul.mubr.f32.gmra.mxu0 %v2368
        %v2475 = vpop.f32.mrf.mxu0
        %v2476 = vadd.f32 0.0, %v2475
        %v2477 = vpop.f32.mrf.mxu0
        %2478 = vmatprep.mubr.f32.mxu0 0.0
        %2479 = vmatmul.mubr.f32.gmra.mxu0 %v2369
        %v2480 = vpop.f32.mrf.mxu0
        %v2481 = vadd.f32 0.0, %v2480
        %v2482 = vpop.f32.mrf.mxu0
        %2483 = vmatprep.mubr.f32.mxu0 0.0
        %2484 = vmatmul.mubr.f32.gmra.mxu0 %v2370
        %v2485 = vpop.f32.mrf.mxu0
        %v2486 = vadd.f32 0.0, %v2485
        %v2487 = vpop.f32.mrf.mxu0
        %2488 = vmatprep.mubr.f32.mxu0 0.0
        %2489 = vmatmul.mubr.f32.gmra.mxu0 %v2371
        %v2490 = vpop.f32.mrf.mxu0
        %v2491 = vadd.f32 0.0, %v2490
        %v2492 = vpop.f32.mrf.mxu0
        %2493 = vdwg.mxu0
        %v2494 = vadd.f32 %v2356, %v2456
        %v2495 = vadd.f32 %v2357, %v2461
        %v2496 = vadd.f32 %v2358, %v2466
        %v2497 = vadd.f32 %v2359, %v2471
        %v2498 = vadd.f32 %v2360, %v2476
        %v2499 = vadd.f32 %v2361, %v2481
        %v2500 = vadd.f32 %v2362, %v2486
        %v2501 = vadd.f32 %v2363, %v2491
        %v2502 = vld [vmem:[%s1820 + $0x2] sm:$0xff]
        %v2503 = vld [vmem:[%s1820 + $0x12] sm:$0xff]
        %v2504 = vld [vmem:[%s1820 + $0x22] sm:$0xff]
        %v2505 = vld [vmem:[%s1820 + $0x32] sm:$0xff]
        %v2506 = vld [vmem:[%s1820 + $0x42] sm:$0xff]
        %v2507 = vld [vmem:[%s1820 + $0x52] sm:$0xff]
        %v2508 = vld [vmem:[%s1820 + $0x62] sm:$0xff]
        %v2509 = vld [vmem:[%s1820 + $0x72] sm:$0xff]
        %s2510 = scalar_lea.vmem [#allocation4], 640
        %v2511 = vld [vmem:[%s2510] sm:$0xff]
        %v2512 = vld [vmem:[%s2510 + $0x8] sm:$0xff]
        %v2513 = vld [vmem:[%s2510 + $0x10] sm:$0xff]
        %v2514 = vld [vmem:[%s2510 + $0x18] sm:$0xff]
        %v2515 = vld [vmem:[%s2510 + $0x20] sm:$0xff]
        %v2516 = vld [vmem:[%s2510 + $0x28] sm:$0xff]
        %v2517 = vld [vmem:[%s2510 + $0x30] sm:$0xff]
        %v2518 = vld [vmem:[%s2510 + $0x38] sm:$0xff]
        %v2519 = vld [vmem:[%s2510 + $0x40] sm:$0xff]
        %v2520 = vld [vmem:[%s2510 + $0x48] sm:$0xff]
        %v2521 = vld [vmem:[%s2510 + $0x50] sm:$0xff]
        %v2522 = vld [vmem:[%s2510 + $0x58] sm:$0xff]
        %v2523 = vld [vmem:[%s2510 + $0x60] sm:$0xff]
        %v2524 = vld [vmem:[%s2510 + $0x68] sm:$0xff]
        %v2525 = vld [vmem:[%s2510 + $0x70] sm:$0xff]
        %v2526 = vld [vmem:[%s2510 + $0x78] sm:$0xff]
        %2527 = vmatprep.subr.mxu0 0.0
        %2528 = vmatpush1.msra.mxu0 %v2526
        %2529 = vmatprep.subr.mxu0 0.0
        %2530 = vmatpush1.msra.mxu0 %v2525
        %2531 = vmatprep.subr.mxu0 0.0
        %2532 = vmatpush1.msra.mxu0 %v2524
        %2533 = vmatprep.subr.mxu0 0.0
        %2534 = vmatpush1.msra.mxu0 %v2523
        %2535 = vmatprep.subr.mxu0 0.0
        %2536 = vmatpush1.msra.mxu0 %v2522
        %2537 = vmatprep.subr.mxu0 0.0
        %2538 = vmatpush1.msra.mxu0 %v2521
        %2539 = vmatprep.subr.mxu0 0.0
        %2540 = vmatpush1.msra.mxu0 %v2520
        %2541 = vmatprep.subr.mxu0 0.0
        %2542 = vmatpush1.msra.mxu0 %v2519
        %2543 = vmatprep.subr.mxu0 0.0
        %2544 = vmatpush1.msra.mxu0 %v2518
        %2545 = vmatprep.subr.mxu0 0.0
        %2546 = vmatpush1.msra.mxu0 %v2517
        %2547 = vmatprep.subr.mxu0 0.0
        %2548 = vmatpush1.msra.mxu0 %v2516
        %2549 = vmatprep.subr.mxu0 0.0
        %2550 = vmatpush1.msra.mxu0 %v2515
        %2551 = vmatprep.subr.mxu0 0.0
        %2552 = vmatpush1.msra.mxu0 %v2514
        %2553 = vmatprep.subr.mxu0 0.0
        %2554 = vmatpush1.msra.mxu0 %v2513
        %2555 = vmatprep.subr.mxu0 0.0
        %2556 = vmatpush1.msra.mxu0 %v2512
        %2557 = vmatprep.subr.mxu0 0.0
        %2558 = vmatpush1.msra.mxu0 %v2511
        %2559 = vmatprep.subr.mxu0 0.0
        %2560 = vmatpush2.msra.mxu0 0.0
        %2561 = vmatprep.subr.mxu0 0.0
        %2562 = vmatpush2.msra.mxu0 0.0
        %2563 = vmatprep.subr.mxu0 0.0
        %2564 = vmatpush2.msra.mxu0 0.0
        %2565 = vmatprep.subr.mxu0 0.0
        %2566 = vmatpush2.msra.mxu0 0.0
        %2567 = vmatprep.subr.mxu0 0.0
        %2568 = vmatpush2.msra.mxu0 0.0
        %2569 = vmatprep.subr.mxu0 0.0
        %2570 = vmatpush2.msra.mxu0 0.0
        %2571 = vmatprep.subr.mxu0 0.0
        %2572 = vmatpush2.msra.mxu0 0.0
        %2573 = vmatprep.subr.mxu0 0.0
        %2574 = vmatpush2.msra.mxu0 0.0
        %2575 = vmatprep.subr.mxu0 0.0
        %2576 = vmatpush2.msra.mxu0 0.0
        %2577 = vmatprep.subr.mxu0 0.0
        %2578 = vmatpush2.msra.mxu0 0.0
        %2579 = vmatprep.subr.mxu0 0.0
        %2580 = vmatpush2.msra.mxu0 0.0
        %2581 = vmatprep.subr.mxu0 0.0
        %2582 = vmatpush2.msra.mxu0 0.0
        %2583 = vmatprep.subr.mxu0 0.0
        %2584 = vmatpush2.msra.mxu0 0.0
        %2585 = vmatprep.subr.mxu0 0.0
        %2586 = vmatpush2.msra.mxu0 0.0
        %2587 = vmatprep.subr.mxu0 0.0
        %2588 = vmatpush2.msra.mxu0 0.0
        %2589 = vmatprep.subr.mxu0 0.0
        %2590 = vmatpush2.msra.mxu0 0.0
        %2591 = vmatprep.mubr.f32.mxu0 0.0
        %2592 = vmatmul.mubr.f32.gmra.mxu0 %v2502
        %v2593 = vpop.f32.mrf.mxu0
        %v2594 = vadd.f32 0.0, %v2593
        %v2595 = vpop.f32.mrf.mxu0
        %2596 = vmatprep.mubr.f32.mxu0 0.0
        %2597 = vmatmul.mubr.f32.gmra.mxu0 %v2503
        %v2598 = vpop.f32.mrf.mxu0
        %v2599 = vadd.f32 0.0, %v2598
        %v2600 = vpop.f32.mrf.mxu0
        %2601 = vmatprep.mubr.f32.mxu0 0.0
        %2602 = vmatmul.mubr.f32.gmra.mxu0 %v2504
        %v2603 = vpop.f32.mrf.mxu0
        %v2604 = vadd.f32 0.0, %v2603
        %v2605 = vpop.f32.mrf.mxu0
        %2606 = vmatprep.mubr.f32.mxu0 0.0
        %2607 = vmatmul.mubr.f32.gmra.mxu0 %v2505
        %v2608 = vpop.f32.mrf.mxu0
        %v2609 = vadd.f32 0.0, %v2608
        %v2610 = vpop.f32.mrf.mxu0
        %2611 = vmatprep.mubr.f32.mxu0 0.0
        %2612 = vmatmul.mubr.f32.gmra.mxu0 %v2506
        %v2613 = vpop.f32.mrf.mxu0
        %v2614 = vadd.f32 0.0, %v2613
        %v2615 = vpop.f32.mrf.mxu0
        %2616 = vmatprep.mubr.f32.mxu0 0.0
        %2617 = vmatmul.mubr.f32.gmra.mxu0 %v2507
        %v2618 = vpop.f32.mrf.mxu0
        %v2619 = vadd.f32 0.0, %v2618
        %v2620 = vpop.f32.mrf.mxu0
        %2621 = vmatprep.mubr.f32.mxu0 0.0
        %2622 = vmatmul.mubr.f32.gmra.mxu0 %v2508
        %v2623 = vpop.f32.mrf.mxu0
        %v2624 = vadd.f32 0.0, %v2623
        %v2625 = vpop.f32.mrf.mxu0
        %2626 = vmatprep.mubr.f32.mxu0 0.0
        %2627 = vmatmul.mubr.f32.gmra.mxu0 %v2509
        %v2628 = vpop.f32.mrf.mxu0
        %v2629 = vadd.f32 0.0, %v2628
        %v2630 = vpop.f32.mrf.mxu0
        %2631 = vdwg.mxu0
        %v2632 = vadd.f32 %v2494, %v2594
        %v2633 = vadd.f32 %v2495, %v2599
        %v2634 = vadd.f32 %v2496, %v2604
        %v2635 = vadd.f32 %v2497, %v2609
        %v2636 = vadd.f32 %v2498, %v2614
        %v2637 = vadd.f32 %v2499, %v2619
        %v2638 = vadd.f32 %v2500, %v2624
        %v2639 = vadd.f32 %v2501, %v2629
        %s2640 = scalar_lea.vmem [#allocation3], 32
        %v2641 = vld [vmem:[%s2640] sm:$0xff]
        %v2642 = vld [vmem:[%s2640 + $0x10] sm:$0xff]
        %v2643 = vld [vmem:[%s2640 + $0x20] sm:$0xff]
        %v2644 = vld [vmem:[%s2640 + $0x30] sm:$0xff]
        %v2645 = vld [vmem:[%s2640 + $0x40] sm:$0xff]
        %v2646 = vld [vmem:[%s2640 + $0x50] sm:$0xff]
        %v2647 = vld [vmem:[%s2640 + $0x60] sm:$0xff]
        %v2648 = vld [vmem:[%s2640 + $0x70] sm:$0xff]
        %s2649 = scalar_lea.vmem [#allocation4], 768
        %v2650 = vld [vmem:[%s2649] sm:$0xff]
        %v2651 = vld [vmem:[%s2649 + $0x8] sm:$0xff]
        %v2652 = vld [vmem:[%s2649 + $0x10] sm:$0xff]
        %v2653 = vld [vmem:[%s2649 + $0x18] sm:$0xff]
        %v2654 = vld [vmem:[%s2649 + $0x20] sm:$0xff]
        %v2655 = vld [vmem:[%s2649 + $0x28] sm:$0xff]
        %v2656 = vld [vmem:[%s2649 + $0x30] sm:$0xff]
        %v2657 = vld [vmem:[%s2649 + $0x38] sm:$0xff]
        %v2658 = vld [vmem:[%s2649 + $0x40] sm:$0xff]
        %v2659 = vld [vmem:[%s2649 + $0x48] sm:$0xff]
        %v2660 = vld [vmem:[%s2649 + $0x50] sm:$0xff]
        %v2661 = vld [vmem:[%s2649 + $0x58] sm:$0xff]
        %v2662 = vld [vmem:[%s2649 + $0x60] sm:$0xff]
        %v2663 = vld [vmem:[%s2649 + $0x68] sm:$0xff]
        %v2664 = vld [vmem:[%s2649 + $0x70] sm:$0xff]
        %v2665 = vld [vmem:[%s2649 + $0x78] sm:$0xff]
        %2666 = vmatprep.subr.mxu0 0.0
        %2667 = vmatpush1.msra.mxu0 %v2665
        %2668 = vmatprep.subr.mxu0 0.0
        %2669 = vmatpush1.msra.mxu0 %v2664
        %2670 = vmatprep.subr.mxu0 0.0
        %2671 = vmatpush1.msra.mxu0 %v2663
        %2672 = vmatprep.subr.mxu0 0.0
        %2673 = vmatpush1.msra.mxu0 %v2662
        %2674 = vmatprep.subr.mxu0 0.0
        %2675 = vmatpush1.msra.mxu0 %v2661
        %2676 = vmatprep.subr.mxu0 0.0
        %2677 = vmatpush1.msra.mxu0 %v2660
        %2678 = vmatprep.subr.mxu0 0.0
        %2679 = vmatpush1.msra.mxu0 %v2659
        %2680 = vmatprep.subr.mxu0 0.0
        %2681 = vmatpush1.msra.mxu0 %v2658
        %2682 = vmatprep.subr.mxu0 0.0
        %2683 = vmatpush1.msra.mxu0 %v2657
        %2684 = vmatprep.subr.mxu0 0.0
        %2685 = vmatpush1.msra.mxu0 %v2656
        %2686 = vmatprep.subr.mxu0 0.0
        %2687 = vmatpush1.msra.mxu0 %v2655
        %2688 = vmatprep.subr.mxu0 0.0
        %2689 = vmatpush1.msra.mxu0 %v2654
        %2690 = vmatprep.subr.mxu0 0.0
        %2691 = vmatpush1.msra.mxu0 %v2653
        %2692 = vmatprep.subr.mxu0 0.0
        %2693 = vmatpush1.msra.mxu0 %v2652
        %2694 = vmatprep.subr.mxu0 0.0
        %2695 = vmatpush1.msra.mxu0 %v2651
        %2696 = vmatprep.subr.mxu0 0.0
        %2697 = vmatpush1.msra.mxu0 %v2650
        %2698 = vmatprep.subr.mxu0 0.0
        %2699 = vmatpush2.msra.mxu0 0.0
        %2700 = vmatprep.subr.mxu0 0.0
        %2701 = vmatpush2.msra.mxu0 0.0
        %2702 = vmatprep.subr.mxu0 0.0
        %2703 = vmatpush2.msra.mxu0 0.0
        %2704 = vmatprep.subr.mxu0 0.0
        %2705 = vmatpush2.msra.mxu0 0.0
        %2706 = vmatprep.subr.mxu0 0.0
        %2707 = vmatpush2.msra.mxu0 0.0
        %2708 = vmatprep.subr.mxu0 0.0
        %2709 = vmatpush2.msra.mxu0 0.0
        %2710 = vmatprep.subr.mxu0 0.0
        %2711 = vmatpush2.msra.mxu0 0.0
        %2712 = vmatprep.subr.mxu0 0.0
        %2713 = vmatpush2.msra.mxu0 0.0
        %2714 = vmatprep.subr.mxu0 0.0
        %2715 = vmatpush2.msra.mxu0 0.0
        %2716 = vmatprep.subr.mxu0 0.0
        %2717 = vmatpush2.msra.mxu0 0.0
        %2718 = vmatprep.subr.mxu0 0.0
        %2719 = vmatpush2.msra.mxu0 0.0
        %2720 = vmatprep.subr.mxu0 0.0
        %2721 = vmatpush2.msra.mxu0 0.0
        %2722 = vmatprep.subr.mxu0 0.0
        %2723 = vmatpush2.msra.mxu0 0.0
        %2724 = vmatprep.subr.mxu0 0.0
        %2725 = vmatpush2.msra.mxu0 0.0
        %2726 = vmatprep.subr.mxu0 0.0
        %2727 = vmatpush2.msra.mxu0 0.0
        %2728 = vmatprep.subr.mxu0 0.0
        %2729 = vmatpush2.msra.mxu0 0.0
        %2730 = vmatprep.mubr.f32.mxu0 0.0
        %2731 = vmatmul.mubr.f32.gmra.mxu0 %v2641
        %v2732 = vpop.f32.mrf.mxu0
        %v2733 = vadd.f32 0.0, %v2732
        %v2734 = vpop.f32.mrf.mxu0
        %2735 = vmatprep.mubr.f32.mxu0 0.0
        %2736 = vmatmul.mubr.f32.gmra.mxu0 %v2642
        %v2737 = vpop.f32.mrf.mxu0
        %v2738 = vadd.f32 0.0, %v2737
        %v2739 = vpop.f32.mrf.mxu0
        %2740 = vmatprep.mubr.f32.mxu0 0.0
        %2741 = vmatmul.mubr.f32.gmra.mxu0 %v2643
        %v2742 = vpop.f32.mrf.mxu0
        %v2743 = vadd.f32 0.0, %v2742
        %v2744 = vpop.f32.mrf.mxu0
        %2745 = vmatprep.mubr.f32.mxu0 0.0
        %2746 = vmatmul.mubr.f32.gmra.mxu0 %v2644
        %v2747 = vpop.f32.mrf.mxu0
        %v2748 = vadd.f32 0.0, %v2747
        %v2749 = vpop.f32.mrf.mxu0
        %2750 = vmatprep.mubr.f32.mxu0 0.0
        %2751 = vmatmul.mubr.f32.gmra.mxu0 %v2645
        %v2752 = vpop.f32.mrf.mxu0
        %v2753 = vadd.f32 0.0, %v2752
        %v2754 = vpop.f32.mrf.mxu0
        %2755 = vmatprep.mubr.f32.mxu0 0.0
        %2756 = vmatmul.mubr.f32.gmra.mxu0 %v2646
        %v2757 = vpop.f32.mrf.mxu0
        %v2758 = vadd.f32 0.0, %v2757
        %v2759 = vpop.f32.mrf.mxu0
        %2760 = vmatprep.mubr.f32.mxu0 0.0
        %2761 = vmatmul.mubr.f32.gmra.mxu0 %v2647
        %v2762 = vpop.f32.mrf.mxu0
        %v2763 = vadd.f32 0.0, %v2762
        %v2764 = vpop.f32.mrf.mxu0
        %2765 = vmatprep.mubr.f32.mxu0 0.0
        %2766 = vmatmul.mubr.f32.gmra.mxu0 %v2648
        %v2767 = vpop.f32.mrf.mxu0
        %v2768 = vadd.f32 0.0, %v2767
        %v2769 = vpop.f32.mrf.mxu0
        %2770 = vdwg.mxu0
        %v2771 = vadd.f32 %v2632, %v2733
        %v2772 = vadd.f32 %v2633, %v2738
        %v2773 = vadd.f32 %v2634, %v2743
        %v2774 = vadd.f32 %v2635, %v2748
        %v2775 = vadd.f32 %v2636, %v2753
        %v2776 = vadd.f32 %v2637, %v2758
        %v2777 = vadd.f32 %v2638, %v2763
        %v2778 = vadd.f32 %v2639, %v2768
        %v2779 = vld [vmem:[%s2640 + $0x1] sm:$0xff]
        %v2780 = vld [vmem:[%s2640 + $0x11] sm:$0xff]
        %v2781 = vld [vmem:[%s2640 + $0x21] sm:$0xff]
        %v2782 = vld [vmem:[%s2640 + $0x31] sm:$0xff]
        %v2783 = vld [vmem:[%s2640 + $0x41] sm:$0xff]
        %v2784 = vld [vmem:[%s2640 + $0x51] sm:$0xff]
        %v2785 = vld [vmem:[%s2640 + $0x61] sm:$0xff]
        %v2786 = vld [vmem:[%s2640 + $0x71] sm:$0xff]
        %s2787 = scalar_lea.vmem [#allocation4], 896
        %v2788 = vld [vmem:[%s2787] sm:$0xff]
        %v2789 = vld [vmem:[%s2787 + $0x8] sm:$0xff]
        %v2790 = vld [vmem:[%s2787 + $0x10] sm:$0xff]
        %v2791 = vld [vmem:[%s2787 + $0x18] sm:$0xff]
        %v2792 = vld [vmem:[%s2787 + $0x20] sm:$0xff]
        %v2793 = vld [vmem:[%s2787 + $0x28] sm:$0xff]
        %v2794 = vld [vmem:[%s2787 + $0x30] sm:$0xff]
        %v2795 = vld [vmem:[%s2787 + $0x38] sm:$0xff]
        %v2796 = vld [vmem:[%s2787 + $0x40] sm:$0xff]
        %v2797 = vld [vmem:[%s2787 + $0x48] sm:$0xff]
        %v2798 = vld [vmem:[%s2787 + $0x50] sm:$0xff]
        %v2799 = vld [vmem:[%s2787 + $0x58] sm:$0xff]
        %v2800 = vld [vmem:[%s2787 + $0x60] sm:$0xff]
        %v2801 = vld [vmem:[%s2787 + $0x68] sm:$0xff]
        %v2802 = vld [vmem:[%s2787 + $0x70] sm:$0xff]
        %v2803 = vld [vmem:[%s2787 + $0x78] sm:$0xff]
        %2804 = vmatprep.subr.mxu0 0.0
        %2805 = vmatpush1.msra.mxu0 %v2803
        %2806 = vmatprep.subr.mxu0 0.0
        %2807 = vmatpush1.msra.mxu0 %v2802
        %2808 = vmatprep.subr.mxu0 0.0
        %2809 = vmatpush1.msra.mxu0 %v2801
        %2810 = vmatprep.subr.mxu0 0.0
        %2811 = vmatpush1.msra.mxu0 %v2800
        %2812 = vmatprep.subr.mxu0 0.0
        %2813 = vmatpush1.msra.mxu0 %v2799
        %2814 = vmatprep.subr.mxu0 0.0
        %2815 = vmatpush1.msra.mxu0 %v2798
        %2816 = vmatprep.subr.mxu0 0.0
        %2817 = vmatpush1.msra.mxu0 %v2797
        %2818 = vmatprep.subr.mxu0 0.0
        %2819 = vmatpush1.msra.mxu0 %v2796
        %2820 = vmatprep.subr.mxu0 0.0
        %2821 = vmatpush1.msra.mxu0 %v2795
        %2822 = vmatprep.subr.mxu0 0.0
        %2823 = vmatpush1.msra.mxu0 %v2794
        %2824 = vmatprep.subr.mxu0 0.0
        %2825 = vmatpush1.msra.mxu0 %v2793
        %2826 = vmatprep.subr.mxu0 0.0
        %2827 = vmatpush1.msra.mxu0 %v2792
        %2828 = vmatprep.subr.mxu0 0.0
        %2829 = vmatpush1.msra.mxu0 %v2791
        %2830 = vmatprep.subr.mxu0 0.0
        %2831 = vmatpush1.msra.mxu0 %v2790
        %2832 = vmatprep.subr.mxu0 0.0
        %2833 = vmatpush1.msra.mxu0 %v2789
        %2834 = vmatprep.subr.mxu0 0.0
        %2835 = vmatpush1.msra.mxu0 %v2788
        %2836 = vmatprep.subr.mxu0 0.0
        %2837 = vmatpush2.msra.mxu0 0.0
        %2838 = vmatprep.subr.mxu0 0.0
        %2839 = vmatpush2.msra.mxu0 0.0
        %2840 = vmatprep.subr.mxu0 0.0
        %2841 = vmatpush2.msra.mxu0 0.0
        %2842 = vmatprep.subr.mxu0 0.0
        %2843 = vmatpush2.msra.mxu0 0.0
        %2844 = vmatprep.subr.mxu0 0.0
        %2845 = vmatpush2.msra.mxu0 0.0
        %2846 = vmatprep.subr.mxu0 0.0
        %2847 = vmatpush2.msra.mxu0 0.0
        %2848 = vmatprep.subr.mxu0 0.0
        %2849 = vmatpush2.msra.mxu0 0.0
        %2850 = vmatprep.subr.mxu0 0.0
        %2851 = vmatpush2.msra.mxu0 0.0
        %2852 = vmatprep.subr.mxu0 0.0
        %2853 = vmatpush2.msra.mxu0 0.0
        %2854 = vmatprep.subr.mxu0 0.0
        %2855 = vmatpush2.msra.mxu0 0.0
        %2856 = vmatprep.subr.mxu0 0.0
        %2857 = vmatpush2.msra.mxu0 0.0
        %2858 = vmatprep.subr.mxu0 0.0
        %2859 = vmatpush2.msra.mxu0 0.0
        %2860 = vmatprep.subr.mxu0 0.0
        %2861 = vmatpush2.msra.mxu0 0.0
        %2862 = vmatprep.subr.mxu0 0.0
        %2863 = vmatpush2.msra.mxu0 0.0
        %2864 = vmatprep.subr.mxu0 0.0
        %2865 = vmatpush2.msra.mxu0 0.0
        %2866 = vmatprep.subr.mxu0 0.0
        %2867 = vmatpush2.msra.mxu0 0.0
        %2868 = vmatprep.mubr.f32.mxu0 0.0
        %2869 = vmatmul.mubr.f32.gmra.mxu0 %v2779
        %v2870 = vpop.f32.mrf.mxu0
        %v2871 = vadd.f32 0.0, %v2870
        %v2872 = vpop.f32.mrf.mxu0
        %2873 = vmatprep.mubr.f32.mxu0 0.0
        %2874 = vmatmul.mubr.f32.gmra.mxu0 %v2780
        %v2875 = vpop.f32.mrf.mxu0
        %v2876 = vadd.f32 0.0, %v2875
        %v2877 = vpop.f32.mrf.mxu0
        %2878 = vmatprep.mubr.f32.mxu0 0.0
        %2879 = vmatmul.mubr.f32.gmra.mxu0 %v2781
        %v2880 = vpop.f32.mrf.mxu0
        %v2881 = vadd.f32 0.0, %v2880
        %v2882 = vpop.f32.mrf.mxu0
        %2883 = vmatprep.mubr.f32.mxu0 0.0
        %2884 = vmatmul.mubr.f32.gmra.mxu0 %v2782
        %v2885 = vpop.f32.mrf.mxu0
        %v2886 = vadd.f32 0.0, %v2885
        %v2887 = vpop.f32.mrf.mxu0
        %2888 = vmatprep.mubr.f32.mxu0 0.0
        %2889 = vmatmul.mubr.f32.gmra.mxu0 %v2783
        %v2890 = vpop.f32.mrf.mxu0
        %v2891 = vadd.f32 0.0, %v2890
        %v2892 = vpop.f32.mrf.mxu0
        %2893 = vmatprep.mubr.f32.mxu0 0.0
        %2894 = vmatmul.mubr.f32.gmra.mxu0 %v2784
        %v2895 = vpop.f32.mrf.mxu0
        %v2896 = vadd.f32 0.0, %v2895
        %v2897 = vpop.f32.mrf.mxu0
        %2898 = vmatprep.mubr.f32.mxu0 0.0
        %2899 = vmatmul.mubr.f32.gmra.mxu0 %v2785
        %v2900 = vpop.f32.mrf.mxu0
        %v2901 = vadd.f32 0.0, %v2900
        %v2902 = vpop.f32.mrf.mxu0
        %2903 = vmatprep.mubr.f32.mxu0 0.0
        %2904 = vmatmul.mubr.f32.gmra.mxu0 %v2786
        %v2905 = vpop.f32.mrf.mxu0
        %v2906 = vadd.f32 0.0, %v2905
        %v2907 = vpop.f32.mrf.mxu0
        %2908 = vdwg.mxu0
        %v2909 = vadd.f32 %v2771, %v2871
        %v2910 = vadd.f32 %v2772, %v2876
        %v2911 = vadd.f32 %v2773, %v2881
        %v2912 = vadd.f32 %v2774, %v2886
        %v2913 = vadd.f32 %v2775, %v2891
        %v2914 = vadd.f32 %v2776, %v2896
        %v2915 = vadd.f32 %v2777, %v2901
        %v2916 = vadd.f32 %v2778, %v2906
        %v2917 = vld [vmem:[%s2640 + $0x2] sm:$0xff]
        %v2918 = vld [vmem:[%s2640 + $0x12] sm:$0xff]
        %v2919 = vld [vmem:[%s2640 + $0x22] sm:$0xff]
        %v2920 = vld [vmem:[%s2640 + $0x32] sm:$0xff]
        %v2921 = vld [vmem:[%s2640 + $0x42] sm:$0xff]
        %v2922 = vld [vmem:[%s2640 + $0x52] sm:$0xff]
        %v2923 = vld [vmem:[%s2640 + $0x62] sm:$0xff]
        %v2924 = vld [vmem:[%s2640 + $0x72] sm:$0xff]
        %s2925 = scalar_lea.vmem [#allocation4], 1024
        %v2926 = vld [vmem:[%s2925] sm:$0xff]
        %v2927 = vld [vmem:[%s2925 + $0x8] sm:$0xff]
        %v2928 = vld [vmem:[%s2925 + $0x10] sm:$0xff]
        %v2929 = vld [vmem:[%s2925 + $0x18] sm:$0xff]
        %v2930 = vld [vmem:[%s2925 + $0x20] sm:$0xff]
        %v2931 = vld [vmem:[%s2925 + $0x28] sm:$0xff]
        %v2932 = vld [vmem:[%s2925 + $0x30] sm:$0xff]
        %v2933 = vld [vmem:[%s2925 + $0x38] sm:$0xff]
        %v2934 = vld [vmem:[%s2925 + $0x40] sm:$0xff]
        %v2935 = vld [vmem:[%s2925 + $0x48] sm:$0xff]
        %v2936 = vld [vmem:[%s2925 + $0x50] sm:$0xff]
        %v2937 = vld [vmem:[%s2925 + $0x58] sm:$0xff]
        %v2938 = vld [vmem:[%s2925 + $0x60] sm:$0xff]
        %v2939 = vld [vmem:[%s2925 + $0x68] sm:$0xff]
        %v2940 = vld [vmem:[%s2925 + $0x70] sm:$0xff]
        %v2941 = vld [vmem:[%s2925 + $0x78] sm:$0xff]
        %2942 = vmatprep.subr.mxu0 0.0
        %2943 = vmatpush1.msra.mxu0 %v2941
        %2944 = vmatprep.subr.mxu0 0.0
        %2945 = vmatpush1.msra.mxu0 %v2940
        %2946 = vmatprep.subr.mxu0 0.0
        %2947 = vmatpush1.msra.mxu0 %v2939
        %2948 = vmatprep.subr.mxu0 0.0
        %2949 = vmatpush1.msra.mxu0 %v2938
        %2950 = vmatprep.subr.mxu0 0.0
        %2951 = vmatpush1.msra.mxu0 %v2937
        %2952 = vmatprep.subr.mxu0 0.0
        %2953 = vmatpush1.msra.mxu0 %v2936
        %2954 = vmatprep.subr.mxu0 0.0
        %2955 = vmatpush1.msra.mxu0 %v2935
        %2956 = vmatprep.subr.mxu0 0.0
        %2957 = vmatpush1.msra.mxu0 %v2934
        %2958 = vmatprep.subr.mxu0 0.0
        %2959 = vmatpush1.msra.mxu0 %v2933
        %2960 = vmatprep.subr.mxu0 0.0
        %2961 = vmatpush1.msra.mxu0 %v2932
        %2962 = vmatprep.subr.mxu0 0.0
        %2963 = vmatpush1.msra.mxu0 %v2931
        %2964 = vmatprep.subr.mxu0 0.0
        %2965 = vmatpush1.msra.mxu0 %v2930
        %2966 = vmatprep.subr.mxu0 0.0
        %2967 = vmatpush1.msra.mxu0 %v2929
        %2968 = vmatprep.subr.mxu0 0.0
        %2969 = vmatpush1.msra.mxu0 %v2928
        %2970 = vmatprep.subr.mxu0 0.0
        %2971 = vmatpush1.msra.mxu0 %v2927
        %2972 = vmatprep.subr.mxu0 0.0
        %2973 = vmatpush1.msra.mxu0 %v2926
        %2974 = vmatprep.subr.mxu0 0.0
        %2975 = vmatpush2.msra.mxu0 0.0
        %2976 = vmatprep.subr.mxu0 0.0
        %2977 = vmatpush2.msra.mxu0 0.0
        %2978 = vmatprep.subr.mxu0 0.0
        %2979 = vmatpush2.msra.mxu0 0.0
        %2980 = vmatprep.subr.mxu0 0.0
        %2981 = vmatpush2.msra.mxu0 0.0
        %2982 = vmatprep.subr.mxu0 0.0
        %2983 = vmatpush2.msra.mxu0 0.0
        %2984 = vmatprep.subr.mxu0 0.0
        %2985 = vmatpush2.msra.mxu0 0.0
        %2986 = vmatprep.subr.mxu0 0.0
        %2987 = vmatpush2.msra.mxu0 0.0
        %2988 = vmatprep.subr.mxu0 0.0
        %2989 = vmatpush2.msra.mxu0 0.0
        %2990 = vmatprep.subr.mxu0 0.0
        %2991 = vmatpush2.msra.mxu0 0.0
        %2992 = vmatprep.subr.mxu0 0.0
        %2993 = vmatpush2.msra.mxu0 0.0
        %2994 = vmatprep.subr.mxu0 0.0
        %2995 = vmatpush2.msra.mxu0 0.0
        %2996 = vmatprep.subr.mxu0 0.0
        %2997 = vmatpush2.msra.mxu0 0.0
        %2998 = vmatprep.subr.mxu0 0.0
        %2999 = vmatpush2.msra.mxu0 0.0
        %3000 = vmatprep.subr.mxu0 0.0
        %3001 = vmatpush2.msra.mxu0 0.0
        %3002 = vmatprep.subr.mxu0 0.0
        %3003 = vmatpush2.msra.mxu0 0.0
        %3004 = vmatprep.subr.mxu0 0.0
        %3005 = vmatpush2.msra.mxu0 0.0
        %3006 = vmatprep.mubr.f32.mxu0 0.0
        %3007 = vmatmul.mubr.f32.gmra.mxu0 %v2917
        %v3008 = vpop.f32.mrf.mxu0
        %v3009 = vadd.f32 0.0, %v3008
        %v3010 = vpop.f32.mrf.mxu0
        %3011 = vmatprep.mubr.f32.mxu0 0.0
        %3012 = vmatmul.mubr.f32.gmra.mxu0 %v2918
        %v3013 = vpop.f32.mrf.mxu0
        %v3014 = vadd.f32 0.0, %v3013
        %v3015 = vpop.f32.mrf.mxu0
        %3016 = vmatprep.mubr.f32.mxu0 0.0
        %3017 = vmatmul.mubr.f32.gmra.mxu0 %v2919
        %v3018 = vpop.f32.mrf.mxu0
        %v3019 = vadd.f32 0.0, %v3018
        %v3020 = vpop.f32.mrf.mxu0
        %3021 = vmatprep.mubr.f32.mxu0 0.0
        %3022 = vmatmul.mubr.f32.gmra.mxu0 %v2920
        %v3023 = vpop.f32.mrf.mxu0
        %v3024 = vadd.f32 0.0, %v3023
        %v3025 = vpop.f32.mrf.mxu0
        %3026 = vmatprep.mubr.f32.mxu0 0.0
        %3027 = vmatmul.mubr.f32.gmra.mxu0 %v2921
        %v3028 = vpop.f32.mrf.mxu0
        %v3029 = vadd.f32 0.0, %v3028
        %v3030 = vpop.f32.mrf.mxu0
        %3031 = vmatprep.mubr.f32.mxu0 0.0
        %3032 = vmatmul.mubr.f32.gmra.mxu0 %v2922
        %v3033 = vpop.f32.mrf.mxu0
        %v3034 = vadd.f32 0.0, %v3033
        %v3035 = vpop.f32.mrf.mxu0
        %3036 = vmatprep.mubr.f32.mxu0 0.0
        %3037 = vmatmul.mubr.f32.gmra.mxu0 %v2923
        %v3038 = vpop.f32.mrf.mxu0
        %v3039 = vadd.f32 0.0, %v3038
        %v3040 = vpop.f32.mrf.mxu0
        %3041 = vmatprep.mubr.f32.mxu0 0.0
        %3042 = vmatmul.mubr.f32.gmra.mxu0 %v2924
        %v3043 = vpop.f32.mrf.mxu0
        %v3044 = vadd.f32 0.0, %v3043
        %v3045 = vpop.f32.mrf.mxu0
        %3046 = vdwg.mxu0
        %v3047 = vadd.f32 %v2909, %v3009
        %v3048 = vadd.f32 %v2910, %v3014
        %v3049 = vadd.f32 %v2911, %v3019
        %v3050 = vadd.f32 %v2912, %v3024
        %v3051 = vadd.f32 %v2913, %v3029
        %v3052 = vadd.f32 %v2914, %v3034
        %v3053 = vadd.f32 %v2915, %v3039
        %v3054 = vadd.f32 %v2916, %v3044
        %v3055 = vld [vmem:[%s5] sm:$0x1]
        %v3057 = vlaneseq
        %v3058 = vshrl.u32 %v3057, 7
        %v3059 = vsub.s32 0, %v3058
        %v3060 = vrot.slane %v3055, %v3059
        %v3062 = vmul.f32 %v3047, %v3060
        %v3063 = vmul.f32 %v3048, %v3060
        %v3064 = vmul.f32 %v3049, %v3060
        %v3065 = vmul.f32 %v3050, %v3060
        %v3066 = vmul.f32 %v3051, %v3060
        %v3067 = vmul.f32 %v3052, %v3060
        %v3068 = vmul.f32 %v3053, %v3060
        %v3069 = vmul.f32 %v3054, %v3060
        %v3070 = vld [vmem:[%s6] sm:$0x1]
        %v3072 = vlaneseq
        %v3073 = vshrl.u32 %v3072, 7
        %v3074 = vsub.s32 0, %v3073
        %v3075 = vrot.slane %v3070, %v3074
        %v3077 = vadd.f32 %v3062, %v3075
        %v3078 = vadd.f32 %v3063, %v3075
        %v3079 = vadd.f32 %v3064, %v3075
        %v3080 = vadd.f32 %v3065, %v3075
        %v3081 = vadd.f32 %v3066, %v3075
        %v3082 = vadd.f32 %v3067, %v3075
        %v3083 = vadd.f32 %v3068, %v3075
        %v3084 = vadd.f32 %v3069, %v3075
        %v3085 = vmax.f32 %v3077, 0.0
        %v3086 = vmax.f32 %v3078, 0.0
        %v3087 = vmax.f32 %v3079, 0.0
        %v3088 = vmax.f32 %v3080, 0.0
        %v3089 = vmax.f32 %v3081, 0.0
        %v3090 = vmax.f32 %v3082, 0.0
        %v3091 = vmax.f32 %v3083, 0.0
        %v3092 = vmax.f32 %v3084, 0.0
        %3093 = vst [vmem:[%s286] sm:$0xff] %v3085
        %3094 = vst [vmem:[%s286 + $0x8] sm:$0xff] %v3086
        %3095 = vst [vmem:[%s286 + $0x10] sm:$0xff] %v3087
        %3096 = vst [vmem:[%s286 + $0x18] sm:$0xff] %v3088
        %3097 = vst [vmem:[%s286 + $0x20] sm:$0xff] %v3089
        %3098 = vst [vmem:[%s286 + $0x28] sm:$0xff] %v3090
        %3099 = vst [vmem:[%s286 + $0x30] sm:$0xff] %v3091
        %3100 = vst [vmem:[%s286 + $0x38] sm:$0xff] %v3092
        %s3101 = sand.u32 %s182, 1
        %s3102 = scalar_lea.sflag [#allocation6], %s3101
        %s3103 = sand.u32 %s182, 1
        %s3104 = smul.addr %s3103, 64
        %s3105 = scalar_lea.vmem [#allocation7], %s3104
        // Predicated region
        $region53: #{tpu_custom_call.1} parent=47 // pred_check
          %p3106 = pneg %p192
        $region54: #{tpu_custom_call.1} parent=47 // pred_check_branch
          %3108 = sbr.rel (%p3106) target = $region56
        $region55: #{tpu_custom_call.1} parent=47 // pred_region
          %s3110 = ssub.s32 1024, 1024
          %3111 = vsyncadd %s3102, %s3110
          %s3112 = smul.addr %s22, 8
          %s3113 = smul.addr %s3112, 128
          %s3114 = scalar_lea.hbm %s7, %s3113
          %s3115 = sshll.u32 %s3105, 4
          %s3116 = int_to_ptr.vmem [resolvable:$true] %s3115
          %3121 = dma.vmem_to_hbm [thread:$0]  %s3116, 1024, %s3114, %s3102, 128, 128, 8
        $region56: #{tpu_custom_call.1} parent=47 // pred_fallthru
          _
      $region48: #{tpu_custom_call.1} parent=5 // pred_fallthru
        _
      %p3122 = scmp.le.s32.totalorder 2, %s17
      // Predicated region
      $region57: #{tpu_custom_call.1} parent=5 // pred_check
        %p3123 = pneg %p3122
      $region58: #{tpu_custom_call.1} parent=5 // pred_check_branch
        %3125 = sbr.rel (%p3123) target = $region60
      $region59: #{tpu_custom_call.1} parent=5 // pred_region
        %s3126 = ssub.s32 %s17, 2
        // Predicated region
        $region61: #{tpu_custom_call.1} parent=59 // pred_check
          %p3127 = pneg %p198
        $region62: #{tpu_custom_call.1} parent=59 // pred_check_branch
          %3129 = sbr.rel (%p3127) target = $region64
        $region63: #{tpu_custom_call.1} parent=59 // pred_region
          %s3130 = sand.u32 %s183, 1
          %s3131 = scalar_lea.sflag [#allocation6], %s3130
          %s3132 = sand.u32 %s183, 1
          %s3133 = smul.addr %s3132, 64
          %s3134 = scalar_lea.vmem [#allocation7], %s3133
          %3135 = dma.done %s3131, 1024
        $region64: #{tpu_custom_call.1} parent=59 // pred_fallthru
          _
      $region60: #{tpu_custom_call.1} parent=5 // pred_fallthru
        _
    $region6: #{tpu_custom_call.1} parent=1 // loop_footer
      %s21 = sadd.s32 1, %s17
    $region7: #{tpu_custom_call.1} parent=1 // loop_footer_branch
      %16 = sbr.rel target = $region3
    $region8: #{tpu_custom_call.1} parent=1 // loop_exit
      _
    %3136 = vsyncpa [#allocation5], 1
    %s3137 = scalar_lea.sflag [#allocation5], 1
    %3138 = vsyncpa %s3137, 1
    %3139 = vsyncpa [#allocation6], 1
    %s3140 = scalar_lea.sflag [#allocation6], 1
    %3141 = vsyncpa %s3140, 1

</llo_original>
